<compile_context>
chip_gen: v5e
topology: v5e:2x2
jax: 0.10.0
libtpu: 0.0.40
codegen_flags: <defaults>
</compile_context>

<pallas_src>
import functools

import jax
import jax.numpy as jnp
from jax.experimental import pallas as pl
from jax.experimental.pallas import tpu as pltpu

_LANES = 128
_ROW_ALIGN = 16          # bf16 sublane tile -> static row slices stay aligned


def _pack_params(named_arrays):
    """Pack [(name, 2-D f32 array)] into one lane-padded (rows, 128) bf16 slab.

    Each array occupies rows [off, off+r) and lanes [0, c); offsets are 16-row
    aligned so in-kernel static slices are sublane-aligned and start at lane 0.
    Returns (packed_slab_bf16, {name: (off, rows, cols)}).
    """
    blocks, layout, off = [], {}, 0
    for name, a in named_arrays:
        a = jnp.asarray(a, jnp.float32)
        r, c = a.shape
        assert c <= _LANES, f"{name}: {c} > {_LANES} lanes"
        r_pad = -(-r // _ROW_ALIGN) * _ROW_ALIGN
        blocks.append(jnp.pad(a, ((0, r_pad - r), (0, _LANES - c))))
        layout[name] = (off, r, c)
        off += r_pad
    return jnp.concatenate(blocks, axis=0).astype(jnp.bfloat16), layout


def _grua_kernel(L, M, hh_off, n_fc, layout, hx_ref, p_ref, out_ref):
    tb = out_ref.shape[0]

    def getp(name):
        off, r, c = layout[name]
        return p_ref[off:off + r, :c]          # static, aligned, lane-offset-0 slice

    def getb(name):                            # biases back to f32 for the adds
        return getp(name).astype(jnp.float32)

    def bdot(a, w_bf16):                       # single-pass bf16 MXU, f32 accumulate
        return jnp.dot(a.astype(jnp.bfloat16), w_bf16,
                       preferred_element_type=jnp.float32)

    # Block 0 holds x in lanes [0, N), zeros elsewhere.  F.normalize over the
    # size-1 seq axis == x / max(|x|, 1e-12) == clip(x * 1e12, -1, 1); zero
    # (padding) lanes stay zero, so this block is already the layer-0 h_in pad.
    h_pad = jnp.clip(hx_ref[0] * 1e12, -1.0, 1.0)        # (tb, 128) f32

    h = None
    for l in range(L):
        hblk = hx_ref[1 + l]                    # h0[l] at lanes [hh_off, hh_off+M)
        h_cat = h_pad + hblk                    # fused [h_in | h0] operand, no shuffles
        h_prev = hblk[:, hh_off:hh_off + M]     # (tb, M) f32 for the elementwise mix
        # 3 fused dots per layer (was 6): r/z fold ih+hh into one (128, M) weight
        # (biases pre-summed); n uses a (128, 2M) weight giving [gi_n | gh_n].
        r = jax.nn.sigmoid(bdot(h_cat, getp(f"w_r{l}")) + getb(f"b_r{l}"))
        z = jax.nn.sigmoid(bdot(h_cat, getp(f"w_z{l}")) + getb(f"b_z{l}"))
        nw = bdot(h_cat, getp(f"w_n{l}")) + getb(f"b_n{l}")      # (tb, 2M)
        n = jnp.tanh(nw[:, :M] + r * nw[:, M:])
        h = (1.0 - z) * n + z * h_prev          # layer output (tb, M)
        if l + 1 < L:                           # re-pad to 128 lanes for next fused dot
            h_pad = jnp.concatenate(
                [h, jnp.zeros((tb, _LANES - M), jnp.float32)], axis=1)

    pred = h                                    # == pred[:, -1, :] (seq len is 1)
    for i in range(n_fc):
        pred = jnp.maximum(pred, 0.0)           # ReLU before each fc (useReLU=True)
        pred = bdot(pred, getp(f"fc_w{i}")) + getb(f"fc_b{i}")

    out_ref[...] = pred                         # (tb, 128): lane-dense unmasked store


def grua_forward(x, h0, gru_params, fc_params, tile_b=256):
    """x: (B, N); h0: (L, B, M).
    gru_params: [(w_ih_T (in,3M), w_hh_T (M,3M), b_ih (1,3M), b_hh (1,3M))] * L
    fc_params:  [(w_T (fi,fo), b (1,fo))] * n_fc  (weights pre-transposed to (in, out))."""
    B, N = x.shape
    L = len(gru_params)
    M = h0.shape[-1]
    K = fc_params[-1][0].shape[1]
    n_fc = len(fc_params)

    hh_off = _LANES - M
    assert M <= _LANES // 2 and N <= hh_off, "fused gate layout needs in_dim + M <= 128"

    # ---- host-side parameter prep (done once at model-load time in practice) ----
    named = []
    for l, (w_ih_T, w_hh_T, b_ih, b_hh) in enumerate(gru_params):
        in_dim = w_ih_T.shape[0]
        assert in_dim <= hh_off

        def gate(g):                            # combined (128, M) weight for gate g
            w = jnp.zeros((_LANES, M), jnp.float32)
            w = w.at[:in_dim].set(w_ih_T[:, g * M:(g + 1) * M])
            return w.at[hh_off:hh_off + M].set(w_hh_T[:, g * M:(g + 1) * M])

        w_n = jnp.zeros((_LANES, 2 * M), jnp.float32)
        w_n = w_n.at[:in_dim, :M].set(w_ih_T[:, 2 * M:3 * M])
        w_n = w_n.at[hh_off:hh_off + M, M:].set(w_hh_T[:, 2 * M:3 * M])
        named += [
            (f"w_r{l}", gate(0)), (f"b_r{l}", b_ih[:, :M] + b_hh[:, :M]),
            (f"w_z{l}", gate(1)), (f"b_z{l}", b_ih[:, M:2 * M] + b_hh[:, M:2 * M]),
            (f"w_n{l}", w_n),
            (f"b_n{l}", jnp.concatenate([b_ih[:, 2 * M:], b_hh[:, 2 * M:]], axis=1)),
        ]
    for i, (w_T, b) in enumerate(fc_params):
        if i == n_fc - 1:   # pad final layer to 128 output lanes -> unmasked store
            w_T = jnp.pad(w_T, ((0, 0), (0, _LANES - w_T.shape[1])))
            b = jnp.pad(b, ((0, 0), (0, _LANES - b.shape[1])))
        named += [(f"fc_w{i}", w_T), (f"fc_b{i}", b)]
    packed, layout = _pack_params(named)

    # ---- per-call data: one (L+1, Bp, 128) f32 slab (x block + one block per h0 layer)
    tile_b = max(8, min(tile_b, -(-B // 8) * 8))
    nb = -(-B // tile_b)
    Bp = nb * tile_b
    hx = jnp.zeros((L + 1, Bp, _LANES), jnp.float32)
    hx = hx.at[0, :B, :N].set(x.astype(jnp.float32))
    hx = hx.at[1:, :B, hh_off:hh_off + M].set(h0.astype(jnp.float32))

    out = pl.pallas_call(
        functools.partial(_grua_kernel, L, M, hh_off, n_fc, layout),
        out_shape=jax.ShapeDtypeStruct((Bp, _LANES), jnp.float32),
        grid_spec=pltpu.PrefetchScalarGridSpec(
            num_scalar_prefetch=0,
            grid=(nb,),
            in_specs=[
                pl.BlockSpec((L + 1, tile_b, _LANES), lambda b: (0, b, 0)),
                pl.BlockSpec(packed.shape, lambda b: (0, 0)),   # params resident across steps
            ],
            out_specs=pl.BlockSpec((tile_b, _LANES), lambda b: (b, 0)),
        ),
        compiler_params=pltpu.CompilerParams(
            dimension_semantics=("parallel",)),   # batch blocks shard across v7x's 2 TCs
    )(hx, packed)
    return out[:B, :K]


def _reference(x, h0, gru_params, fc_params):
    hp = jax.lax.Precision.HIGHEST
    xn = x / jnp.maximum(jnp.abs(x), 1e-12)
    h_in = xn
    for l, (w_ih, w_hh, b_ih, b_hh) in enumerate(gru_params):
        h_prev = h0[l]
        M = h_prev.shape[-1]
        gi = jnp.dot(h_in, w_ih, precision=hp) + b_ih
        gh = jnp.dot(h_prev, w_hh, precision=hp) + b_hh
        r = jax.nn.sigmoid(gi[:, :M] + gh[:, :M])
        z = jax.nn.sigmoid(gi[:, M:2 * M] + gh[:, M:2 * M])
        n = jnp.tanh(gi[:, 2 * M:] + r * gh[:, 2 * M:])
        h_in = (1.0 - z) * n + z * h_prev
    pred = h_in
    for (w, b) in fc_params:
        pred = jnp.maximum(pred, 0.0)
        pred = jnp.dot(pred, w, precision=hp) + b
    return pred


if __name__ == "__main__":
    # GRUA(inputs=N, numberofhiddenlayers=M, numberoflayers=L, output=K)
    N, M, L, K = 16, 32, 2, 8
    B = 512   # stacked requests: two 256-row batch blocks -> MXU-sized tiles + parallel grid

    key = jax.random.PRNGKey(0)
    k_x, k_h0, k_p = jax.random.split(key, 3)

    # Input (caller view: X.view(-1, 1, N) -> passed already as (B, N))
    x = jax.random.normal(k_x, (B, N), dtype=jnp.float32)
    # h0 ~ randn per call in the original forward; generated deterministically here.
    # (c0 is also sampled by the PyTorch code but unused by nn.GRU.)
    h0 = jax.random.normal(k_h0, (L, B, M), dtype=jnp.float32)

    # Deterministic parameter init (PyTorch-style uniform(-1/sqrt(fan), 1/sqrt(fan))).
    pkeys = iter(jax.random.split(k_p, 4 * L + 2 * 7))
    gru_params = []
    bound_g = 1.0 / float(M) ** 0.5
    for l in range(L):
        in_dim = N if l == 0 else M
        w_ih_T = jax.random.uniform(next(pkeys), (in_dim, 3 * M), jnp.float32, -bound_g, bound_g)
        w_hh_T = jax.random.uniform(next(pkeys), (M, 3 * M), jnp.float32, -bound_g, bound_g)
        b_ih = jax.random.uniform(next(pkeys), (1, 3 * M), jnp.float32, -bound_g, bound_g)
        b_hh = jax.random.uniform(next(pkeys), (1, 3 * M), jnp.float32, -bound_g, bound_g)
        gru_params.append((w_ih_T, w_hh_T, b_ih, b_hh))

    fc_dims = [(M, 4 * K), (4 * K, 3 * K), (3 * K, 5 * K), (5 * K, 3 * K),
               (3 * K, 3 * K), (3 * K, 2 * K), (2 * K, K)]
    fc_params = []
    for (fi, fo) in fc_dims:
        bound = 1.0 / float(fi) ** 0.5
        w_T = jax.random.uniform(next(pkeys), (fi, fo), jnp.float32, -bound, bound)
        b = jax.random.uniform(next(pkeys), (1, fo), jnp.float32, -bound, bound)
        fc_params.append((w_T, b))

    out = grua_forward(x, h0, gru_params, fc_params)
    out = jax.block_until_ready(out)

    ref = _reference(x, h0, gru_params, fc_params)
    max_err = float(jnp.max(jnp.abs(out - ref)))
    assert out.shape == (B, K), out.shape
    # Kernel matmuls are explicit single-pass bf16 (f32 accumulate) vs f32 HIGHEST in
    # the reference; at these shapes/magnitudes the gap is a few 1e-3.
    assert max_err < 3e-2, f"mismatch vs reference: max_err={max_err}"

    print("KERNEL_OK")
</pallas_src>

<mosaic_0001>
module attributes {stable_mosaic.version = 11 : i64} {
  func.func @_grua_kernel(%arg0: i32, %arg1: memref<3x256x128xf32, #tpu.memory_space<vmem>>, %arg2: memref<1200x128xbf16, #tpu.memory_space<vmem>>, %arg3: memref<256x128xf32, #tpu.memory_space<vmem>>) attributes {dimension_semantics = [#tpu.dimension_semantics<parallel>], iteration_bounds = array<i64: 2>, scalar_prefetch = 0 : i64, scratch_operands = 0 : i64, tpu.core_type = #tpu.core_type<tc>, window_params = [{transform_indices = @transform_0, window_bounds = array<i64: 3, 256, 128>}, {pipeline_mode = #tpu.pipeline_mode<synchronous>, transform_indices = @transform_1, window_bounds = array<i64: 1200, 128>}, {transform_indices = @transform_2, window_bounds = array<i64: 256, 128>}]} {
    %c0 = arith.constant 0 : index
    %c0_0 = arith.constant 0 : index
    %c0_1 = arith.constant 0 : index
    %0 = vector.load %arg1[%c0, %c0_0, %c0_1] : memref<3x256x128xf32, #tpu.memory_space<vmem>>, vector<1x256x128xf32>
    %1 = vector.shape_cast %0 : vector<1x256x128xf32> to vector<256x128xf32>
    %cst = arith.constant 9.99999995E+11 : f32
    %2 = vector.broadcast %cst : f32 to vector<256x128xf32>
    %3 = arith.mulf %1, %2 : vector<256x128xf32>
    %cst_2 = arith.constant -1.000000e+00 : f32
    %cst_3 = arith.constant 1.000000e+00 : f32
    %4 = vector.broadcast %cst_2 : f32 to vector<256x128xf32>
    %5 = arith.maximumf %4, %3 : vector<256x128xf32>
    %6 = vector.broadcast %cst_3 : f32 to vector<256x128xf32>
    %7 = arith.minimumf %6, %5 : vector<256x128xf32>
    %c1 = arith.constant 1 : index
    %c0_4 = arith.constant 0 : index
    %c0_5 = arith.constant 0 : index
    %8 = vector.load %arg1[%c1, %c0_4, %c0_5] : memref<3x256x128xf32, #tpu.memory_space<vmem>>, vector<1x256x128xf32>
    %9 = vector.shape_cast %8 : vector<1x256x128xf32> to vector<256x128xf32>
    %10 = arith.addf %7, %9 : vector<256x128xf32>
    %11 = vector.extract_strided_slice %9 {offsets = [0, 96], sizes = [256, 32], strides = [1, 1]} : vector<256x128xf32> to vector<256x32xf32>
    %c0_6 = arith.constant 0 : index
    %c0_7 = arith.constant 0 : index
    %12 = vector.load %arg2[%c0_6, %c0_7] : memref<1200x128xbf16, #tpu.memory_space<vmem>>, vector<128x32xbf16>
    %13 = arith.truncf %10 : vector<256x128xf32> to vector<256x128xbf16>
    %cst_8 = arith.constant dense<0.000000e+00> : vector<256x32xf32>
    %14 = tpu.matmul %13, %12, %cst_8 {dimension_numbers = #tpu.dot_dimension_numbers<[1], [0], [0], [1], [0, 0, 1, 1], [], []>} : vector<256x128xbf16>, vector<128x32xbf16>, vector<256x32xf32> -> vector<256x32xf32>
    %c128 = arith.constant 128 : index
    %c0_9 = arith.constant 0 : index
    %15 = vector.load %arg2[%c128, %c0_9] : memref<1200x128xbf16, #tpu.memory_space<vmem>>, vector<1x32xbf16>
    %16 = arith.extf %15 : vector<1x32xbf16> to vector<1x32xf32>
    %17 = vector.broadcast %16 : vector<1x32xf32> to vector<256x32xf32>
    %18 = arith.addf %14, %17 : vector<256x32xf32>
    %19 = arith.negf %18 : vector<256x32xf32>
    %20 = math.exp %19 : vector<256x32xf32>
    %cst_10 = arith.constant 1.000000e+00 : f32
    %21 = vector.broadcast %cst_10 : f32 to vector<256x32xf32>
    %22 = arith.addf %21, %20 : vector<256x32xf32>
    %23 = arith.divf %21, %22 : vector<256x32xf32>
    %c144 = arith.constant 144 : index
    %c0_11 = arith.constant 0 : index
    %24 = vector.load %arg2[%c144, %c0_11] : memref<1200x128xbf16, #tpu.memory_space<vmem>>, vector<128x32xbf16>
    %25 = arith.truncf %10 : vector<256x128xf32> to vector<256x128xbf16>
    %cst_12 = arith.constant dense<0.000000e+00> : vector<256x32xf32>
    %26 = tpu.matmul %25, %24, %cst_12 {dimension_numbers = #tpu.dot_dimension_numbers<[1], [0], [0], [1], [0, 0, 1, 1], [], []>} : vector<256x128xbf16>, vector<128x32xbf16>, vector<256x32xf32> -> vector<256x32xf32>
    %c272 = arith.constant 272 : index
    %c0_13 = arith.constant 0 : index
    %27 = vector.load %arg2[%c272, %c0_13] : memref<1200x128xbf16, #tpu.memory_space<vmem>>, vector<1x32xbf16>
    %28 = arith.extf %27 : vector<1x32xbf16> to vector<1x32xf32>
    %29 = vector.broadcast %28 : vector<1x32xf32> to vector<256x32xf32>
    %30 = arith.addf %26, %29 : vector<256x32xf32>
    %31 = arith.negf %30 : vector<256x32xf32>
    %32 = math.exp %31 : vector<256x32xf32>
    %cst_14 = arith.constant 1.000000e+00 : f32
    %33 = vector.broadcast %cst_14 : f32 to vector<256x32xf32>
    %34 = arith.addf %33, %32 : vector<256x32xf32>
    %35 = arith.divf %33, %34 : vector<256x32xf32>
    %c288 = arith.constant 288 : index
    %c0_15 = arith.constant 0 : index
    %36 = vector.load %arg2[%c288, %c0_15] : memref<1200x128xbf16, #tpu.memory_space<vmem>>, vector<128x64xbf16>
    %37 = arith.truncf %10 : vector<256x128xf32> to vector<256x128xbf16>
    %cst_16 = arith.constant dense<0.000000e+00> : vector<256x64xf32>
    %38 = tpu.matmul %37, %36, %cst_16 {dimension_numbers = #tpu.dot_dimension_numbers<[1], [0], [0], [1], [0, 0, 1, 1], [], []>} : vector<256x128xbf16>, vector<128x64xbf16>, vector<256x64xf32> -> vector<256x64xf32>
    %c416 = arith.constant 416 : index
    %c0_17 = arith.constant 0 : index
    %39 = vector.load %arg2[%c416, %c0_17] : memref<1200x128xbf16, #tpu.memory_space<vmem>>, vector<1x64xbf16>
    %40 = arith.extf %39 : vector<1x64xbf16> to vector<1x64xf32>
    %41 = vector.broadcast %40 : vector<1x64xf32> to vector<256x64xf32>
    %42 = arith.addf %38, %41 : vector<256x64xf32>
    %43 = vector.extract_strided_slice %42 {offsets = [0, 0], sizes = [256, 32], strides = [1, 1]} : vector<256x64xf32> to vector<256x32xf32>
    %44 = vector.extract_strided_slice %42 {offsets = [0, 32], sizes = [256, 32], strides = [1, 1]} : vector<256x64xf32> to vector<256x32xf32>
    %45 = arith.mulf %23, %44 : vector<256x32xf32>
    %46 = arith.addf %43, %45 : vector<256x32xf32>
    %47 = math.tanh %46 : vector<256x32xf32>
    %cst_18 = arith.constant 1.000000e+00 : f32
    %48 = vector.broadcast %cst_18 : f32 to vector<256x32xf32>
    %49 = arith.subf %48, %35 : vector<256x32xf32>
    %50 = arith.mulf %49, %47 : vector<256x32xf32>
    %51 = arith.mulf %35, %11 : vector<256x32xf32>
    %52 = arith.addf %50, %51 : vector<256x32xf32>
    %cst_19 = arith.constant 0.000000e+00 : f32
    %53 = vector.broadcast %cst_19 : f32 to vector<256x96xf32>
    %54 = tpu.concatenate %52, %53 in 1 : vector<256x32xf32>, vector<256x96xf32> -> vector<256x128xf32>
    %c2 = arith.constant 2 : index
    %c0_20 = arith.constant 0 : index
    %c0_21 = arith.constant 0 : index
    %55 = vector.load %arg1[%c2, %c0_20, %c0_21] : memref<3x256x128xf32, #tpu.memory_space<vmem>>, vector<1x256x128xf32>
    %56 = vector.shape_cast %55 : vector<1x256x128xf32> to vector<256x128xf32>
    %57 = arith.addf %54, %56 : vector<256x128xf32>
    %58 = vector.extract_strided_slice %56 {offsets = [0, 96], sizes = [256, 32], strides = [1, 1]} : vector<256x128xf32> to vector<256x32xf32>
    %c432 = arith.constant 432 : index
    %c0_22 = arith.constant 0 : index
    %59 = vector.load %arg2[%c432, %c0_22] : memref<1200x128xbf16, #tpu.memory_space<vmem>>, vector<128x32xbf16>
    %60 = arith.truncf %57 : vector<256x128xf32> to vector<256x128xbf16>
    %cst_23 = arith.constant dense<0.000000e+00> : vector<256x32xf32>
    %61 = tpu.matmul %60, %59, %cst_23 {dimension_numbers = #tpu.dot_dimension_numbers<[1], [0], [0], [1], [0, 0, 1, 1], [], []>} : vector<256x128xbf16>, vector<128x32xbf16>, vector<256x32xf32> -> vector<256x32xf32>
    %c560 = arith.constant 560 : index
    %c0_24 = arith.constant 0 : index
    %62 = vector.load %arg2[%c560, %c0_24] : memref<1200x128xbf16, #tpu.memory_space<vmem>>, vector<1x32xbf16>
    %63 = arith.extf %62 : vector<1x32xbf16> to vector<1x32xf32>
    %64 = vector.broadcast %63 : vector<1x32xf32> to vector<256x32xf32>
    %65 = arith.addf %61, %64 : vector<256x32xf32>
    %66 = arith.negf %65 : vector<256x32xf32>
    %67 = math.exp %66 : vector<256x32xf32>
    %cst_25 = arith.constant 1.000000e+00 : f32
    %68 = vector.broadcast %cst_25 : f32 to vector<256x32xf32>
    %69 = arith.addf %68, %67 : vector<256x32xf32>
    %70 = arith.divf %68, %69 : vector<256x32xf32>
    %c576 = arith.constant 576 : index
    %c0_26 = arith.constant 0 : index
    %71 = vector.load %arg2[%c576, %c0_26] : memref<1200x128xbf16, #tpu.memory_space<vmem>>, vector<128x32xbf16>
    %72 = arith.truncf %57 : vector<256x128xf32> to vector<256x128xbf16>
    %cst_27 = arith.constant dense<0.000000e+00> : vector<256x32xf32>
    %73 = tpu.matmul %72, %71, %cst_27 {dimension_numbers = #tpu.dot_dimension_numbers<[1], [0], [0], [1], [0, 0, 1, 1], [], []>} : vector<256x128xbf16>, vector<128x32xbf16>, vector<256x32xf32> -> vector<256x32xf32>
    %c704 = arith.constant 704 : index
    %c0_28 = arith.constant 0 : index
    %74 = vector.load %arg2[%c704, %c0_28] : memref<1200x128xbf16, #tpu.memory_space<vmem>>, vector<1x32xbf16>
    %75 = arith.extf %74 : vector<1x32xbf16> to vector<1x32xf32>
    %76 = vector.broadcast %75 : vector<1x32xf32> to vector<256x32xf32>
    %77 = arith.addf %73, %76 : vector<256x32xf32>
    %78 = arith.negf %77 : vector<256x32xf32>
    %79 = math.exp %78 : vector<256x32xf32>
    %cst_29 = arith.constant 1.000000e+00 : f32
    %80 = vector.broadcast %cst_29 : f32 to vector<256x32xf32>
    %81 = arith.addf %80, %79 : vector<256x32xf32>
    %82 = arith.divf %80, %81 : vector<256x32xf32>
    %c720 = arith.constant 720 : index
    %c0_30 = arith.constant 0 : index
    %83 = vector.load %arg2[%c720, %c0_30] : memref<1200x128xbf16, #tpu.memory_space<vmem>>, vector<128x64xbf16>
    %84 = arith.truncf %57 : vector<256x128xf32> to vector<256x128xbf16>
    %cst_31 = arith.constant dense<0.000000e+00> : vector<256x64xf32>
    %85 = tpu.matmul %84, %83, %cst_31 {dimension_numbers = #tpu.dot_dimension_numbers<[1], [0], [0], [1], [0, 0, 1, 1], [], []>} : vector<256x128xbf16>, vector<128x64xbf16>, vector<256x64xf32> -> vector<256x64xf32>
    %c848 = arith.constant 848 : index
    %c0_32 = arith.constant 0 : index
    %86 = vector.load %arg2[%c848, %c0_32] : memref<1200x128xbf16, #tpu.memory_space<vmem>>, vector<1x64xbf16>
    %87 = arith.extf %86 : vector<1x64xbf16> to vector<1x64xf32>
    %88 = vector.broadcast %87 : vector<1x64xf32> to vector<256x64xf32>
    %89 = arith.addf %85, %88 : vector<256x64xf32>
    %90 = vector.extract_strided_slice %89 {offsets = [0, 0], sizes = [256, 32], strides = [1, 1]} : vector<256x64xf32> to vector<256x32xf32>
    %91 = vector.extract_strided_slice %89 {offsets = [0, 32], sizes = [256, 32], strides = [1, 1]} : vector<256x64xf32> to vector<256x32xf32>
    %92 = arith.mulf %70, %91 : vector<256x32xf32>
    %93 = arith.addf %90, %92 : vector<256x32xf32>
    %94 = math.tanh %93 : vector<256x32xf32>
    %cst_33 = arith.constant 1.000000e+00 : f32
    %95 = vector.broadcast %cst_33 : f32 to vector<256x32xf32>
    %96 = arith.subf %95, %82 : vector<256x32xf32>
    %97 = arith.mulf %96, %94 : vector<256x32xf32>
    %98 = arith.mulf %82, %58 : vector<256x32xf32>
    %99 = arith.addf %97, %98 : vector<256x32xf32>
    %cst_34 = arith.constant 0.000000e+00 : f32
    %100 = vector.broadcast %cst_34 : f32 to vector<256x32xf32>
    %101 = arith.maximumf %99, %100 : vector<256x32xf32>
    %c864 = arith.constant 864 : index
    %c0_35 = arith.constant 0 : index
    %102 = vector.load %arg2[%c864, %c0_35] : memref<1200x128xbf16, #tpu.memory_space<vmem>>, vector<32x32xbf16>
    %103 = arith.truncf %101 : vector<256x32xf32> to vector<256x32xbf16>
    %cst_36 = arith.constant dense<0.000000e+00> : vector<256x32xf32>
    %104 = tpu.matmul %103, %102, %cst_36 {dimension_numbers = #tpu.dot_dimension_numbers<[1], [0], [0], [1], [0, 0, 1, 1], [], []>} : vector<256x32xbf16>, vector<32x32xbf16>, vector<256x32xf32> -> vector<256x32xf32>
    %c896 = arith.constant 896 : index
    %c0_37 = arith.constant 0 : index
    %105 = vector.load %arg2[%c896, %c0_37] : memref<1200x128xbf16, #tpu.memory_space<vmem>>, vector<1x32xbf16>
    %106 = arith.extf %105 : vector<1x32xbf16> to vector<1x32xf32>
    %107 = vector.broadcast %106 : vector<1x32xf32> to vector<256x32xf32>
    %108 = arith.addf %104, %107 : vector<256x32xf32>
    %cst_38 = arith.constant 0.000000e+00 : f32
    %109 = vector.broadcast %cst_38 : f32 to vector<256x32xf32>
    %110 = arith.maximumf %108, %109 : vector<256x32xf32>
    %c912 = arith.constant 912 : index
    %c0_39 = arith.constant 0 : index
    %111 = vector.load %arg2[%c912, %c0_39] : memref<1200x128xbf16, #tpu.memory_space<vmem>>, vector<32x24xbf16>
    %112 = arith.truncf %110 : vector<256x32xf32> to vector<256x32xbf16>
    %cst_40 = arith.constant dense<0.000000e+00> : vector<256x24xf32>
    %113 = tpu.matmul %112, %111, %cst_40 {dimension_numbers = #tpu.dot_dimension_numbers<[1], [0], [0], [1], [0, 0, 1, 1], [], []>} : vector<256x32xbf16>, vector<32x24xbf16>, vector<256x24xf32> -> vector<256x24xf32>
    %c944 = arith.constant 944 : index
    %c0_41 = arith.constant 0 : index
    %114 = vector.load %arg2[%c944, %c0_41] : memref<1200x128xbf16, #tpu.memory_space<vmem>>, vector<1x24xbf16>
    %115 = arith.extf %114 : vector<1x24xbf16> to vector<1x24xf32>
    %116 = vector.broadcast %115 : vector<1x24xf32> to vector<256x24xf32>
    %117 = arith.addf %113, %116 : vector<256x24xf32>
    %cst_42 = arith.constant 0.000000e+00 : f32
    %118 = vector.broadcast %cst_42 : f32 to vector<256x24xf32>
    %119 = arith.maximumf %117, %118 : vector<256x24xf32>
    %c960 = arith.constant 960 : index
    %c0_43 = arith.constant 0 : index
    %120 = vector.load %arg2[%c960, %c0_43] : memref<1200x128xbf16, #tpu.memory_space<vmem>>, vector<24x40xbf16>
    %121 = arith.truncf %119 : vector<256x24xf32> to vector<256x24xbf16>
    %cst_44 = arith.constant dense<0.000000e+00> : vector<256x40xf32>
    %122 = tpu.matmul %121, %120, %cst_44 {dimension_numbers = #tpu.dot_dimension_numbers<[1], [0], [0], [1], [0, 0, 1, 1], [], []>} : vector<256x24xbf16>, vector<24x40xbf16>, vector<256x40xf32> -> vector<256x40xf32>
    %c992 = arith.constant 992 : index
    %c0_45 = arith.constant 0 : index
    %123 = vector.load %arg2[%c992, %c0_45] : memref<1200x128xbf16, #tpu.memory_space<vmem>>, vector<1x40xbf16>
    %124 = arith.extf %123 : vector<1x40xbf16> to vector<1x40xf32>
    %125 = vector.broadcast %124 : vector<1x40xf32> to vector<256x40xf32>
    %126 = arith.addf %122, %125 : vector<256x40xf32>
    %cst_46 = arith.constant 0.000000e+00 : f32
    %127 = vector.broadcast %cst_46 : f32 to vector<256x40xf32>
    %128 = arith.maximumf %126, %127 : vector<256x40xf32>
    %c1008 = arith.constant 1008 : index
    %c0_47 = arith.constant 0 : index
    %129 = vector.load %arg2[%c1008, %c0_47] : memref<1200x128xbf16, #tpu.memory_space<vmem>>, vector<40x24xbf16>
    %130 = arith.truncf %128 : vector<256x40xf32> to vector<256x40xbf16>
    %cst_48 = arith.constant dense<0.000000e+00> : vector<256x24xf32>
    %131 = tpu.matmul %130, %129, %cst_48 {dimension_numbers = #tpu.dot_dimension_numbers<[1], [0], [0], [1], [0, 0, 1, 1], [], []>} : vector<256x40xbf16>, vector<40x24xbf16>, vector<256x24xf32> -> vector<256x24xf32>
    %c1056 = arith.constant 1056 : index
    %c0_49 = arith.constant 0 : index
    %132 = vector.load %arg2[%c1056, %c0_49] : memref<1200x128xbf16, #tpu.memory_space<vmem>>, vector<1x24xbf16>
    %133 = arith.extf %132 : vector<1x24xbf16> to vector<1x24xf32>
    %134 = vector.broadcast %133 : vector<1x24xf32> to vector<256x24xf32>
    %135 = arith.addf %131, %134 : vector<256x24xf32>
    %cst_50 = arith.constant 0.000000e+00 : f32
    %136 = vector.broadcast %cst_50 : f32 to vector<256x24xf32>
    %137 = arith.maximumf %135, %136 : vector<256x24xf32>
    %c1072 = arith.constant 1072 : index
    %c0_51 = arith.constant 0 : index
    %138 = vector.load %arg2[%c1072, %c0_51] : memref<1200x128xbf16, #tpu.memory_space<vmem>>, vector<24x24xbf16>
    %139 = arith.truncf %137 : vector<256x24xf32> to vector<256x24xbf16>
    %cst_52 = arith.constant dense<0.000000e+00> : vector<256x24xf32>
    %140 = tpu.matmul %139, %138, %cst_52 {dimension_numbers = #tpu.dot_dimension_numbers<[1], [0], [0], [1], [0, 0, 1, 1], [], []>} : vector<256x24xbf16>, vector<24x24xbf16>, vector<256x24xf32> -> vector<256x24xf32>
    %c1104 = arith.constant 1104 : index
    %c0_53 = arith.constant 0 : index
    %141 = vector.load %arg2[%c1104, %c0_53] : memref<1200x128xbf16, #tpu.memory_space<vmem>>, vector<1x24xbf16>
    %142 = arith.extf %141 : vector<1x24xbf16> to vector<1x24xf32>
    %143 = vector.broadcast %142 : vector<1x24xf32> to vector<256x24xf32>
    %144 = arith.addf %140, %143 : vector<256x24xf32>
    %cst_54 = arith.constant 0.000000e+00 : f32
    %145 = vector.broadcast %cst_54 : f32 to vector<256x24xf32>
    %146 = arith.maximumf %144, %145 : vector<256x24xf32>
    %c1120 = arith.constant 1120 : index
    %c0_55 = arith.constant 0 : index
    %147 = vector.load %arg2[%c1120, %c0_55] : memref<1200x128xbf16, #tpu.memory_space<vmem>>, vector<24x16xbf16>
    %148 = arith.truncf %146 : vector<256x24xf32> to vector<256x24xbf16>
    %cst_56 = arith.constant dense<0.000000e+00> : vector<256x16xf32>
    %149 = tpu.matmul %148, %147, %cst_56 {dimension_numbers = #tpu.dot_dimension_numbers<[1], [0], [0], [1], [0, 0, 1, 1], [], []>} : vector<256x24xbf16>, vector<24x16xbf16>, vector<256x16xf32> -> vector<256x16xf32>
    %c1152 = arith.constant 1152 : index
    %c0_57 = arith.constant 0 : index
    %150 = vector.load %arg2[%c1152, %c0_57] : memref<1200x128xbf16, #tpu.memory_space<vmem>>, vector<1x16xbf16>
    %151 = arith.extf %150 : vector<1x16xbf16> to vector<1x16xf32>
    %152 = vector.broadcast %151 : vector<1x16xf32> to vector<256x16xf32>
    %153 = arith.addf %149, %152 : vector<256x16xf32>
    %cst_58 = arith.constant 0.000000e+00 : f32
    %154 = vector.broadcast %cst_58 : f32 to vector<256x16xf32>
    %155 = arith.maximumf %153, %154 : vector<256x16xf32>
    %c1168 = arith.constant 1168 : index
    %c0_59 = arith.constant 0 : index
    %156 = vector.load %arg2[%c1168, %c0_59] : memref<1200x128xbf16, #tpu.memory_space<vmem>>, vector<16x128xbf16>
    %157 = arith.truncf %155 : vector<256x16xf32> to vector<256x16xbf16>
    %cst_60 = arith.constant dense<0.000000e+00> : vector<256x128xf32>
    %158 = tpu.matmul %157, %156, %cst_60 {dimension_numbers = #tpu.dot_dimension_numbers<[1], [0], [0], [1], [0, 0, 1, 1], [], []>} : vector<256x16xbf16>, vector<16x128xbf16>, vector<256x128xf32> -> vector<256x128xf32>
    %c1184 = arith.constant 1184 : index
    %c0_61 = arith.constant 0 : index
    %159 = vector.load %arg2[%c1184, %c0_61] : memref<1200x128xbf16, #tpu.memory_space<vmem>>, vector<1x128xbf16>
    %160 = arith.extf %159 : vector<1x128xbf16> to vector<1x128xf32>
    %161 = vector.broadcast %160 : vector<1x128xf32> to vector<256x128xf32>
    %162 = arith.addf %158, %161 : vector<256x128xf32>
    %c0_62 = arith.constant 0 : index
    %c0_63 = arith.constant 0 : index
    %163 = vector.load %arg3[%c0_62, %c0_63] : memref<256x128xf32, #tpu.memory_space<vmem>>, vector<256x128xf32>
    tpu.vector_store %arg3[%c0_62, %c0_63], %162 {strides = array<i32>} : memref<256x128xf32, #tpu.memory_space<vmem>>, vector<256x128xf32>,
    return
  }
  func.func @transform_0(%arg0: i32) -> (i32, i32, i32) {
    %c0_i32 = arith.constant 0 : i32
    %c0_i32_0 = arith.constant 0 : i32
    %c0_i32_1 = arith.constant 0 : i32
    return %c0_i32, %arg0, %c0_i32_0 : i32, i32, i32
  }
  func.func @transform_1(%arg0: i32) -> (i32, i32) {
    %c0_i32 = arith.constant 0 : i32
    %c0_i32_0 = arith.constant 0 : i32
    %c0_i32_1 = arith.constant 0 : i32
    return %c0_i32, %c0_i32_0 : i32, i32
  }
  func.func @transform_2(%arg0: i32) -> (i32, i32) {
    %c0_i32 = arith.constant 0 : i32
    %c0_i32_0 = arith.constant 0 : i32
    return %arg0, %c0_i32 : i32, i32
  }
}

</mosaic_0001>

<llo_original>
// kernel: tpu_custom_call.1
$region0: #{tpu_custom_call.1}
  #allocation0 [shape = 'u32[]', space=smem, size = 0x4, offset = 0x4, fixed_abs, tag = 'smem constant byte address 0x4 - core index']
  #allocation1 [shape = 'u32[72,128]{1,0:T(1,128)}', space=vmem, size = 0x9000, scoped, tag = 'internal scratch']
  #allocation8 [shape = 's32[]', space=sflag, size = 0x4, offset = 0, fixed_abs, tag = 'sflag constant byte address 0x0 - dummy sync flag']
  %s0 = inlined_call_operand.hbm [shape: f32[3,512,128], index: 0, kind: input, shape index: {}]
  %s1 = inlined_call_operand.hbm [shape: bf16[1200,128], index: 1, kind: input, shape index: {}]
  %s2 = inlined_call_operand.hbm [shape: f32[512,128], index: 2, kind: output, shape index: {}]
  %s3 = sld [smem:[#allocation0]]
  $region49: #{tpu_custom_call.1} parent=0
    _
  %s5 = ssub.s32 1, %s3
  %s6 = scalar_select 0, %s5, %s3
  $region1: #{tpu_custom_call.1} parent=0
    #allocation2 [shape = 'u8[786432]{0}', space=vmem, size = 0xc0000, scoped, tag = 'input window, operand 0']
    #allocation3 [shape = 's32[2]{0}', space=sflag, size = 0x8, scoped, tag = 'scoped memory for tpu_custom_call.1']
    #allocation4 [shape = 's32[2]{0}', space=sflag, size = 0x8, scoped, tag = 'scoped memory for tpu_custom_call.1']
    #allocation5 [shape = 'u8[307200]{0}', space=vmem, size = 0x4b000, scoped, tag = 'input window, operand 1, single buffered']
    #allocation6 [shape = 's32[1]{0}', space=sflag, size = 0x4, scoped, tag = 'scoped memory for tpu_custom_call.1']
    #allocation7 [shape = 'u8[262144]{0}', space=vmem, size = 0x40000, scoped, tag = 'output window, operand 0']
    %7 = vsyncpa [#allocation3], 0
    %s8 = scalar_lea.sflag [#allocation3], 1
    %9 = vsyncpa %s8, 0
    %10 = vsyncpa [#allocation6], 0
    %11 = vsyncpa [#allocation4], 0
    %s12 = scalar_lea.sflag [#allocation4], 1
    %13 = vsyncpa %s12, 0
    loop: start=0, step=1, limit=4
    $region2: #{tpu_custom_call.1} parent=1 // loop_pre_header
      _
    $region3: #{tpu_custom_call.1} parent=1 // loop_header
      %s15 = sphi 0, %s19
      %p16 = scmp.ge.s32.totalorder %s15, 4
      %s25 = sphi 0, %s27
      %s28 = sphi 0, %s25
      %s29 = sphi 0, %s28
      %s45 = sphi 0, %s29
      %s49 = sphi 0, %s49
      %s51 = sphi 0, %s49
      %s52 = sphi 0, %s51
      %s66 = sphi 0, %s52
      %s72 = sphi 0, %s74
      %s75 = sphi 0, %s72
      %s76 = sphi 0, %s75
      %s92 = sphi 0, %s76
    $region4: #{tpu_custom_call.1} parent=1 // loop_header_branch
      %18 = sbr.rel (%p16) target = $region8
    $region5: #{tpu_custom_call.1} parent=1 // loop_body
      %s20 = ssub.s32 %s15, 1
      %s21 = ssub.s32 %s15, 2
      %s22 = sadd.s32 %s15, 1
      %s23 = ssub.s32 %s15, %s22
      %p24 = scmp.eq.s32.totalorder %s23, 0
      %s26 = sadd.s32 %s25, 1
      %s27 = scalar_select %p24, %s25, %s26
      %p30 = pneg %p24
      %p31 = scmp.eq.s32.totalorder %s15, 1
      %p32 = por %p30, %p31
      %p33 = scmp.ne.s32.totalorder %s25, %s28
      %p34 = scmp.eq.s32.totalorder %s15, 0
      %p35 = por %p33, %p34
      %p36 = scmp.ne.s32.totalorder %s25, %s28
      %p37 = scmp.eq.s32.totalorder %s20, 1
      %p38 = por %p36, %p37
      %p39 = scmp.ne.s32.totalorder %s28, %s29
      %p40 = scmp.eq.s32.totalorder %s20, 0
      %p41 = por %p39, %p40
      %p42 = scmp.ne.s32.totalorder %s28, %s29
      %p43 = scmp.eq.s32.totalorder %s21, 1
      %p44 = por %p42, %p43
      %p46 = scmp.ne.s32.totalorder %s29, %s45
      %p47 = scmp.eq.s32.totalorder %s21, 0
      %p48 = por %p46, %p47
      %s50 = sadd.s32 %s49, 1
      %p53 = scmp.eq.s32.totalorder %s15, 1
      %p54 = scmp.ne.s32.totalorder %s49, %s51
      %p55 = scmp.eq.s32.totalorder %s15, 0
      %p56 = por %p54, %p55
      %p57 = scmp.ne.s32.totalorder %s49, %s51
      %p58 = scmp.eq.s32.totalorder %s20, 1
      %p59 = por %p57, %p58
      %p60 = scmp.ne.s32.totalorder %s51, %s52
      %p61 = scmp.eq.s32.totalorder %s20, 0
      %p62 = por %p60, %p61
      %p63 = scmp.ne.s32.totalorder %s51, %s52
      %p64 = scmp.eq.s32.totalorder %s21, 1
      %p65 = por %p63, %p64
      %p67 = scmp.ne.s32.totalorder %s52, %s66
      %p68 = scmp.eq.s32.totalorder %s21, 0
      %p69 = por %p67, %p68
      %s70 = ssub.s32 %s15, %s22
      %p71 = scmp.eq.s32.totalorder %s70, 0
      %s73 = sadd.s32 %s72, 1
      %s74 = scalar_select %p71, %s72, %s73
      %p77 = pneg %p71
      %p78 = scmp.eq.s32.totalorder %s15, 1
      %p79 = por %p77, %p78
      %p80 = scmp.ne.s32.totalorder %s72, %s75
      %p81 = scmp.eq.s32.totalorder %s15, 0
      %p82 = por %p80, %p81
      %p83 = scmp.ne.s32.totalorder %s72, %s75
      %p84 = scmp.eq.s32.totalorder %s20, 1
      %p85 = por %p83, %p84
      %p86 = scmp.ne.s32.totalorder %s75, %s76
      %p87 = scmp.eq.s32.totalorder %s20, 0
      %p88 = por %p86, %p87
      %p89 = scmp.ne.s32.totalorder %s75, %s76
      %p90 = scmp.eq.s32.totalorder %s21, 1
      %p91 = por %p89, %p90
      %p93 = scmp.ne.s32.totalorder %s76, %s92
      %p94 = scmp.eq.s32.totalorder %s21, 0
      %p95 = por %p93, %p94
      %p96 = scmp.le.s32.totalorder 1, %s15
      %p97 = scmp.lt.s32.totalorder %s15, 3
      %p98 = pnand %p96, %p97
      %p99 = pneg %p98
      // Predicated region
      $region9: #{tpu_custom_call.1} parent=5 // pred_check
        _
      $region10: #{tpu_custom_call.1} parent=5 // pred_check_branch
        %101 = sbr.rel (%p98) target = $region12
      $region11: #{tpu_custom_call.1} parent=5 // pred_region
        %s102 = ssub.s32 %s15, 1
        // Predicated region
        $region13: #{tpu_custom_call.1} parent=11 // pred_check
          %p103 = pneg %p62
        $region14: #{tpu_custom_call.1} parent=11 // pred_check_branch
          %105 = sbr.rel (%p103) target = $region16
        $region15: #{tpu_custom_call.1} parent=11 // pred_region
          %107 = vsyncadd [#allocation6], 0
          %s108 = sshll.u32 %s1, 4
          %s109 = int_to_ptr.hbm [resolvable:$true] %s108
          %s110 = sshll.u32 [#allocation5], 4
          %s111 = int_to_ptr.vmem [resolvable:$true] %s110
          %116 = dma.hbm_to_vmem [thread:$0]  %s109, 9600, %s111, [#allocation6], 64, 64, 4
        $region16: #{tpu_custom_call.1} parent=11 // pred_fallthru
          _
      $region12: #{tpu_custom_call.1} parent=5 // pred_fallthru
        _
      %p117 = scmp.lt.s32.totalorder %s15, 2
      // Predicated region
      $region17: #{tpu_custom_call.1} parent=5 // pred_check
        %p118 = pneg %p117
      $region18: #{tpu_custom_call.1} parent=5 // pred_check_branch
        %120 = sbr.rel (%p118) target = $region20
      $region19: #{tpu_custom_call.1} parent=5 // pred_region
        // Predicated region
        $region21: #{tpu_custom_call.1} parent=19 // pred_check
          %p121 = pneg %p35
        $region22: #{tpu_custom_call.1} parent=19 // pred_check_branch
          %123 = sbr.rel (%p121) target = $region24
        $region23: #{tpu_custom_call.1} parent=19 // pred_region
          #allocation9 [shape = 'u32[6]{0}', space=smem, size = 0x18, scoped, tag = 'DMA stride descriptor']
          %s124 = sand.u32 %s25, 1
          %s125 = scalar_lea.sflag [#allocation3], %s124
          %s126 = sand.u32 %s25, 1
          %s127 = smul.addr %s126, 768
          %s128 = scalar_lea.vmem [#allocation2], %s127
          %s129 = smul.u32 32, %s15
          %131 = vsyncadd %s125, 0
          %s132 = smul.addr %s129, 8
          %s133 = scalar_lea.hbm %s0, %s132
          %s135 = sshll.u32 1, 14
          %s136 = sxor.u32 4294967295, %s135
          %s138 = sld [smem:[#allocation0]]
          %s139 = sadd.s32 2, %s138
          %s141 = sshll.u32 7, 26
          %s142 = sxor.u32 4294967295, %s141
          %s143 = sand.u32 0, %s142
          %s144 = sshll.u32 %s139, 26
          %s145 = sor.u32 %s143, %s144
          %s146 = sshll.u32 %s133, 4
          %s147 = int_to_ptr.hbm [resolvable:$true] %s146
          %s148 = sshll.u32 %s128, 4
          %s149 = int_to_ptr.vmem [resolvable:$true] %s148
          %155 = sst [smem:[#allocation9]] 8192
          %s156 = scalar_lea.smem [#allocation9], 1
          %157 = sst [smem:[%s156]] 4096
          %s158 = scalar_lea.smem [#allocation9], 2
          %159 = sst [smem:[%s158]] 32
          %s160 = scalar_lea.smem [#allocation9], 3
          %161 = sst [smem:[%s160]] 128
          %s162 = scalar_lea.smem [#allocation9], 4
          %163 = sst [smem:[%s162]] 128
          %s164 = scalar_lea.smem [#allocation9], 5
          %165 = sst [smem:[%s164]] 8
          %167 = dma.general %s147, 12288, %s149, %s125, [#allocation8], [#allocation9], %s145, 0
        $region24: #{tpu_custom_call.1} parent=19 // pred_fallthru
          _
      $region20: #{tpu_custom_call.1} parent=5 // pred_fallthru
        _
      %p168 = scmp.le.s32.totalorder 1, %s15
      %p169 = scmp.lt.s32.totalorder %s15, 3
      %p170 = pnand %p168, %p169
      %p171 = pneg %p170
      // Predicated region
      $region25: #{tpu_custom_call.1} parent=5 // pred_check
        _
      $region26: #{tpu_custom_call.1} parent=5 // pred_check_branch
        %173 = sbr.rel (%p170) target = $region28
      $region27: #{tpu_custom_call.1} parent=5 // pred_region
        %s174 = ssub.s32 %s15, 1
        %s175 = sand.u32 %s28, 1
        %s176 = scalar_lea.sflag [#allocation3], %s175
        %s177 = sand.u32 %s28, 1
        %s178 = smul.addr %s177, 768
        %s179 = scalar_lea.vmem [#allocation2], %s178
        // Predicated region
        $region29: #{tpu_custom_call.1} parent=27 // pred_check
          %p180 = pneg %p41
        $region30: #{tpu_custom_call.1} parent=27 // pred_check_branch
          %182 = sbr.rel (%p180) target = $region32
        $region31: #{tpu_custom_call.1} parent=27 // pred_region
          %184 = dma.done %s176, 12288
        $region32: #{tpu_custom_call.1} parent=27 // pred_fallthru
          _
        // Predicated region
        $region33: #{tpu_custom_call.1} parent=27 // pred_check
          %p185 = pneg %p62
        $region34: #{tpu_custom_call.1} parent=27 // pred_check_branch
          %187 = sbr.rel (%p185) target = $region36
        $region35: #{tpu_custom_call.1} parent=27 // pred_region
          %189 = dma.done [#allocation6], 9600
        $region36: #{tpu_custom_call.1} parent=27 // pred_fallthru
          _
        %s190 = sand.u32 %s28, 1
        %s191 = scalar_lea.sflag [#allocation3], %s190
        %s192 = sand.u32 %s28, 1
        %s193 = smul.addr %s192, 768
        %s194 = scalar_lea.vmem [#allocation2], %s193
        %p195 = pneg %p41
        %p196 = pneg %p38
        %p197 = pneg %p62
        %p198 = pneg %p59
        %p199 = pneg %p88
        %p200 = pneg %p85
        %s201 = sand.u32 %s75, 1
        %s202 = scalar_lea.sflag [#allocation4], %s201
        %s203 = sand.u32 %s75, 1
        %s204 = smul.addr %s203, 256
        %s205 = scalar_lea.vmem [#allocation7], %s204
        %s206 = smul.u32 32, %s20
        %s207 = smul.u32 32, %s20
        %v209 = vld [vmem:[%s179] sm:$0xff]
        %v210 = vld [vmem:[%s179 + $0x8] sm:$0xff]
        %v211 = vld [vmem:[%s179 + $0x10] sm:$0xff]
        %v212 = vld [vmem:[%s179 + $0x18] sm:$0xff]
        %v213 = vld [vmem:[%s179 + $0x20] sm:$0xff]
        %v214 = vld [vmem:[%s179 + $0x28] sm:$0xff]
        %v215 = vld [vmem:[%s179 + $0x30] sm:$0xff]
        %v216 = vld [vmem:[%s179 + $0x38] sm:$0xff]
        %v217 = vld [vmem:[%s179 + $0x40] sm:$0xff]
        %v218 = vld [vmem:[%s179 + $0x48] sm:$0xff]
        %v219 = vld [vmem:[%s179 + $0x50] sm:$0xff]
        %v220 = vld [vmem:[%s179 + $0x58] sm:$0xff]
        %v221 = vld [vmem:[%s179 + $0x60] sm:$0xff]
        %v222 = vld [vmem:[%s179 + $0x68] sm:$0xff]
        %v223 = vld [vmem:[%s179 + $0x70] sm:$0xff]
        %v224 = vld [vmem:[%s179 + $0x78] sm:$0xff]
        %v225 = vld [vmem:[%s179 + $0x80] sm:$0xff]
        %v226 = vld [vmem:[%s179 + $0x88] sm:$0xff]
        %v227 = vld [vmem:[%s179 + $0x90] sm:$0xff]
        %v228 = vld [vmem:[%s179 + $0x98] sm:$0xff]
        %v229 = vld [vmem:[%s179 + $0xa0] sm:$0xff]
        %v230 = vld [vmem:[%s179 + $0xa8] sm:$0xff]
        %v231 = vld [vmem:[%s179 + $0xb0] sm:$0xff]
        %v232 = vld [vmem:[%s179 + $0xb8] sm:$0xff]
        %v233 = vld [vmem:[%s179 + $0xc0] sm:$0xff]
        %v234 = vld [vmem:[%s179 + $0xc8] sm:$0xff]
        %v235 = vld [vmem:[%s179 + $0xd0] sm:$0xff]
        %v236 = vld [vmem:[%s179 + $0xd8] sm:$0xff]
        %v237 = vld [vmem:[%s179 + $0xe0] sm:$0xff]
        %v238 = vld [vmem:[%s179 + $0xe8] sm:$0xff]
        %v239 = vld [vmem:[%s179 + $0xf0] sm:$0xff]
        %v240 = vld [vmem:[%s179 + $0xf8] sm:$0xff]
        %v241 = vmul.f32 %v209, 1e+12
        %v242 = vmul.f32 %v210, 1e+12
        %v243 = vmul.f32 %v211, 1e+12
        %v244 = vmul.f32 %v212, 1e+12
        %v245 = vmul.f32 %v213, 1e+12
        %v246 = vmul.f32 %v214, 1e+12
        %v247 = vmul.f32 %v215, 1e+12
        %v248 = vmul.f32 %v216, 1e+12
        %v249 = vmul.f32 %v217, 1e+12
        %v250 = vmul.f32 %v218, 1e+12
        %v251 = vmul.f32 %v219, 1e+12
        %v252 = vmul.f32 %v220, 1e+12
        %v253 = vmul.f32 %v221, 1e+12
        %v254 = vmul.f32 %v222, 1e+12
        %v255 = vmul.f32 %v223, 1e+12
        %v256 = vmul.f32 %v224, 1e+12
        %v257 = vmul.f32 %v225, 1e+12
        %v258 = vmul.f32 %v226, 1e+12
        %v259 = vmul.f32 %v227, 1e+12
        %v260 = vmul.f32 %v228, 1e+12
        %v261 = vmul.f32 %v229, 1e+12
        %v262 = vmul.f32 %v230, 1e+12
        %v263 = vmul.f32 %v231, 1e+12
        %v264 = vmul.f32 %v232, 1e+12
        %v265 = vmul.f32 %v233, 1e+12
        %v266 = vmul.f32 %v234, 1e+12
        %v267 = vmul.f32 %v235, 1e+12
        %v268 = vmul.f32 %v236, 1e+12
        %v269 = vmul.f32 %v237, 1e+12
        %v270 = vmul.f32 %v238, 1e+12
        %v271 = vmul.f32 %v239, 1e+12
        %v272 = vmul.f32 %v240, 1e+12
        %v273 = vmax.f32 %v241, -1.0
        %v274 = vmax.f32 %v242, -1.0
        %v275 = vmax.f32 %v243, -1.0
        %v276 = vmax.f32 %v244, -1.0
        %v277 = vmax.f32 %v245, -1.0
        %v278 = vmax.f32 %v246, -1.0
        %v279 = vmax.f32 %v247, -1.0
        %v280 = vmax.f32 %v248, -1.0
        %v281 = vmax.f32 %v249, -1.0
        %v282 = vmax.f32 %v250, -1.0
        %v283 = vmax.f32 %v251, -1.0
        %v284 = vmax.f32 %v252, -1.0
        %v285 = vmax.f32 %v253, -1.0
        %v286 = vmax.f32 %v254, -1.0
        %v287 = vmax.f32 %v255, -1.0
        %v288 = vmax.f32 %v256, -1.0
        %v289 = vmax.f32 %v257, -1.0
        %v290 = vmax.f32 %v258, -1.0
        %v291 = vmax.f32 %v259, -1.0
        %v292 = vmax.f32 %v260, -1.0
        %v293 = vmax.f32 %v261, -1.0
        %v294 = vmax.f32 %v262, -1.0
        %v295 = vmax.f32 %v263, -1.0
        %v296 = vmax.f32 %v264, -1.0
        %v297 = vmax.f32 %v265, -1.0
        %v298 = vmax.f32 %v266, -1.0
        %v299 = vmax.f32 %v267, -1.0
        %v300 = vmax.f32 %v268, -1.0
        %v301 = vmax.f32 %v269, -1.0
        %v302 = vmax.f32 %v270, -1.0
        %v303 = vmax.f32 %v271, -1.0
        %v304 = vmax.f32 %v272, -1.0
        %v305 = vmin.f32 %v273, 1.0
        %v306 = vmin.f32 %v274, 1.0
        %v307 = vmin.f32 %v275, 1.0
        %v308 = vmin.f32 %v276, 1.0
        %v309 = vmin.f32 %v277, 1.0
        %v310 = vmin.f32 %v278, 1.0
        %v311 = vmin.f32 %v279, 1.0
        %v312 = vmin.f32 %v280, 1.0
        %v313 = vmin.f32 %v281, 1.0
        %v314 = vmin.f32 %v282, 1.0
        %v315 = vmin.f32 %v283, 1.0
        %v316 = vmin.f32 %v284, 1.0
        %v317 = vmin.f32 %v285, 1.0
        %v318 = vmin.f32 %v286, 1.0
        %v319 = vmin.f32 %v287, 1.0
        %v320 = vmin.f32 %v288, 1.0
        %v321 = vmin.f32 %v289, 1.0
        %v322 = vmin.f32 %v290, 1.0
        %v323 = vmin.f32 %v291, 1.0
        %v324 = vmin.f32 %v292, 1.0
        %v325 = vmin.f32 %v293, 1.0
        %v326 = vmin.f32 %v294, 1.0
        %v327 = vmin.f32 %v295, 1.0
        %v328 = vmin.f32 %v296, 1.0
        %v329 = vmin.f32 %v297, 1.0
        %v330 = vmin.f32 %v298, 1.0
        %v331 = vmin.f32 %v299, 1.0
        %v332 = vmin.f32 %v300, 1.0
        %v333 = vmin.f32 %v301, 1.0
        %v334 = vmin.f32 %v302, 1.0
        %v335 = vmin.f32 %v303, 1.0
        %v336 = vmin.f32 %v304, 1.0
        %s337 = scalar_lea.vmem %s179, 256 [#allocation2]
        %v338 = vld [vmem:[%s337] sm:$0xff]
        %v339 = vld [vmem:[%s337 + $0x8] sm:$0xff]
        %v340 = vld [vmem:[%s337 + $0x10] sm:$0xff]
        %v341 = vld [vmem:[%s337 + $0x18] sm:$0xff]
        %v342 = vld [vmem:[%s337 + $0x20] sm:$0xff]
        %v343 = vld [vmem:[%s337 + $0x28] sm:$0xff]
        %v344 = vld [vmem:[%s337 + $0x30] sm:$0xff]
        %v345 = vld [vmem:[%s337 + $0x38] sm:$0xff]
        %v346 = vld [vmem:[%s337 + $0x40] sm:$0xff]
        %v347 = vld [vmem:[%s337 + $0x48] sm:$0xff]
        %v348 = vld [vmem:[%s337 + $0x50] sm:$0xff]
        %v349 = vld [vmem:[%s337 + $0x58] sm:$0xff]
        %v350 = vld [vmem:[%s337 + $0x60] sm:$0xff]
        %v351 = vld [vmem:[%s337 + $0x68] sm:$0xff]
        %v352 = vld [vmem:[%s337 + $0x70] sm:$0xff]
        %v353 = vld [vmem:[%s337 + $0x78] sm:$0xff]
        %v354 = vld [vmem:[%s337 + $0x80] sm:$0xff]
        %v355 = vld [vmem:[%s337 + $0x88] sm:$0xff]
        %v356 = vld [vmem:[%s337 + $0x90] sm:$0xff]
        %v357 = vld [vmem:[%s337 + $0x98] sm:$0xff]
        %v358 = vld [vmem:[%s337 + $0xa0] sm:$0xff]
        %v359 = vld [vmem:[%s337 + $0xa8] sm:$0xff]
        %v360 = vld [vmem:[%s337 + $0xb0] sm:$0xff]
        %v361 = vld [vmem:[%s337 + $0xb8] sm:$0xff]
        %v362 = vld [vmem:[%s337 + $0xc0] sm:$0xff]
        %v363 = vld [vmem:[%s337 + $0xc8] sm:$0xff]
        %v364 = vld [vmem:[%s337 + $0xd0] sm:$0xff]
        %v365 = vld [vmem:[%s337 + $0xd8] sm:$0xff]
        %v366 = vld [vmem:[%s337 + $0xe0] sm:$0xff]
        %v367 = vld [vmem:[%s337 + $0xe8] sm:$0xff]
        %v368 = vld [vmem:[%s337 + $0xf0] sm:$0xff]
        %v369 = vld [vmem:[%s337 + $0xf8] sm:$0xff]
        %v370 = vadd.f32 %v305, %v338
        %v371 = vadd.f32 %v306, %v339
        %v372 = vadd.f32 %v307, %v340
        %v373 = vadd.f32 %v308, %v341
        %v374 = vadd.f32 %v309, %v342
        %v375 = vadd.f32 %v310, %v343
        %v376 = vadd.f32 %v311, %v344
        %v377 = vadd.f32 %v312, %v345
        %v378 = vadd.f32 %v313, %v346
        %v379 = vadd.f32 %v314, %v347
        %v380 = vadd.f32 %v315, %v348
        %v381 = vadd.f32 %v316, %v349
        %v382 = vadd.f32 %v317, %v350
        %v383 = vadd.f32 %v318, %v351
        %v384 = vadd.f32 %v319, %v352
        %v385 = vadd.f32 %v320, %v353
        %v386 = vadd.f32 %v321, %v354
        %v387 = vadd.f32 %v322, %v355
        %v388 = vadd.f32 %v323, %v356
        %v389 = vadd.f32 %v324, %v357
        %v390 = vadd.f32 %v325, %v358
        %v391 = vadd.f32 %v326, %v359
        %v392 = vadd.f32 %v327, %v360
        %v393 = vadd.f32 %v328, %v361
        %v394 = vadd.f32 %v329, %v362
        %v395 = vadd.f32 %v330, %v363
        %v396 = vadd.f32 %v331, %v364
        %v397 = vadd.f32 %v332, %v365
        %v398 = vadd.f32 %v333, %v366
        %v399 = vadd.f32 %v334, %v367
        %v400 = vadd.f32 %v335, %v368
        %v401 = vadd.f32 %v336, %v369
        %v402 = vld [vmem:[#allocation5] sm:$0xf]
        %v403 = vld [vmem:[#allocation5 + $0x4] sm:$0xf]
        %v404 = vld [vmem:[#allocation5 + $0x8] sm:$0xf]
        %v405 = vld [vmem:[#allocation5 + $0xc] sm:$0xf]
        %v406 = vld [vmem:[#allocation5 + $0x10] sm:$0xf]
        %v407 = vld [vmem:[#allocation5 + $0x14] sm:$0xf]
        %v408 = vld [vmem:[#allocation5 + $0x18] sm:$0xf]
        %v409 = vld [vmem:[#allocation5 + $0x1c] sm:$0xf]
        %v410 = vld [vmem:[#allocation5 + $0x20] sm:$0xf]
        %v411 = vld [vmem:[#allocation5 + $0x24] sm:$0xf]
        %v412 = vld [vmem:[#allocation5 + $0x28] sm:$0xf]
        %v413 = vld [vmem:[#allocation5 + $0x2c] sm:$0xf]
        %v414 = vld [vmem:[#allocation5 + $0x30] sm:$0xf]
        %v415 = vld [vmem:[#allocation5 + $0x34] sm:$0xf]
        %v416 = vld [vmem:[#allocation5 + $0x38] sm:$0xf]
        %v417 = vld [vmem:[#allocation5 + $0x3c] sm:$0xf]
        %v418 = vpack.c.bf16 %v371, %v370
        %v419 = vpack.c.bf16 %v373, %v372
        %v420 = vpack.c.bf16 %v375, %v374
        %v421 = vpack.c.bf16 %v377, %v376
        %v422 = vpack.c.bf16 %v379, %v378
        %v423 = vpack.c.bf16 %v381, %v380
        %v424 = vpack.c.bf16 %v383, %v382
        %v425 = vpack.c.bf16 %v385, %v384
        %v426 = vpack.c.bf16 %v387, %v386
        %v427 = vpack.c.bf16 %v389, %v388
        %v428 = vpack.c.bf16 %v391, %v390
        %v429 = vpack.c.bf16 %v393, %v392
        %v430 = vpack.c.bf16 %v395, %v394
        %v431 = vpack.c.bf16 %v397, %v396
        %v432 = vpack.c.bf16 %v399, %v398
        %v433 = vpack.c.bf16 %v401, %v400
        %v434 = vld [vmem:[#allocation5 + $0x40] sm:$0x1]
        %v435 = vunpack.c.l.bf16 %v434
        %v436 = vperm.slane %v435, 0
        %v453 = vunpack.c.l.b16 %v402
        %v454 = vunpack.c.l.b16 %v403
        %v455 = vunpack.c.l.b16 %v404
        %v456 = vunpack.c.l.b16 %v405
        %v457 = vunpack.c.l.b16 %v406
        %v458 = vunpack.c.l.b16 %v407
        %v459 = vunpack.c.l.b16 %v408
        %v460 = vunpack.c.l.b16 %v409
        %v461 = vunpack.c.l.b16 %v410
        %v462 = vunpack.c.l.b16 %v411
        %v463 = vunpack.c.l.b16 %v412
        %v464 = vunpack.c.l.b16 %v413
        %v465 = vunpack.c.l.b16 %v414
        %v466 = vunpack.c.l.b16 %v415
        %v467 = vunpack.c.l.b16 %v416
        %v468 = vunpack.c.l.b16 %v417
        %v469 = vpack.c.b16 %v454, %v453
        %v470 = vpack.c.b16 %v456, %v455
        %v471 = vpack.c.b16 %v458, %v457
        %v472 = vpack.c.b16 %v460, %v459
        %v473 = vpack.c.b16 %v462, %v461
        %v474 = vpack.c.b16 %v464, %v463
        %v475 = vpack.c.b16 %v466, %v465
        %v476 = vpack.c.b16 %v468, %v467
        %485 = vmatpush.bf16.msra.mxu0 %v476
        %486 = vmatpush.bf16.msra.mxu0 %v475
        %487 = vmatpush.bf16.msra.mxu0 %v474
        %488 = vmatpush.bf16.msra.mxu0 %v473
        %489 = vmatpush.bf16.msra.mxu0 %v472
        %490 = vmatpush.bf16.msra.mxu0 %v471
        %491 = vmatpush.bf16.msra.mxu0 %v470
        %492 = vmatpush.bf16.msra.mxu0 %v469
        %493 = vmatmul.bf16.gmra.mxu0 %v418
        %v494 = vpop.f32.mrf.mxu0
        %v495 = vadd.f32 %v436, %v494
        %v496 = vpop.f32.mrf.mxu0
        %v497 = vadd.f32 %v436, %v496
        %498 = vmatmul.bf16.gmra.mxu0 %v419
        %v499 = vpop.f32.mrf.mxu0
        %v500 = vadd.f32 %v436, %v499
        %v501 = vpop.f32.mrf.mxu0
        %v502 = vadd.f32 %v436, %v501
        %503 = vmatmul.bf16.gmra.mxu0 %v420
        %v504 = vpop.f32.mrf.mxu0
        %v505 = vadd.f32 %v436, %v504
        %v506 = vpop.f32.mrf.mxu0
        %v507 = vadd.f32 %v436, %v506
        %508 = vmatmul.bf16.gmra.mxu0 %v421
        %v509 = vpop.f32.mrf.mxu0
        %v510 = vadd.f32 %v436, %v509
        %v511 = vpop.f32.mrf.mxu0
        %v512 = vadd.f32 %v436, %v511
        %513 = vmatmul.bf16.gmra.mxu0 %v422
        %v514 = vpop.f32.mrf.mxu0
        %v515 = vadd.f32 %v436, %v514
        %v516 = vpop.f32.mrf.mxu0
        %v517 = vadd.f32 %v436, %v516
        %518 = vmatmul.bf16.gmra.mxu0 %v423
        %v519 = vpop.f32.mrf.mxu0
        %v520 = vadd.f32 %v436, %v519
        %v521 = vpop.f32.mrf.mxu0
        %v522 = vadd.f32 %v436, %v521
        %523 = vmatmul.bf16.gmra.mxu0 %v424
        %v524 = vpop.f32.mrf.mxu0
        %v525 = vadd.f32 %v436, %v524
        %v526 = vpop.f32.mrf.mxu0
        %v527 = vadd.f32 %v436, %v526
        %528 = vmatmul.bf16.gmra.mxu0 %v425
        %v529 = vpop.f32.mrf.mxu0
        %v530 = vadd.f32 %v436, %v529
        %v531 = vpop.f32.mrf.mxu0
        %v532 = vadd.f32 %v436, %v531
        %533 = vmatmul.bf16.gmra.mxu0 %v426
        %v534 = vpop.f32.mrf.mxu0
        %v535 = vadd.f32 %v436, %v534
        %v536 = vpop.f32.mrf.mxu0
        %v537 = vadd.f32 %v436, %v536
        %538 = vmatmul.bf16.gmra.mxu0 %v427
        %v539 = vpop.f32.mrf.mxu0
        %v540 = vadd.f32 %v436, %v539
        %v541 = vpop.f32.mrf.mxu0
        %v542 = vadd.f32 %v436, %v541
        %543 = vmatmul.bf16.gmra.mxu0 %v428
        %v544 = vpop.f32.mrf.mxu0
        %v545 = vadd.f32 %v436, %v544
        %v546 = vpop.f32.mrf.mxu0
        %v547 = vadd.f32 %v436, %v546
        %548 = vmatmul.bf16.gmra.mxu0 %v429
        %v549 = vpop.f32.mrf.mxu0
        %v550 = vadd.f32 %v436, %v549
        %v551 = vpop.f32.mrf.mxu0
        %v552 = vadd.f32 %v436, %v551
        %553 = vmatmul.bf16.gmra.mxu0 %v430
        %v554 = vpop.f32.mrf.mxu0
        %v555 = vadd.f32 %v436, %v554
        %v556 = vpop.f32.mrf.mxu0
        %v557 = vadd.f32 %v436, %v556
        %558 = vmatmul.bf16.gmra.mxu0 %v431
        %v559 = vpop.f32.mrf.mxu0
        %v560 = vadd.f32 %v436, %v559
        %v561 = vpop.f32.mrf.mxu0
        %v562 = vadd.f32 %v436, %v561
        %563 = vmatmul.bf16.gmra.mxu0 %v432
        %v564 = vpop.f32.mrf.mxu0
        %v565 = vadd.f32 %v436, %v564
        %v566 = vpop.f32.mrf.mxu0
        %v567 = vadd.f32 %v436, %v566
        %568 = vmatmul.bf16.gmra.mxu0 %v433
        %v569 = vpop.f32.mrf.mxu0
        %v570 = vadd.f32 %v436, %v569
        %v571 = vpop.f32.mrf.mxu0
        %v572 = vadd.f32 %v436, %v571
        %573 = vdwg.mxu0
        %v574 = vxor.u32 %v495, 2147483648
        %v575 = vxor.u32 %v497, 2147483648
        %v576 = vxor.u32 %v500, 2147483648
        %v577 = vxor.u32 %v502, 2147483648
        %v578 = vxor.u32 %v505, 2147483648
        %v579 = vxor.u32 %v507, 2147483648
        %v580 = vxor.u32 %v510, 2147483648
        %v581 = vxor.u32 %v512, 2147483648
        %v582 = vxor.u32 %v515, 2147483648
        %v583 = vxor.u32 %v517, 2147483648
        %v584 = vxor.u32 %v520, 2147483648
        %v585 = vxor.u32 %v522, 2147483648
        %v586 = vxor.u32 %v525, 2147483648
        %v587 = vxor.u32 %v527, 2147483648
        %v588 = vxor.u32 %v530, 2147483648
        %v589 = vxor.u32 %v532, 2147483648
        %v590 = vxor.u32 %v535, 2147483648
        %v591 = vxor.u32 %v537, 2147483648
        %v592 = vxor.u32 %v540, 2147483648
        %v593 = vxor.u32 %v542, 2147483648
        %v594 = vxor.u32 %v545, 2147483648
        %v595 = vxor.u32 %v547, 2147483648
        %v596 = vxor.u32 %v550, 2147483648
        %v597 = vxor.u32 %v552, 2147483648
        %v598 = vxor.u32 %v555, 2147483648
        %v599 = vxor.u32 %v557, 2147483648
        %v600 = vxor.u32 %v560, 2147483648
        %v601 = vxor.u32 %v562, 2147483648
        %v602 = vxor.u32 %v565, 2147483648
        %v603 = vxor.u32 %v567, 2147483648
        %v604 = vxor.u32 %v570, 2147483648
        %v605 = vxor.u32 %v572, 2147483648
        %v606 = vmul.f32 %v574, 1.442695
        %v607 = vpow.pop %v606
        %v608 = vmul.f32 %v575, 1.442695
        %v609 = vpow.pop %v608
        %v610 = vmul.f32 %v576, 1.442695
        %v611 = vpow.pop %v610
        %v612 = vmul.f32 %v577, 1.442695
        %v613 = vpow.pop %v612
        %v614 = vmul.f32 %v578, 1.442695
        %v615 = vpow.pop %v614
        %v616 = vmul.f32 %v579, 1.442695
        %v617 = vpow.pop %v616
        %v618 = vmul.f32 %v580, 1.442695
        %v619 = vpow.pop %v618
        %v620 = vmul.f32 %v581, 1.442695
        %v621 = vpow.pop %v620
        %v622 = vmul.f32 %v582, 1.442695
        %v623 = vpow.pop %v622
        %v624 = vmul.f32 %v583, 1.442695
        %v625 = vpow.pop %v624
        %v626 = vmul.f32 %v584, 1.442695
        %v627 = vpow.pop %v626
        %v628 = vmul.f32 %v585, 1.442695
        %v629 = vpow.pop %v628
        %v630 = vmul.f32 %v586, 1.442695
        %v631 = vpow.pop %v630
        %v632 = vmul.f32 %v587, 1.442695
        %v633 = vpow.pop %v632
        %v634 = vmul.f32 %v588, 1.442695
        %v635 = vpow.pop %v634
        %v636 = vmul.f32 %v589, 1.442695
        %v637 = vpow.pop %v636
        %v638 = vmul.f32 %v590, 1.442695
        %v639 = vpow.pop %v638
        %v640 = vmul.f32 %v591, 1.442695
        %v641 = vpow.pop %v640
        %v642 = vmul.f32 %v592, 1.442695
        %v643 = vpow.pop %v642
        %v644 = vmul.f32 %v593, 1.442695
        %v645 = vpow.pop %v644
        %v646 = vmul.f32 %v594, 1.442695
        %v647 = vpow.pop %v646
        %v648 = vmul.f32 %v595, 1.442695
        %v649 = vpow.pop %v648
        %v650 = vmul.f32 %v596, 1.442695
        %v651 = vpow.pop %v650
        %v652 = vmul.f32 %v597, 1.442695
        %v653 = vpow.pop %v652
        %v654 = vmul.f32 %v598, 1.442695
        %v655 = vpow.pop %v654
        %v656 = vmul.f32 %v599, 1.442695
        %v657 = vpow.pop %v656
        %v658 = vmul.f32 %v600, 1.442695
        %v659 = vpow.pop %v658
        %v660 = vmul.f32 %v601, 1.442695
        %v661 = vpow.pop %v660
        %v662 = vmul.f32 %v602, 1.442695
        %v663 = vpow.pop %v662
        %v664 = vmul.f32 %v603, 1.442695
        %v665 = vpow.pop %v664
        %v666 = vmul.f32 %v604, 1.442695
        %v667 = vpow.pop %v666
        %v668 = vmul.f32 %v605, 1.442695
        %v669 = vpow.pop %v668
        %v670 = vadd.f32 %v607, 1.0
        %v671 = vadd.f32 %v609, 1.0
        %v672 = vadd.f32 %v611, 1.0
        %v673 = vadd.f32 %v613, 1.0
        %v674 = vadd.f32 %v615, 1.0
        %v675 = vadd.f32 %v617, 1.0
        %v676 = vadd.f32 %v619, 1.0
        %v677 = vadd.f32 %v621, 1.0
        %v678 = vadd.f32 %v623, 1.0
        %v679 = vadd.f32 %v625, 1.0
        %v680 = vadd.f32 %v627, 1.0
        %v681 = vadd.f32 %v629, 1.0
        %v682 = vadd.f32 %v631, 1.0
        %v683 = vadd.f32 %v633, 1.0
        %v684 = vadd.f32 %v635, 1.0
        %v685 = vadd.f32 %v637, 1.0
        %v686 = vadd.f32 %v639, 1.0
        %v687 = vadd.f32 %v641, 1.0
        %v688 = vadd.f32 %v643, 1.0
        %v689 = vadd.f32 %v645, 1.0
        %v690 = vadd.f32 %v647, 1.0
        %v691 = vadd.f32 %v649, 1.0
        %v692 = vadd.f32 %v651, 1.0
        %v693 = vadd.f32 %v653, 1.0
        %v694 = vadd.f32 %v655, 1.0
        %v695 = vadd.f32 %v657, 1.0
        %v696 = vadd.f32 %v659, 1.0
        %v697 = vadd.f32 %v661, 1.0
        %v698 = vadd.f32 %v663, 1.0
        %v699 = vadd.f32 %v665, 1.0
        %v700 = vadd.f32 %v667, 1.0
        %v701 = vadd.f32 %v669, 1.0
        %v702 = vrcp.pop %v670
        %v703 = vmul.f32 %v670, %v702
        %v704 = vsub.f32 1.0, %v703
        %v705 = vmul.f32 %v702, %v704
        %v706 = vadd.f32 %v702, %v705
        %vm707 = vweird.f32 %v670
        %vm708 = vweird.f32 %v702
        %vm709 = vmor %vm707, %vm708
        %v710 = vsel %vm709, %v702, %v706
        %v711 = vand.u32 2147483647, %v670
        %vm712 = vcmp.eq.f32.partialorder %v711, 8.507059e+37
        %v713 = vand.u32 %v670, 2147483648
        %v714 = vor.u32 1.1754944e-38, %v713
        %v715 = vsel %vm712, %v714, %v710
        %v716 = vmul.f32 1.0, %v715
        %v717 = vrcp.pop %v671
        %v718 = vmul.f32 %v671, %v717
        %v719 = vsub.f32 1.0, %v718
        %v720 = vmul.f32 %v717, %v719
        %v721 = vadd.f32 %v717, %v720
        %vm722 = vweird.f32 %v671
        %vm723 = vweird.f32 %v717
        %vm724 = vmor %vm722, %vm723
        %v725 = vsel %vm724, %v717, %v721
        %v726 = vand.u32 2147483647, %v671
        %vm727 = vcmp.eq.f32.partialorder %v726, 8.507059e+37
        %v728 = vand.u32 %v671, 2147483648
        %v729 = vor.u32 1.1754944e-38, %v728
        %v730 = vsel %vm727, %v729, %v725
        %v731 = vmul.f32 1.0, %v730
        %v732 = vrcp.pop %v672
        %v733 = vmul.f32 %v672, %v732
        %v734 = vsub.f32 1.0, %v733
        %v735 = vmul.f32 %v732, %v734
        %v736 = vadd.f32 %v732, %v735
        %vm737 = vweird.f32 %v672
        %vm738 = vweird.f32 %v732
        %vm739 = vmor %vm737, %vm738
        %v740 = vsel %vm739, %v732, %v736
        %v741 = vand.u32 2147483647, %v672
        %vm742 = vcmp.eq.f32.partialorder %v741, 8.507059e+37
        %v743 = vand.u32 %v672, 2147483648
        %v744 = vor.u32 1.1754944e-38, %v743
        %v745 = vsel %vm742, %v744, %v740
        %v746 = vmul.f32 1.0, %v745
        %v747 = vrcp.pop %v673
        %v748 = vmul.f32 %v673, %v747
        %v749 = vsub.f32 1.0, %v748
        %v750 = vmul.f32 %v747, %v749
        %v751 = vadd.f32 %v747, %v750
        %vm752 = vweird.f32 %v673
        %vm753 = vweird.f32 %v747
        %vm754 = vmor %vm752, %vm753
        %v755 = vsel %vm754, %v747, %v751
        %v756 = vand.u32 2147483647, %v673
        %vm757 = vcmp.eq.f32.partialorder %v756, 8.507059e+37
        %v758 = vand.u32 %v673, 2147483648
        %v759 = vor.u32 1.1754944e-38, %v758
        %v760 = vsel %vm757, %v759, %v755
        %v761 = vmul.f32 1.0, %v760
        %v762 = vrcp.pop %v674
        %v763 = vmul.f32 %v674, %v762
        %v764 = vsub.f32 1.0, %v763
        %v765 = vmul.f32 %v762, %v764
        %v766 = vadd.f32 %v762, %v765
        %vm767 = vweird.f32 %v674
        %vm768 = vweird.f32 %v762
        %vm769 = vmor %vm767, %vm768
        %v770 = vsel %vm769, %v762, %v766
        %v771 = vand.u32 2147483647, %v674
        %vm772 = vcmp.eq.f32.partialorder %v771, 8.507059e+37
        %v773 = vand.u32 %v674, 2147483648
        %v774 = vor.u32 1.1754944e-38, %v773
        %v775 = vsel %vm772, %v774, %v770
        %v776 = vmul.f32 1.0, %v775
        %v777 = vrcp.pop %v675
        %v778 = vmul.f32 %v675, %v777
        %v779 = vsub.f32 1.0, %v778
        %v780 = vmul.f32 %v777, %v779
        %v781 = vadd.f32 %v777, %v780
        %vm782 = vweird.f32 %v675
        %vm783 = vweird.f32 %v777
        %vm784 = vmor %vm782, %vm783
        %v785 = vsel %vm784, %v777, %v781
        %v786 = vand.u32 2147483647, %v675
        %vm787 = vcmp.eq.f32.partialorder %v786, 8.507059e+37
        %v788 = vand.u32 %v675, 2147483648
        %v789 = vor.u32 1.1754944e-38, %v788
        %v790 = vsel %vm787, %v789, %v785
        %v791 = vmul.f32 1.0, %v790
        %v792 = vrcp.pop %v676
        %v793 = vmul.f32 %v676, %v792
        %v794 = vsub.f32 1.0, %v793
        %v795 = vmul.f32 %v792, %v794
        %v796 = vadd.f32 %v792, %v795
        %vm797 = vweird.f32 %v676
        %vm798 = vweird.f32 %v792
        %vm799 = vmor %vm797, %vm798
        %v800 = vsel %vm799, %v792, %v796
        %v801 = vand.u32 2147483647, %v676
        %vm802 = vcmp.eq.f32.partialorder %v801, 8.507059e+37
        %v803 = vand.u32 %v676, 2147483648
        %v804 = vor.u32 1.1754944e-38, %v803
        %v805 = vsel %vm802, %v804, %v800
        %v806 = vmul.f32 1.0, %v805
        %v807 = vrcp.pop %v677
        %v808 = vmul.f32 %v677, %v807
        %v809 = vsub.f32 1.0, %v808
        %v810 = vmul.f32 %v807, %v809
        %v811 = vadd.f32 %v807, %v810
        %vm812 = vweird.f32 %v677
        %vm813 = vweird.f32 %v807
        %vm814 = vmor %vm812, %vm813
        %v815 = vsel %vm814, %v807, %v811
        %v816 = vand.u32 2147483647, %v677
        %vm817 = vcmp.eq.f32.partialorder %v816, 8.507059e+37
        %v818 = vand.u32 %v677, 2147483648
        %v819 = vor.u32 1.1754944e-38, %v818
        %v820 = vsel %vm817, %v819, %v815
        %v821 = vmul.f32 1.0, %v820
        %v822 = vrcp.pop %v678
        %v823 = vmul.f32 %v678, %v822
        %v824 = vsub.f32 1.0, %v823
        %v825 = vmul.f32 %v822, %v824
        %v826 = vadd.f32 %v822, %v825
        %vm827 = vweird.f32 %v678
        %vm828 = vweird.f32 %v822
        %vm829 = vmor %vm827, %vm828
        %v830 = vsel %vm829, %v822, %v826
        %v831 = vand.u32 2147483647, %v678
        %vm832 = vcmp.eq.f32.partialorder %v831, 8.507059e+37
        %v833 = vand.u32 %v678, 2147483648
        %v834 = vor.u32 1.1754944e-38, %v833
        %v835 = vsel %vm832, %v834, %v830
        %v836 = vmul.f32 1.0, %v835
        %v837 = vrcp.pop %v679
        %v838 = vmul.f32 %v679, %v837
        %v839 = vsub.f32 1.0, %v838
        %v840 = vmul.f32 %v837, %v839
        %v841 = vadd.f32 %v837, %v840
        %vm842 = vweird.f32 %v679
        %vm843 = vweird.f32 %v837
        %vm844 = vmor %vm842, %vm843
        %v845 = vsel %vm844, %v837, %v841
        %v846 = vand.u32 2147483647, %v679
        %vm847 = vcmp.eq.f32.partialorder %v846, 8.507059e+37
        %v848 = vand.u32 %v679, 2147483648
        %v849 = vor.u32 1.1754944e-38, %v848
        %v850 = vsel %vm847, %v849, %v845
        %v851 = vmul.f32 1.0, %v850
        %v852 = vrcp.pop %v680
        %v853 = vmul.f32 %v680, %v852
        %v854 = vsub.f32 1.0, %v853
        %v855 = vmul.f32 %v852, %v854
        %v856 = vadd.f32 %v852, %v855
        %vm857 = vweird.f32 %v680
        %vm858 = vweird.f32 %v852
        %vm859 = vmor %vm857, %vm858
        %v860 = vsel %vm859, %v852, %v856
        %v861 = vand.u32 2147483647, %v680
        %vm862 = vcmp.eq.f32.partialorder %v861, 8.507059e+37
        %v863 = vand.u32 %v680, 2147483648
        %v864 = vor.u32 1.1754944e-38, %v863
        %v865 = vsel %vm862, %v864, %v860
        %v866 = vmul.f32 1.0, %v865
        %v867 = vrcp.pop %v681
        %v868 = vmul.f32 %v681, %v867
        %v869 = vsub.f32 1.0, %v868
        %v870 = vmul.f32 %v867, %v869
        %v871 = vadd.f32 %v867, %v870
        %vm872 = vweird.f32 %v681
        %vm873 = vweird.f32 %v867
        %vm874 = vmor %vm872, %vm873
        %v875 = vsel %vm874, %v867, %v871
        %v876 = vand.u32 2147483647, %v681
        %vm877 = vcmp.eq.f32.partialorder %v876, 8.507059e+37
        %v878 = vand.u32 %v681, 2147483648
        %v879 = vor.u32 1.1754944e-38, %v878
        %v880 = vsel %vm877, %v879, %v875
        %v881 = vmul.f32 1.0, %v880
        %v882 = vrcp.pop %v682
        %v883 = vmul.f32 %v682, %v882
        %v884 = vsub.f32 1.0, %v883
        %v885 = vmul.f32 %v882, %v884
        %v886 = vadd.f32 %v882, %v885
        %vm887 = vweird.f32 %v682
        %vm888 = vweird.f32 %v882
        %vm889 = vmor %vm887, %vm888
        %v890 = vsel %vm889, %v882, %v886
        %v891 = vand.u32 2147483647, %v682
        %vm892 = vcmp.eq.f32.partialorder %v891, 8.507059e+37
        %v893 = vand.u32 %v682, 2147483648
        %v894 = vor.u32 1.1754944e-38, %v893
        %v895 = vsel %vm892, %v894, %v890
        %v896 = vmul.f32 1.0, %v895
        %v897 = vrcp.pop %v683
        %v898 = vmul.f32 %v683, %v897
        %v899 = vsub.f32 1.0, %v898
        %v900 = vmul.f32 %v897, %v899
        %v901 = vadd.f32 %v897, %v900
        %vm902 = vweird.f32 %v683
        %vm903 = vweird.f32 %v897
        %vm904 = vmor %vm902, %vm903
        %v905 = vsel %vm904, %v897, %v901
        %v906 = vand.u32 2147483647, %v683
        %vm907 = vcmp.eq.f32.partialorder %v906, 8.507059e+37
        %v908 = vand.u32 %v683, 2147483648
        %v909 = vor.u32 1.1754944e-38, %v908
        %v910 = vsel %vm907, %v909, %v905
        %v911 = vmul.f32 1.0, %v910
        %v912 = vrcp.pop %v684
        %v913 = vmul.f32 %v684, %v912
        %v914 = vsub.f32 1.0, %v913
        %v915 = vmul.f32 %v912, %v914
        %v916 = vadd.f32 %v912, %v915
        %vm917 = vweird.f32 %v684
        %vm918 = vweird.f32 %v912
        %vm919 = vmor %vm917, %vm918
        %v920 = vsel %vm919, %v912, %v916
        %v921 = vand.u32 2147483647, %v684
        %vm922 = vcmp.eq.f32.partialorder %v921, 8.507059e+37
        %v923 = vand.u32 %v684, 2147483648
        %v924 = vor.u32 1.1754944e-38, %v923
        %v925 = vsel %vm922, %v924, %v920
        %v926 = vmul.f32 1.0, %v925
        %v927 = vrcp.pop %v685
        %v928 = vmul.f32 %v685, %v927
        %v929 = vsub.f32 1.0, %v928
        %v930 = vmul.f32 %v927, %v929
        %v931 = vadd.f32 %v927, %v930
        %vm932 = vweird.f32 %v685
        %vm933 = vweird.f32 %v927
        %vm934 = vmor %vm932, %vm933
        %v935 = vsel %vm934, %v927, %v931
        %v936 = vand.u32 2147483647, %v685
        %vm937 = vcmp.eq.f32.partialorder %v936, 8.507059e+37
        %v938 = vand.u32 %v685, 2147483648
        %v939 = vor.u32 1.1754944e-38, %v938
        %v940 = vsel %vm937, %v939, %v935
        %v941 = vmul.f32 1.0, %v940
        %v942 = vrcp.pop %v686
        %v943 = vmul.f32 %v686, %v942
        %v944 = vsub.f32 1.0, %v943
        %v945 = vmul.f32 %v942, %v944
        %v946 = vadd.f32 %v942, %v945
        %vm947 = vweird.f32 %v686
        %vm948 = vweird.f32 %v942
        %vm949 = vmor %vm947, %vm948
        %v950 = vsel %vm949, %v942, %v946
        %v951 = vand.u32 2147483647, %v686
        %vm952 = vcmp.eq.f32.partialorder %v951, 8.507059e+37
        %v953 = vand.u32 %v686, 2147483648
        %v954 = vor.u32 1.1754944e-38, %v953
        %v955 = vsel %vm952, %v954, %v950
        %v956 = vmul.f32 1.0, %v955
        %v957 = vrcp.pop %v687
        %v958 = vmul.f32 %v687, %v957
        %v959 = vsub.f32 1.0, %v958
        %v960 = vmul.f32 %v957, %v959
        %v961 = vadd.f32 %v957, %v960
        %vm962 = vweird.f32 %v687
        %vm963 = vweird.f32 %v957
        %vm964 = vmor %vm962, %vm963
        %v965 = vsel %vm964, %v957, %v961
        %v966 = vand.u32 2147483647, %v687
        %vm967 = vcmp.eq.f32.partialorder %v966, 8.507059e+37
        %v968 = vand.u32 %v687, 2147483648
        %v969 = vor.u32 1.1754944e-38, %v968
        %v970 = vsel %vm967, %v969, %v965
        %v971 = vmul.f32 1.0, %v970
        %v972 = vrcp.pop %v688
        %v973 = vmul.f32 %v688, %v972
        %v974 = vsub.f32 1.0, %v973
        %v975 = vmul.f32 %v972, %v974
        %v976 = vadd.f32 %v972, %v975
        %vm977 = vweird.f32 %v688
        %vm978 = vweird.f32 %v972
        %vm979 = vmor %vm977, %vm978
        %v980 = vsel %vm979, %v972, %v976
        %v981 = vand.u32 2147483647, %v688
        %vm982 = vcmp.eq.f32.partialorder %v981, 8.507059e+37
        %v983 = vand.u32 %v688, 2147483648
        %v984 = vor.u32 1.1754944e-38, %v983
        %v985 = vsel %vm982, %v984, %v980
        %v986 = vmul.f32 1.0, %v985
        %v987 = vrcp.pop %v689
        %v988 = vmul.f32 %v689, %v987
        %v989 = vsub.f32 1.0, %v988
        %v990 = vmul.f32 %v987, %v989
        %v991 = vadd.f32 %v987, %v990
        %vm992 = vweird.f32 %v689
        %vm993 = vweird.f32 %v987
        %vm994 = vmor %vm992, %vm993
        %v995 = vsel %vm994, %v987, %v991
        %v996 = vand.u32 2147483647, %v689
        %vm997 = vcmp.eq.f32.partialorder %v996, 8.507059e+37
        %v998 = vand.u32 %v689, 2147483648
        %v999 = vor.u32 1.1754944e-38, %v998
        %v1000 = vsel %vm997, %v999, %v995
        %v1001 = vmul.f32 1.0, %v1000
        %v1002 = vrcp.pop %v690
        %v1003 = vmul.f32 %v690, %v1002
        %v1004 = vsub.f32 1.0, %v1003
        %v1005 = vmul.f32 %v1002, %v1004
        %v1006 = vadd.f32 %v1002, %v1005
        %vm1007 = vweird.f32 %v690
        %vm1008 = vweird.f32 %v1002
        %vm1009 = vmor %vm1007, %vm1008
        %v1010 = vsel %vm1009, %v1002, %v1006
        %v1011 = vand.u32 2147483647, %v690
        %vm1012 = vcmp.eq.f32.partialorder %v1011, 8.507059e+37
        %v1013 = vand.u32 %v690, 2147483648
        %v1014 = vor.u32 1.1754944e-38, %v1013
        %v1015 = vsel %vm1012, %v1014, %v1010
        %v1016 = vmul.f32 1.0, %v1015
        %v1017 = vrcp.pop %v691
        %v1018 = vmul.f32 %v691, %v1017
        %v1019 = vsub.f32 1.0, %v1018
        %v1020 = vmul.f32 %v1017, %v1019
        %v1021 = vadd.f32 %v1017, %v1020
        %vm1022 = vweird.f32 %v691
        %vm1023 = vweird.f32 %v1017
        %vm1024 = vmor %vm1022, %vm1023
        %v1025 = vsel %vm1024, %v1017, %v1021
        %v1026 = vand.u32 2147483647, %v691
        %vm1027 = vcmp.eq.f32.partialorder %v1026, 8.507059e+37
        %v1028 = vand.u32 %v691, 2147483648
        %v1029 = vor.u32 1.1754944e-38, %v1028
        %v1030 = vsel %vm1027, %v1029, %v1025
        %v1031 = vmul.f32 1.0, %v1030
        %v1032 = vrcp.pop %v692
        %v1033 = vmul.f32 %v692, %v1032
        %v1034 = vsub.f32 1.0, %v1033
        %v1035 = vmul.f32 %v1032, %v1034
        %v1036 = vadd.f32 %v1032, %v1035
        %vm1037 = vweird.f32 %v692
        %vm1038 = vweird.f32 %v1032
        %vm1039 = vmor %vm1037, %vm1038
        %v1040 = vsel %vm1039, %v1032, %v1036
        %v1041 = vand.u32 2147483647, %v692
        %vm1042 = vcmp.eq.f32.partialorder %v1041, 8.507059e+37
        %v1043 = vand.u32 %v692, 2147483648
        %v1044 = vor.u32 1.1754944e-38, %v1043
        %v1045 = vsel %vm1042, %v1044, %v1040
        %v1046 = vmul.f32 1.0, %v1045
        %v1047 = vrcp.pop %v693
        %v1048 = vmul.f32 %v693, %v1047
        %v1049 = vsub.f32 1.0, %v1048
        %v1050 = vmul.f32 %v1047, %v1049
        %v1051 = vadd.f32 %v1047, %v1050
        %vm1052 = vweird.f32 %v693
        %vm1053 = vweird.f32 %v1047
        %vm1054 = vmor %vm1052, %vm1053
        %v1055 = vsel %vm1054, %v1047, %v1051
        %v1056 = vand.u32 2147483647, %v693
        %vm1057 = vcmp.eq.f32.partialorder %v1056, 8.507059e+37
        %v1058 = vand.u32 %v693, 2147483648
        %v1059 = vor.u32 1.1754944e-38, %v1058
        %v1060 = vsel %vm1057, %v1059, %v1055
        %v1061 = vmul.f32 1.0, %v1060
        %v1062 = vrcp.pop %v694
        %v1063 = vmul.f32 %v694, %v1062
        %v1064 = vsub.f32 1.0, %v1063
        %v1065 = vmul.f32 %v1062, %v1064
        %v1066 = vadd.f32 %v1062, %v1065
        %vm1067 = vweird.f32 %v694
        %vm1068 = vweird.f32 %v1062
        %vm1069 = vmor %vm1067, %vm1068
        %v1070 = vsel %vm1069, %v1062, %v1066
        %v1071 = vand.u32 2147483647, %v694
        %vm1072 = vcmp.eq.f32.partialorder %v1071, 8.507059e+37
        %v1073 = vand.u32 %v694, 2147483648
        %v1074 = vor.u32 1.1754944e-38, %v1073
        %v1075 = vsel %vm1072, %v1074, %v1070
        %v1076 = vmul.f32 1.0, %v1075
        %v1077 = vrcp.pop %v695
        %v1078 = vmul.f32 %v695, %v1077
        %v1079 = vsub.f32 1.0, %v1078
        %v1080 = vmul.f32 %v1077, %v1079
        %v1081 = vadd.f32 %v1077, %v1080
        %vm1082 = vweird.f32 %v695
        %vm1083 = vweird.f32 %v1077
        %vm1084 = vmor %vm1082, %vm1083
        %v1085 = vsel %vm1084, %v1077, %v1081
        %v1086 = vand.u32 2147483647, %v695
        %vm1087 = vcmp.eq.f32.partialorder %v1086, 8.507059e+37
        %v1088 = vand.u32 %v695, 2147483648
        %v1089 = vor.u32 1.1754944e-38, %v1088
        %v1090 = vsel %vm1087, %v1089, %v1085
        %v1091 = vmul.f32 1.0, %v1090
        %v1092 = vrcp.pop %v696
        %v1093 = vmul.f32 %v696, %v1092
        %v1094 = vsub.f32 1.0, %v1093
        %v1095 = vmul.f32 %v1092, %v1094
        %v1096 = vadd.f32 %v1092, %v1095
        %vm1097 = vweird.f32 %v696
        %vm1098 = vweird.f32 %v1092
        %vm1099 = vmor %vm1097, %vm1098
        %v1100 = vsel %vm1099, %v1092, %v1096
        %v1101 = vand.u32 2147483647, %v696
        %vm1102 = vcmp.eq.f32.partialorder %v1101, 8.507059e+37
        %v1103 = vand.u32 %v696, 2147483648
        %v1104 = vor.u32 1.1754944e-38, %v1103
        %v1105 = vsel %vm1102, %v1104, %v1100
        %v1106 = vmul.f32 1.0, %v1105
        %v1107 = vrcp.pop %v697
        %v1108 = vmul.f32 %v697, %v1107
        %v1109 = vsub.f32 1.0, %v1108
        %v1110 = vmul.f32 %v1107, %v1109
        %v1111 = vadd.f32 %v1107, %v1110
        %vm1112 = vweird.f32 %v697
        %vm1113 = vweird.f32 %v1107
        %vm1114 = vmor %vm1112, %vm1113
        %v1115 = vsel %vm1114, %v1107, %v1111
        %v1116 = vand.u32 2147483647, %v697
        %vm1117 = vcmp.eq.f32.partialorder %v1116, 8.507059e+37
        %v1118 = vand.u32 %v697, 2147483648
        %v1119 = vor.u32 1.1754944e-38, %v1118
        %v1120 = vsel %vm1117, %v1119, %v1115
        %v1121 = vmul.f32 1.0, %v1120
        %v1122 = vrcp.pop %v698
        %v1123 = vmul.f32 %v698, %v1122
        %v1124 = vsub.f32 1.0, %v1123
        %v1125 = vmul.f32 %v1122, %v1124
        %v1126 = vadd.f32 %v1122, %v1125
        %vm1127 = vweird.f32 %v698
        %vm1128 = vweird.f32 %v1122
        %vm1129 = vmor %vm1127, %vm1128
        %v1130 = vsel %vm1129, %v1122, %v1126
        %v1131 = vand.u32 2147483647, %v698
        %vm1132 = vcmp.eq.f32.partialorder %v1131, 8.507059e+37
        %v1133 = vand.u32 %v698, 2147483648
        %v1134 = vor.u32 1.1754944e-38, %v1133
        %v1135 = vsel %vm1132, %v1134, %v1130
        %v1136 = vmul.f32 1.0, %v1135
        %v1137 = vrcp.pop %v699
        %v1138 = vmul.f32 %v699, %v1137
        %v1139 = vsub.f32 1.0, %v1138
        %v1140 = vmul.f32 %v1137, %v1139
        %v1141 = vadd.f32 %v1137, %v1140
        %vm1142 = vweird.f32 %v699
        %vm1143 = vweird.f32 %v1137
        %vm1144 = vmor %vm1142, %vm1143
        %v1145 = vsel %vm1144, %v1137, %v1141
        %v1146 = vand.u32 2147483647, %v699
        %vm1147 = vcmp.eq.f32.partialorder %v1146, 8.507059e+37
        %v1148 = vand.u32 %v699, 2147483648
        %v1149 = vor.u32 1.1754944e-38, %v1148
        %v1150 = vsel %vm1147, %v1149, %v1145
        %v1151 = vmul.f32 1.0, %v1150
        %v1152 = vrcp.pop %v700
        %v1153 = vmul.f32 %v700, %v1152
        %v1154 = vsub.f32 1.0, %v1153
        %v1155 = vmul.f32 %v1152, %v1154
        %v1156 = vadd.f32 %v1152, %v1155
        %vm1157 = vweird.f32 %v700
        %vm1158 = vweird.f32 %v1152
        %vm1159 = vmor %vm1157, %vm1158
        %v1160 = vsel %vm1159, %v1152, %v1156
        %v1161 = vand.u32 2147483647, %v700
        %vm1162 = vcmp.eq.f32.partialorder %v1161, 8.507059e+37
        %v1163 = vand.u32 %v700, 2147483648
        %v1164 = vor.u32 1.1754944e-38, %v1163
        %v1165 = vsel %vm1162, %v1164, %v1160
        %v1166 = vmul.f32 1.0, %v1165
        %v1167 = vrcp.pop %v701
        %v1168 = vmul.f32 %v701, %v1167
        %v1169 = vsub.f32 1.0, %v1168
        %v1170 = vmul.f32 %v1167, %v1169
        %v1171 = vadd.f32 %v1167, %v1170
        %vm1172 = vweird.f32 %v701
        %vm1173 = vweird.f32 %v1167
        %vm1174 = vmor %vm1172, %vm1173
        %v1175 = vsel %vm1174, %v1167, %v1171
        %v1176 = vand.u32 2147483647, %v701
        %vm1177 = vcmp.eq.f32.partialorder %v1176, 8.507059e+37
        %v1178 = vand.u32 %v701, 2147483648
        %v1179 = vor.u32 1.1754944e-38, %v1178
        %v1180 = vsel %vm1177, %v1179, %v1175
        %v1181 = vmul.f32 1.0, %v1180
        %v1182 = vld [vmem:[#allocation5 + $0x48] sm:$0xf]
        %v1183 = vld [vmem:[#allocation5 + $0x4c] sm:$0xf]
        %v1184 = vld [vmem:[#allocation5 + $0x50] sm:$0xf]
        %v1185 = vld [vmem:[#allocation5 + $0x54] sm:$0xf]
        %v1186 = vld [vmem:[#allocation5 + $0x58] sm:$0xf]
        %v1187 = vld [vmem:[#allocation5 + $0x5c] sm:$0xf]
        %v1188 = vld [vmem:[#allocation5 + $0x60] sm:$0xf]
        %v1189 = vld [vmem:[#allocation5 + $0x64] sm:$0xf]
        %v1190 = vld [vmem:[#allocation5 + $0x68] sm:$0xf]
        %v1191 = vld [vmem:[#allocation5 + $0x6c] sm:$0xf]
        %v1192 = vld [vmem:[#allocation5 + $0x70] sm:$0xf]
        %v1193 = vld [vmem:[#allocation5 + $0x74] sm:$0xf]
        %v1194 = vld [vmem:[#allocation5 + $0x78] sm:$0xf]
        %v1195 = vld [vmem:[#allocation5 + $0x7c] sm:$0xf]
        %v1196 = vld [vmem:[#allocation5 + $0x80] sm:$0xf]
        %v1197 = vld [vmem:[#allocation5 + $0x84] sm:$0xf]
        %v1198 = vld [vmem:[#allocation5 + $0x88] sm:$0x1]
        %v1199 = vunpack.c.l.bf16 %v1198
        %v1200 = vperm.slane %v1199, 0
        %v1217 = vunpack.c.l.b16 %v1182
        %v1218 = vunpack.c.l.b16 %v1183
        %v1219 = vunpack.c.l.b16 %v1184
        %v1220 = vunpack.c.l.b16 %v1185
        %v1221 = vunpack.c.l.b16 %v1186
        %v1222 = vunpack.c.l.b16 %v1187
        %v1223 = vunpack.c.l.b16 %v1188
        %v1224 = vunpack.c.l.b16 %v1189
        %v1225 = vunpack.c.l.b16 %v1190
        %v1226 = vunpack.c.l.b16 %v1191
        %v1227 = vunpack.c.l.b16 %v1192
        %v1228 = vunpack.c.l.b16 %v1193
        %v1229 = vunpack.c.l.b16 %v1194
        %v1230 = vunpack.c.l.b16 %v1195
        %v1231 = vunpack.c.l.b16 %v1196
        %v1232 = vunpack.c.l.b16 %v1197
        %v1233 = vpack.c.b16 %v1218, %v1217
        %v1234 = vpack.c.b16 %v1220, %v1219
        %v1235 = vpack.c.b16 %v1222, %v1221
        %v1236 = vpack.c.b16 %v1224, %v1223
        %v1237 = vpack.c.b16 %v1226, %v1225
        %v1238 = vpack.c.b16 %v1228, %v1227
        %v1239 = vpack.c.b16 %v1230, %v1229
        %v1240 = vpack.c.b16 %v1232, %v1231
        %1249 = vmatpush.bf16.msra.mxu0 %v1240
        %1250 = vmatpush.bf16.msra.mxu0 %v1239
        %1251 = vmatpush.bf16.msra.mxu0 %v1238
        %1252 = vmatpush.bf16.msra.mxu0 %v1237
        %1253 = vmatpush.bf16.msra.mxu0 %v1236
        %1254 = vmatpush.bf16.msra.mxu0 %v1235
        %1255 = vmatpush.bf16.msra.mxu0 %v1234
        %1256 = vmatpush.bf16.msra.mxu0 %v1233
        %1257 = vmatmul.bf16.gmra.mxu0 %v418
        %v1258 = vpop.f32.mrf.mxu0
        %v1259 = vadd.f32 %v1200, %v1258
        %v1260 = vpop.f32.mrf.mxu0
        %v1261 = vadd.f32 %v1200, %v1260
        %1262 = vmatmul.bf16.gmra.mxu0 %v419
        %v1263 = vpop.f32.mrf.mxu0
        %v1264 = vadd.f32 %v1200, %v1263
        %v1265 = vpop.f32.mrf.mxu0
        %v1266 = vadd.f32 %v1200, %v1265
        %1267 = vmatmul.bf16.gmra.mxu0 %v420
        %v1268 = vpop.f32.mrf.mxu0
        %v1269 = vadd.f32 %v1200, %v1268
        %v1270 = vpop.f32.mrf.mxu0
        %v1271 = vadd.f32 %v1200, %v1270
        %1272 = vmatmul.bf16.gmra.mxu0 %v421
        %v1273 = vpop.f32.mrf.mxu0
        %v1274 = vadd.f32 %v1200, %v1273
        %v1275 = vpop.f32.mrf.mxu0
        %v1276 = vadd.f32 %v1200, %v1275
        %1277 = vmatmul.bf16.gmra.mxu0 %v422
        %v1278 = vpop.f32.mrf.mxu0
        %v1279 = vadd.f32 %v1200, %v1278
        %v1280 = vpop.f32.mrf.mxu0
        %v1281 = vadd.f32 %v1200, %v1280
        %1282 = vmatmul.bf16.gmra.mxu0 %v423
        %v1283 = vpop.f32.mrf.mxu0
        %v1284 = vadd.f32 %v1200, %v1283
        %v1285 = vpop.f32.mrf.mxu0
        %v1286 = vadd.f32 %v1200, %v1285
        %1287 = vmatmul.bf16.gmra.mxu0 %v424
        %v1288 = vpop.f32.mrf.mxu0
        %v1289 = vadd.f32 %v1200, %v1288
        %v1290 = vpop.f32.mrf.mxu0
        %v1291 = vadd.f32 %v1200, %v1290
        %1292 = vmatmul.bf16.gmra.mxu0 %v425
        %v1293 = vpop.f32.mrf.mxu0
        %v1294 = vadd.f32 %v1200, %v1293
        %v1295 = vpop.f32.mrf.mxu0
        %v1296 = vadd.f32 %v1200, %v1295
        %1297 = vmatmul.bf16.gmra.mxu0 %v426
        %v1298 = vpop.f32.mrf.mxu0
        %v1299 = vadd.f32 %v1200, %v1298
        %v1300 = vpop.f32.mrf.mxu0
        %v1301 = vadd.f32 %v1200, %v1300
        %1302 = vmatmul.bf16.gmra.mxu0 %v427
        %v1303 = vpop.f32.mrf.mxu0
        %v1304 = vadd.f32 %v1200, %v1303
        %v1305 = vpop.f32.mrf.mxu0
        %v1306 = vadd.f32 %v1200, %v1305
        %1307 = vmatmul.bf16.gmra.mxu0 %v428
        %v1308 = vpop.f32.mrf.mxu0
        %v1309 = vadd.f32 %v1200, %v1308
        %v1310 = vpop.f32.mrf.mxu0
        %v1311 = vadd.f32 %v1200, %v1310
        %1312 = vmatmul.bf16.gmra.mxu0 %v429
        %v1313 = vpop.f32.mrf.mxu0
        %v1314 = vadd.f32 %v1200, %v1313
        %v1315 = vpop.f32.mrf.mxu0
        %v1316 = vadd.f32 %v1200, %v1315
        %1317 = vmatmul.bf16.gmra.mxu0 %v430
        %v1318 = vpop.f32.mrf.mxu0
        %v1319 = vadd.f32 %v1200, %v1318
        %v1320 = vpop.f32.mrf.mxu0
        %v1321 = vadd.f32 %v1200, %v1320
        %1322 = vmatmul.bf16.gmra.mxu0 %v431
        %v1323 = vpop.f32.mrf.mxu0
        %v1324 = vadd.f32 %v1200, %v1323
        %v1325 = vpop.f32.mrf.mxu0
        %v1326 = vadd.f32 %v1200, %v1325
        %1327 = vmatmul.bf16.gmra.mxu0 %v432
        %v1328 = vpop.f32.mrf.mxu0
        %v1329 = vadd.f32 %v1200, %v1328
        %v1330 = vpop.f32.mrf.mxu0
        %v1331 = vadd.f32 %v1200, %v1330
        %1332 = vmatmul.bf16.gmra.mxu0 %v433
        %v1333 = vpop.f32.mrf.mxu0
        %v1334 = vadd.f32 %v1200, %v1333
        %v1335 = vpop.f32.mrf.mxu0
        %v1336 = vadd.f32 %v1200, %v1335
        %1337 = vdwg.mxu0
        %v1338 = vxor.u32 %v1259, 2147483648
        %v1339 = vxor.u32 %v1261, 2147483648
        %v1340 = vxor.u32 %v1264, 2147483648
        %v1341 = vxor.u32 %v1266, 2147483648
        %v1342 = vxor.u32 %v1269, 2147483648
        %v1343 = vxor.u32 %v1271, 2147483648
        %v1344 = vxor.u32 %v1274, 2147483648
        %v1345 = vxor.u32 %v1276, 2147483648
        %v1346 = vxor.u32 %v1279, 2147483648
        %v1347 = vxor.u32 %v1281, 2147483648
        %v1348 = vxor.u32 %v1284, 2147483648
        %v1349 = vxor.u32 %v1286, 2147483648
        %v1350 = vxor.u32 %v1289, 2147483648
        %v1351 = vxor.u32 %v1291, 2147483648
        %v1352 = vxor.u32 %v1294, 2147483648
        %v1353 = vxor.u32 %v1296, 2147483648
        %v1354 = vxor.u32 %v1299, 2147483648
        %v1355 = vxor.u32 %v1301, 2147483648
        %v1356 = vxor.u32 %v1304, 2147483648
        %v1357 = vxor.u32 %v1306, 2147483648
        %v1358 = vxor.u32 %v1309, 2147483648
        %v1359 = vxor.u32 %v1311, 2147483648
        %v1360 = vxor.u32 %v1314, 2147483648
        %v1361 = vxor.u32 %v1316, 2147483648
        %v1362 = vxor.u32 %v1319, 2147483648
        %v1363 = vxor.u32 %v1321, 2147483648
        %v1364 = vxor.u32 %v1324, 2147483648
        %v1365 = vxor.u32 %v1326, 2147483648
        %v1366 = vxor.u32 %v1329, 2147483648
        %v1367 = vxor.u32 %v1331, 2147483648
        %v1368 = vxor.u32 %v1334, 2147483648
        %v1369 = vxor.u32 %v1336, 2147483648
        %v1370 = vmul.f32 %v1338, 1.442695
        %v1371 = vpow.pop %v1370
        %v1372 = vmul.f32 %v1339, 1.442695
        %v1373 = vpow.pop %v1372
        %v1374 = vmul.f32 %v1340, 1.442695
        %v1375 = vpow.pop %v1374
        %v1376 = vmul.f32 %v1341, 1.442695
        %v1377 = vpow.pop %v1376
        %v1378 = vmul.f32 %v1342, 1.442695
        %v1379 = vpow.pop %v1378
        %v1380 = vmul.f32 %v1343, 1.442695
        %v1381 = vpow.pop %v1380
        %v1382 = vmul.f32 %v1344, 1.442695
        %v1383 = vpow.pop %v1382
        %v1384 = vmul.f32 %v1345, 1.442695
        %v1385 = vpow.pop %v1384
        %v1386 = vmul.f32 %v1346, 1.442695
        %v1387 = vpow.pop %v1386
        %v1388 = vmul.f32 %v1347, 1.442695
        %v1389 = vpow.pop %v1388
        %v1390 = vmul.f32 %v1348, 1.442695
        %v1391 = vpow.pop %v1390
        %v1392 = vmul.f32 %v1349, 1.442695
        %v1393 = vpow.pop %v1392
        %v1394 = vmul.f32 %v1350, 1.442695
        %v1395 = vpow.pop %v1394
        %v1396 = vmul.f32 %v1351, 1.442695
        %v1397 = vpow.pop %v1396
        %v1398 = vmul.f32 %v1352, 1.442695
        %v1399 = vpow.pop %v1398
        %v1400 = vmul.f32 %v1353, 1.442695
        %v1401 = vpow.pop %v1400
        %v1402 = vmul.f32 %v1354, 1.442695
        %v1403 = vpow.pop %v1402
        %v1404 = vmul.f32 %v1355, 1.442695
        %v1405 = vpow.pop %v1404
        %v1406 = vmul.f32 %v1356, 1.442695
        %v1407 = vpow.pop %v1406
        %v1408 = vmul.f32 %v1357, 1.442695
        %v1409 = vpow.pop %v1408
        %v1410 = vmul.f32 %v1358, 1.442695
        %v1411 = vpow.pop %v1410
        %v1412 = vmul.f32 %v1359, 1.442695
        %v1413 = vpow.pop %v1412
        %v1414 = vmul.f32 %v1360, 1.442695
        %v1415 = vpow.pop %v1414
        %v1416 = vmul.f32 %v1361, 1.442695
        %v1417 = vpow.pop %v1416
        %v1418 = vmul.f32 %v1362, 1.442695
        %v1419 = vpow.pop %v1418
        %v1420 = vmul.f32 %v1363, 1.442695
        %v1421 = vpow.pop %v1420
        %v1422 = vmul.f32 %v1364, 1.442695
        %v1423 = vpow.pop %v1422
        %v1424 = vmul.f32 %v1365, 1.442695
        %v1425 = vpow.pop %v1424
        %v1426 = vmul.f32 %v1366, 1.442695
        %v1427 = vpow.pop %v1426
        %v1428 = vmul.f32 %v1367, 1.442695
        %v1429 = vpow.pop %v1428
        %v1430 = vmul.f32 %v1368, 1.442695
        %v1431 = vpow.pop %v1430
        %v1432 = vmul.f32 %v1369, 1.442695
        %v1433 = vpow.pop %v1432
        %v1434 = vadd.f32 %v1371, 1.0
        %v1435 = vadd.f32 %v1373, 1.0
        %v1436 = vadd.f32 %v1375, 1.0
        %v1437 = vadd.f32 %v1377, 1.0
        %v1438 = vadd.f32 %v1379, 1.0
        %v1439 = vadd.f32 %v1381, 1.0
        %v1440 = vadd.f32 %v1383, 1.0
        %v1441 = vadd.f32 %v1385, 1.0
        %v1442 = vadd.f32 %v1387, 1.0
        %v1443 = vadd.f32 %v1389, 1.0
        %v1444 = vadd.f32 %v1391, 1.0
        %v1445 = vadd.f32 %v1393, 1.0
        %v1446 = vadd.f32 %v1395, 1.0
        %v1447 = vadd.f32 %v1397, 1.0
        %v1448 = vadd.f32 %v1399, 1.0
        %v1449 = vadd.f32 %v1401, 1.0
        %v1450 = vadd.f32 %v1403, 1.0
        %v1451 = vadd.f32 %v1405, 1.0
        %v1452 = vadd.f32 %v1407, 1.0
        %v1453 = vadd.f32 %v1409, 1.0
        %v1454 = vadd.f32 %v1411, 1.0
        %v1455 = vadd.f32 %v1413, 1.0
        %v1456 = vadd.f32 %v1415, 1.0
        %v1457 = vadd.f32 %v1417, 1.0
        %v1458 = vadd.f32 %v1419, 1.0
        %v1459 = vadd.f32 %v1421, 1.0
        %v1460 = vadd.f32 %v1423, 1.0
        %v1461 = vadd.f32 %v1425, 1.0
        %v1462 = vadd.f32 %v1427, 1.0
        %v1463 = vadd.f32 %v1429, 1.0
        %v1464 = vadd.f32 %v1431, 1.0
        %v1465 = vadd.f32 %v1433, 1.0
        %v1466 = vrcp.pop %v1434
        %v1467 = vmul.f32 %v1434, %v1466
        %v1468 = vsub.f32 1.0, %v1467
        %v1469 = vmul.f32 %v1466, %v1468
        %v1470 = vadd.f32 %v1466, %v1469
        %vm1471 = vweird.f32 %v1434
        %vm1472 = vweird.f32 %v1466
        %vm1473 = vmor %vm1471, %vm1472
        %v1474 = vsel %vm1473, %v1466, %v1470
        %v1475 = vand.u32 2147483647, %v1434
        %vm1476 = vcmp.eq.f32.partialorder %v1475, 8.507059e+37
        %v1477 = vand.u32 %v1434, 2147483648
        %v1478 = vor.u32 1.1754944e-38, %v1477
        %v1479 = vsel %vm1476, %v1478, %v1474
        %v1480 = vmul.f32 1.0, %v1479
        %v1481 = vrcp.pop %v1435
        %v1482 = vmul.f32 %v1435, %v1481
        %v1483 = vsub.f32 1.0, %v1482
        %v1484 = vmul.f32 %v1481, %v1483
        %v1485 = vadd.f32 %v1481, %v1484
        %vm1486 = vweird.f32 %v1435
        %vm1487 = vweird.f32 %v1481
        %vm1488 = vmor %vm1486, %vm1487
        %v1489 = vsel %vm1488, %v1481, %v1485
        %v1490 = vand.u32 2147483647, %v1435
        %vm1491 = vcmp.eq.f32.partialorder %v1490, 8.507059e+37
        %v1492 = vand.u32 %v1435, 2147483648
        %v1493 = vor.u32 1.1754944e-38, %v1492
        %v1494 = vsel %vm1491, %v1493, %v1489
        %v1495 = vmul.f32 1.0, %v1494
        %v1496 = vrcp.pop %v1436
        %v1497 = vmul.f32 %v1436, %v1496
        %v1498 = vsub.f32 1.0, %v1497
        %v1499 = vmul.f32 %v1496, %v1498
        %v1500 = vadd.f32 %v1496, %v1499
        %vm1501 = vweird.f32 %v1436
        %vm1502 = vweird.f32 %v1496
        %vm1503 = vmor %vm1501, %vm1502
        %v1504 = vsel %vm1503, %v1496, %v1500
        %v1505 = vand.u32 2147483647, %v1436
        %vm1506 = vcmp.eq.f32.partialorder %v1505, 8.507059e+37
        %v1507 = vand.u32 %v1436, 2147483648
        %v1508 = vor.u32 1.1754944e-38, %v1507
        %v1509 = vsel %vm1506, %v1508, %v1504
        %v1510 = vmul.f32 1.0, %v1509
        %v1511 = vrcp.pop %v1437
        %v1512 = vmul.f32 %v1437, %v1511
        %v1513 = vsub.f32 1.0, %v1512
        %v1514 = vmul.f32 %v1511, %v1513
        %v1515 = vadd.f32 %v1511, %v1514
        %vm1516 = vweird.f32 %v1437
        %vm1517 = vweird.f32 %v1511
        %vm1518 = vmor %vm1516, %vm1517
        %v1519 = vsel %vm1518, %v1511, %v1515
        %v1520 = vand.u32 2147483647, %v1437
        %vm1521 = vcmp.eq.f32.partialorder %v1520, 8.507059e+37
        %v1522 = vand.u32 %v1437, 2147483648
        %v1523 = vor.u32 1.1754944e-38, %v1522
        %v1524 = vsel %vm1521, %v1523, %v1519
        %v1525 = vmul.f32 1.0, %v1524
        %v1526 = vrcp.pop %v1438
        %v1527 = vmul.f32 %v1438, %v1526
        %v1528 = vsub.f32 1.0, %v1527
        %v1529 = vmul.f32 %v1526, %v1528
        %v1530 = vadd.f32 %v1526, %v1529
        %vm1531 = vweird.f32 %v1438
        %vm1532 = vweird.f32 %v1526
        %vm1533 = vmor %vm1531, %vm1532
        %v1534 = vsel %vm1533, %v1526, %v1530
        %v1535 = vand.u32 2147483647, %v1438
        %vm1536 = vcmp.eq.f32.partialorder %v1535, 8.507059e+37
        %v1537 = vand.u32 %v1438, 2147483648
        %v1538 = vor.u32 1.1754944e-38, %v1537
        %v1539 = vsel %vm1536, %v1538, %v1534
        %v1540 = vmul.f32 1.0, %v1539
        %v1541 = vrcp.pop %v1439
        %v1542 = vmul.f32 %v1439, %v1541
        %v1543 = vsub.f32 1.0, %v1542
        %v1544 = vmul.f32 %v1541, %v1543
        %v1545 = vadd.f32 %v1541, %v1544
        %vm1546 = vweird.f32 %v1439
        %vm1547 = vweird.f32 %v1541
        %vm1548 = vmor %vm1546, %vm1547
        %v1549 = vsel %vm1548, %v1541, %v1545
        %v1550 = vand.u32 2147483647, %v1439
        %vm1551 = vcmp.eq.f32.partialorder %v1550, 8.507059e+37
        %v1552 = vand.u32 %v1439, 2147483648
        %v1553 = vor.u32 1.1754944e-38, %v1552
        %v1554 = vsel %vm1551, %v1553, %v1549
        %v1555 = vmul.f32 1.0, %v1554
        %v1556 = vrcp.pop %v1440
        %v1557 = vmul.f32 %v1440, %v1556
        %v1558 = vsub.f32 1.0, %v1557
        %v1559 = vmul.f32 %v1556, %v1558
        %v1560 = vadd.f32 %v1556, %v1559
        %vm1561 = vweird.f32 %v1440
        %vm1562 = vweird.f32 %v1556
        %vm1563 = vmor %vm1561, %vm1562
        %v1564 = vsel %vm1563, %v1556, %v1560
        %v1565 = vand.u32 2147483647, %v1440
        %vm1566 = vcmp.eq.f32.partialorder %v1565, 8.507059e+37
        %v1567 = vand.u32 %v1440, 2147483648
        %v1568 = vor.u32 1.1754944e-38, %v1567
        %v1569 = vsel %vm1566, %v1568, %v1564
        %v1570 = vmul.f32 1.0, %v1569
        %v1571 = vrcp.pop %v1441
        %v1572 = vmul.f32 %v1441, %v1571
        %v1573 = vsub.f32 1.0, %v1572
        %v1574 = vmul.f32 %v1571, %v1573
        %v1575 = vadd.f32 %v1571, %v1574
        %vm1576 = vweird.f32 %v1441
        %vm1577 = vweird.f32 %v1571
        %vm1578 = vmor %vm1576, %vm1577
        %v1579 = vsel %vm1578, %v1571, %v1575
        %v1580 = vand.u32 2147483647, %v1441
        %vm1581 = vcmp.eq.f32.partialorder %v1580, 8.507059e+37
        %v1582 = vand.u32 %v1441, 2147483648
        %v1583 = vor.u32 1.1754944e-38, %v1582
        %v1584 = vsel %vm1581, %v1583, %v1579
        %v1585 = vmul.f32 1.0, %v1584
        %v1586 = vrcp.pop %v1442
        %v1587 = vmul.f32 %v1442, %v1586
        %v1588 = vsub.f32 1.0, %v1587
        %v1589 = vmul.f32 %v1586, %v1588
        %v1590 = vadd.f32 %v1586, %v1589
        %vm1591 = vweird.f32 %v1442
        %vm1592 = vweird.f32 %v1586
        %vm1593 = vmor %vm1591, %vm1592
        %v1594 = vsel %vm1593, %v1586, %v1590
        %v1595 = vand.u32 2147483647, %v1442
        %vm1596 = vcmp.eq.f32.partialorder %v1595, 8.507059e+37
        %v1597 = vand.u32 %v1442, 2147483648
        %v1598 = vor.u32 1.1754944e-38, %v1597
        %v1599 = vsel %vm1596, %v1598, %v1594
        %v1600 = vmul.f32 1.0, %v1599
        %v1601 = vrcp.pop %v1443
        %v1602 = vmul.f32 %v1443, %v1601
        %v1603 = vsub.f32 1.0, %v1602
        %v1604 = vmul.f32 %v1601, %v1603
        %v1605 = vadd.f32 %v1601, %v1604
        %vm1606 = vweird.f32 %v1443
        %vm1607 = vweird.f32 %v1601
        %vm1608 = vmor %vm1606, %vm1607
        %v1609 = vsel %vm1608, %v1601, %v1605
        %v1610 = vand.u32 2147483647, %v1443
        %vm1611 = vcmp.eq.f32.partialorder %v1610, 8.507059e+37
        %v1612 = vand.u32 %v1443, 2147483648
        %v1613 = vor.u32 1.1754944e-38, %v1612
        %v1614 = vsel %vm1611, %v1613, %v1609
        %v1615 = vmul.f32 1.0, %v1614
        %v1616 = vrcp.pop %v1444
        %v1617 = vmul.f32 %v1444, %v1616
        %v1618 = vsub.f32 1.0, %v1617
        %v1619 = vmul.f32 %v1616, %v1618
        %v1620 = vadd.f32 %v1616, %v1619
        %vm1621 = vweird.f32 %v1444
        %vm1622 = vweird.f32 %v1616
        %vm1623 = vmor %vm1621, %vm1622
        %v1624 = vsel %vm1623, %v1616, %v1620
        %v1625 = vand.u32 2147483647, %v1444
        %vm1626 = vcmp.eq.f32.partialorder %v1625, 8.507059e+37
        %v1627 = vand.u32 %v1444, 2147483648
        %v1628 = vor.u32 1.1754944e-38, %v1627
        %v1629 = vsel %vm1626, %v1628, %v1624
        %v1630 = vmul.f32 1.0, %v1629
        %v1631 = vrcp.pop %v1445
        %v1632 = vmul.f32 %v1445, %v1631
        %v1633 = vsub.f32 1.0, %v1632
        %v1634 = vmul.f32 %v1631, %v1633
        %v1635 = vadd.f32 %v1631, %v1634
        %vm1636 = vweird.f32 %v1445
        %vm1637 = vweird.f32 %v1631
        %vm1638 = vmor %vm1636, %vm1637
        %v1639 = vsel %vm1638, %v1631, %v1635
        %v1640 = vand.u32 2147483647, %v1445
        %vm1641 = vcmp.eq.f32.partialorder %v1640, 8.507059e+37
        %v1642 = vand.u32 %v1445, 2147483648
        %v1643 = vor.u32 1.1754944e-38, %v1642
        %v1644 = vsel %vm1641, %v1643, %v1639
        %v1645 = vmul.f32 1.0, %v1644
        %v1646 = vrcp.pop %v1446
        %v1647 = vmul.f32 %v1446, %v1646
        %v1648 = vsub.f32 1.0, %v1647
        %v1649 = vmul.f32 %v1646, %v1648
        %v1650 = vadd.f32 %v1646, %v1649
        %vm1651 = vweird.f32 %v1446
        %vm1652 = vweird.f32 %v1646
        %vm1653 = vmor %vm1651, %vm1652
        %v1654 = vsel %vm1653, %v1646, %v1650
        %v1655 = vand.u32 2147483647, %v1446
        %vm1656 = vcmp.eq.f32.partialorder %v1655, 8.507059e+37
        %v1657 = vand.u32 %v1446, 2147483648
        %v1658 = vor.u32 1.1754944e-38, %v1657
        %v1659 = vsel %vm1656, %v1658, %v1654
        %v1660 = vmul.f32 1.0, %v1659
        %v1661 = vrcp.pop %v1447
        %v1662 = vmul.f32 %v1447, %v1661
        %v1663 = vsub.f32 1.0, %v1662
        %v1664 = vmul.f32 %v1661, %v1663
        %v1665 = vadd.f32 %v1661, %v1664
        %vm1666 = vweird.f32 %v1447
        %vm1667 = vweird.f32 %v1661
        %vm1668 = vmor %vm1666, %vm1667
        %v1669 = vsel %vm1668, %v1661, %v1665
        %v1670 = vand.u32 2147483647, %v1447
        %vm1671 = vcmp.eq.f32.partialorder %v1670, 8.507059e+37
        %v1672 = vand.u32 %v1447, 2147483648
        %v1673 = vor.u32 1.1754944e-38, %v1672
        %v1674 = vsel %vm1671, %v1673, %v1669
        %v1675 = vmul.f32 1.0, %v1674
        %v1676 = vrcp.pop %v1448
        %v1677 = vmul.f32 %v1448, %v1676
        %v1678 = vsub.f32 1.0, %v1677
        %v1679 = vmul.f32 %v1676, %v1678
        %v1680 = vadd.f32 %v1676, %v1679
        %vm1681 = vweird.f32 %v1448
        %vm1682 = vweird.f32 %v1676
        %vm1683 = vmor %vm1681, %vm1682
        %v1684 = vsel %vm1683, %v1676, %v1680
        %v1685 = vand.u32 2147483647, %v1448
        %vm1686 = vcmp.eq.f32.partialorder %v1685, 8.507059e+37
        %v1687 = vand.u32 %v1448, 2147483648
        %v1688 = vor.u32 1.1754944e-38, %v1687
        %v1689 = vsel %vm1686, %v1688, %v1684
        %v1690 = vmul.f32 1.0, %v1689
        %v1691 = vrcp.pop %v1449
        %v1692 = vmul.f32 %v1449, %v1691
        %v1693 = vsub.f32 1.0, %v1692
        %v1694 = vmul.f32 %v1691, %v1693
        %v1695 = vadd.f32 %v1691, %v1694
        %vm1696 = vweird.f32 %v1449
        %vm1697 = vweird.f32 %v1691
        %vm1698 = vmor %vm1696, %vm1697
        %v1699 = vsel %vm1698, %v1691, %v1695
        %v1700 = vand.u32 2147483647, %v1449
        %vm1701 = vcmp.eq.f32.partialorder %v1700, 8.507059e+37
        %v1702 = vand.u32 %v1449, 2147483648
        %v1703 = vor.u32 1.1754944e-38, %v1702
        %v1704 = vsel %vm1701, %v1703, %v1699
        %v1705 = vmul.f32 1.0, %v1704
        %v1706 = vrcp.pop %v1450
        %v1707 = vmul.f32 %v1450, %v1706
        %v1708 = vsub.f32 1.0, %v1707
        %v1709 = vmul.f32 %v1706, %v1708
        %v1710 = vadd.f32 %v1706, %v1709
        %vm1711 = vweird.f32 %v1450
        %vm1712 = vweird.f32 %v1706
        %vm1713 = vmor %vm1711, %vm1712
        %v1714 = vsel %vm1713, %v1706, %v1710
        %v1715 = vand.u32 2147483647, %v1450
        %vm1716 = vcmp.eq.f32.partialorder %v1715, 8.507059e+37
        %v1717 = vand.u32 %v1450, 2147483648
        %v1718 = vor.u32 1.1754944e-38, %v1717
        %v1719 = vsel %vm1716, %v1718, %v1714
        %v1720 = vmul.f32 1.0, %v1719
        %v1721 = vrcp.pop %v1451
        %v1722 = vmul.f32 %v1451, %v1721
        %v1723 = vsub.f32 1.0, %v1722
        %v1724 = vmul.f32 %v1721, %v1723
        %v1725 = vadd.f32 %v1721, %v1724
        %vm1726 = vweird.f32 %v1451
        %vm1727 = vweird.f32 %v1721
        %vm1728 = vmor %vm1726, %vm1727
        %v1729 = vsel %vm1728, %v1721, %v1725
        %v1730 = vand.u32 2147483647, %v1451
        %vm1731 = vcmp.eq.f32.partialorder %v1730, 8.507059e+37
        %v1732 = vand.u32 %v1451, 2147483648
        %v1733 = vor.u32 1.1754944e-38, %v1732
        %v1734 = vsel %vm1731, %v1733, %v1729
        %v1735 = vmul.f32 1.0, %v1734
        %v1736 = vrcp.pop %v1452
        %v1737 = vmul.f32 %v1452, %v1736
        %v1738 = vsub.f32 1.0, %v1737
        %v1739 = vmul.f32 %v1736, %v1738
        %v1740 = vadd.f32 %v1736, %v1739
        %vm1741 = vweird.f32 %v1452
        %vm1742 = vweird.f32 %v1736
        %vm1743 = vmor %vm1741, %vm1742
        %v1744 = vsel %vm1743, %v1736, %v1740
        %v1745 = vand.u32 2147483647, %v1452
        %vm1746 = vcmp.eq.f32.partialorder %v1745, 8.507059e+37
        %v1747 = vand.u32 %v1452, 2147483648
        %v1748 = vor.u32 1.1754944e-38, %v1747
        %v1749 = vsel %vm1746, %v1748, %v1744
        %v1750 = vmul.f32 1.0, %v1749
        %v1751 = vrcp.pop %v1453
        %v1752 = vmul.f32 %v1453, %v1751
        %v1753 = vsub.f32 1.0, %v1752
        %v1754 = vmul.f32 %v1751, %v1753
        %v1755 = vadd.f32 %v1751, %v1754
        %vm1756 = vweird.f32 %v1453
        %vm1757 = vweird.f32 %v1751
        %vm1758 = vmor %vm1756, %vm1757
        %v1759 = vsel %vm1758, %v1751, %v1755
        %v1760 = vand.u32 2147483647, %v1453
        %vm1761 = vcmp.eq.f32.partialorder %v1760, 8.507059e+37
        %v1762 = vand.u32 %v1453, 2147483648
        %v1763 = vor.u32 1.1754944e-38, %v1762
        %v1764 = vsel %vm1761, %v1763, %v1759
        %v1765 = vmul.f32 1.0, %v1764
        %v1766 = vrcp.pop %v1454
        %v1767 = vmul.f32 %v1454, %v1766
        %v1768 = vsub.f32 1.0, %v1767
        %v1769 = vmul.f32 %v1766, %v1768
        %v1770 = vadd.f32 %v1766, %v1769
        %vm1771 = vweird.f32 %v1454
        %vm1772 = vweird.f32 %v1766
        %vm1773 = vmor %vm1771, %vm1772
        %v1774 = vsel %vm1773, %v1766, %v1770
        %v1775 = vand.u32 2147483647, %v1454
        %vm1776 = vcmp.eq.f32.partialorder %v1775, 8.507059e+37
        %v1777 = vand.u32 %v1454, 2147483648
        %v1778 = vor.u32 1.1754944e-38, %v1777
        %v1779 = vsel %vm1776, %v1778, %v1774
        %v1780 = vmul.f32 1.0, %v1779
        %v1781 = vrcp.pop %v1455
        %v1782 = vmul.f32 %v1455, %v1781
        %v1783 = vsub.f32 1.0, %v1782
        %v1784 = vmul.f32 %v1781, %v1783
        %v1785 = vadd.f32 %v1781, %v1784
        %vm1786 = vweird.f32 %v1455
        %vm1787 = vweird.f32 %v1781
        %vm1788 = vmor %vm1786, %vm1787
        %v1789 = vsel %vm1788, %v1781, %v1785
        %v1790 = vand.u32 2147483647, %v1455
        %vm1791 = vcmp.eq.f32.partialorder %v1790, 8.507059e+37
        %v1792 = vand.u32 %v1455, 2147483648
        %v1793 = vor.u32 1.1754944e-38, %v1792
        %v1794 = vsel %vm1791, %v1793, %v1789
        %v1795 = vmul.f32 1.0, %v1794
        %v1796 = vrcp.pop %v1456
        %v1797 = vmul.f32 %v1456, %v1796
        %v1798 = vsub.f32 1.0, %v1797
        %v1799 = vmul.f32 %v1796, %v1798
        %v1800 = vadd.f32 %v1796, %v1799
        %vm1801 = vweird.f32 %v1456
        %vm1802 = vweird.f32 %v1796
        %vm1803 = vmor %vm1801, %vm1802
        %v1804 = vsel %vm1803, %v1796, %v1800
        %v1805 = vand.u32 2147483647, %v1456
        %vm1806 = vcmp.eq.f32.partialorder %v1805, 8.507059e+37
        %v1807 = vand.u32 %v1456, 2147483648
        %v1808 = vor.u32 1.1754944e-38, %v1807
        %v1809 = vsel %vm1806, %v1808, %v1804
        %v1810 = vmul.f32 1.0, %v1809
        %v1811 = vrcp.pop %v1457
        %v1812 = vmul.f32 %v1457, %v1811
        %v1813 = vsub.f32 1.0, %v1812
        %v1814 = vmul.f32 %v1811, %v1813
        %v1815 = vadd.f32 %v1811, %v1814
        %vm1816 = vweird.f32 %v1457
        %vm1817 = vweird.f32 %v1811
        %vm1818 = vmor %vm1816, %vm1817
        %v1819 = vsel %vm1818, %v1811, %v1815
        %v1820 = vand.u32 2147483647, %v1457
        %vm1821 = vcmp.eq.f32.partialorder %v1820, 8.507059e+37
        %v1822 = vand.u32 %v1457, 2147483648
        %v1823 = vor.u32 1.1754944e-38, %v1822
        %v1824 = vsel %vm1821, %v1823, %v1819
        %v1825 = vmul.f32 1.0, %v1824
        %v1826 = vrcp.pop %v1458
        %v1827 = vmul.f32 %v1458, %v1826
        %v1828 = vsub.f32 1.0, %v1827
        %v1829 = vmul.f32 %v1826, %v1828
        %v1830 = vadd.f32 %v1826, %v1829
        %vm1831 = vweird.f32 %v1458
        %vm1832 = vweird.f32 %v1826
        %vm1833 = vmor %vm1831, %vm1832
        %v1834 = vsel %vm1833, %v1826, %v1830
        %v1835 = vand.u32 2147483647, %v1458
        %vm1836 = vcmp.eq.f32.partialorder %v1835, 8.507059e+37
        %v1837 = vand.u32 %v1458, 2147483648
        %v1838 = vor.u32 1.1754944e-38, %v1837
        %v1839 = vsel %vm1836, %v1838, %v1834
        %v1840 = vmul.f32 1.0, %v1839
        %v1841 = vrcp.pop %v1459
        %v1842 = vmul.f32 %v1459, %v1841
        %v1843 = vsub.f32 1.0, %v1842
        %v1844 = vmul.f32 %v1841, %v1843
        %v1845 = vadd.f32 %v1841, %v1844
        %vm1846 = vweird.f32 %v1459
        %vm1847 = vweird.f32 %v1841
        %vm1848 = vmor %vm1846, %vm1847
        %v1849 = vsel %vm1848, %v1841, %v1845
        %v1850 = vand.u32 2147483647, %v1459
        %vm1851 = vcmp.eq.f32.partialorder %v1850, 8.507059e+37
        %v1852 = vand.u32 %v1459, 2147483648
        %v1853 = vor.u32 1.1754944e-38, %v1852
        %v1854 = vsel %vm1851, %v1853, %v1849
        %v1855 = vmul.f32 1.0, %v1854
        %v1856 = vrcp.pop %v1460
        %v1857 = vmul.f32 %v1460, %v1856
        %v1858 = vsub.f32 1.0, %v1857
        %v1859 = vmul.f32 %v1856, %v1858
        %v1860 = vadd.f32 %v1856, %v1859
        %vm1861 = vweird.f32 %v1460
        %vm1862 = vweird.f32 %v1856
        %vm1863 = vmor %vm1861, %vm1862
        %v1864 = vsel %vm1863, %v1856, %v1860
        %v1865 = vand.u32 2147483647, %v1460
        %vm1866 = vcmp.eq.f32.partialorder %v1865, 8.507059e+37
        %v1867 = vand.u32 %v1460, 2147483648
        %v1868 = vor.u32 1.1754944e-38, %v1867
        %v1869 = vsel %vm1866, %v1868, %v1864
        %v1870 = vmul.f32 1.0, %v1869
        %v1871 = vrcp.pop %v1461
        %v1872 = vmul.f32 %v1461, %v1871
        %v1873 = vsub.f32 1.0, %v1872
        %v1874 = vmul.f32 %v1871, %v1873
        %v1875 = vadd.f32 %v1871, %v1874
        %vm1876 = vweird.f32 %v1461
        %vm1877 = vweird.f32 %v1871
        %vm1878 = vmor %vm1876, %vm1877
        %v1879 = vsel %vm1878, %v1871, %v1875
        %v1880 = vand.u32 2147483647, %v1461
        %vm1881 = vcmp.eq.f32.partialorder %v1880, 8.507059e+37
        %v1882 = vand.u32 %v1461, 2147483648
        %v1883 = vor.u32 1.1754944e-38, %v1882
        %v1884 = vsel %vm1881, %v1883, %v1879
        %v1885 = vmul.f32 1.0, %v1884
        %v1886 = vrcp.pop %v1462
        %v1887 = vmul.f32 %v1462, %v1886
        %v1888 = vsub.f32 1.0, %v1887
        %v1889 = vmul.f32 %v1886, %v1888
        %v1890 = vadd.f32 %v1886, %v1889
        %vm1891 = vweird.f32 %v1462
        %vm1892 = vweird.f32 %v1886
        %vm1893 = vmor %vm1891, %vm1892
        %v1894 = vsel %vm1893, %v1886, %v1890
        %v1895 = vand.u32 2147483647, %v1462
        %vm1896 = vcmp.eq.f32.partialorder %v1895, 8.507059e+37
        %v1897 = vand.u32 %v1462, 2147483648
        %v1898 = vor.u32 1.1754944e-38, %v1897
        %v1899 = vsel %vm1896, %v1898, %v1894
        %v1900 = vmul.f32 1.0, %v1899
        %v1901 = vrcp.pop %v1463
        %v1902 = vmul.f32 %v1463, %v1901
        %v1903 = vsub.f32 1.0, %v1902
        %v1904 = vmul.f32 %v1901, %v1903
        %v1905 = vadd.f32 %v1901, %v1904
        %vm1906 = vweird.f32 %v1463
        %vm1907 = vweird.f32 %v1901
        %vm1908 = vmor %vm1906, %vm1907
        %v1909 = vsel %vm1908, %v1901, %v1905
        %v1910 = vand.u32 2147483647, %v1463
        %vm1911 = vcmp.eq.f32.partialorder %v1910, 8.507059e+37
        %v1912 = vand.u32 %v1463, 2147483648
        %v1913 = vor.u32 1.1754944e-38, %v1912
        %v1914 = vsel %vm1911, %v1913, %v1909
        %v1915 = vmul.f32 1.0, %v1914
        %v1916 = vrcp.pop %v1464
        %v1917 = vmul.f32 %v1464, %v1916
        %v1918 = vsub.f32 1.0, %v1917
        %v1919 = vmul.f32 %v1916, %v1918
        %v1920 = vadd.f32 %v1916, %v1919
        %vm1921 = vweird.f32 %v1464
        %vm1922 = vweird.f32 %v1916
        %vm1923 = vmor %vm1921, %vm1922
        %v1924 = vsel %vm1923, %v1916, %v1920
        %v1925 = vand.u32 2147483647, %v1464
        %vm1926 = vcmp.eq.f32.partialorder %v1925, 8.507059e+37
        %v1927 = vand.u32 %v1464, 2147483648
        %v1928 = vor.u32 1.1754944e-38, %v1927
        %v1929 = vsel %vm1926, %v1928, %v1924
        %v1930 = vmul.f32 1.0, %v1929
        %v1931 = vrcp.pop %v1465
        %v1932 = vmul.f32 %v1465, %v1931
        %v1933 = vsub.f32 1.0, %v1932
        %v1934 = vmul.f32 %v1931, %v1933
        %v1935 = vadd.f32 %v1931, %v1934
        %vm1936 = vweird.f32 %v1465
        %vm1937 = vweird.f32 %v1931
        %vm1938 = vmor %vm1936, %vm1937
        %v1939 = vsel %vm1938, %v1931, %v1935
        %v1940 = vand.u32 2147483647, %v1465
        %vm1941 = vcmp.eq.f32.partialorder %v1940, 8.507059e+37
        %v1942 = vand.u32 %v1465, 2147483648
        %v1943 = vor.u32 1.1754944e-38, %v1942
        %v1944 = vsel %vm1941, %v1943, %v1939
        %v1945 = vmul.f32 1.0, %v1944
        %v1946 = vld [vmem:[#allocation5 + $0x90] sm:$0xf]
        %v1947 = vld [vmem:[#allocation5 + $0x94] sm:$0xf]
        %v1948 = vld [vmem:[#allocation5 + $0x98] sm:$0xf]
        %v1949 = vld [vmem:[#allocation5 + $0x9c] sm:$0xf]
        %v1950 = vld [vmem:[#allocation5 + $0xa0] sm:$0xf]
        %v1951 = vld [vmem:[#allocation5 + $0xa4] sm:$0xf]
        %v1952 = vld [vmem:[#allocation5 + $0xa8] sm:$0xf]
        %v1953 = vld [vmem:[#allocation5 + $0xac] sm:$0xf]
        %v1954 = vld [vmem:[#allocation5 + $0xb0] sm:$0xf]
        %v1955 = vld [vmem:[#allocation5 + $0xb4] sm:$0xf]
        %v1956 = vld [vmem:[#allocation5 + $0xb8] sm:$0xf]
        %v1957 = vld [vmem:[#allocation5 + $0xbc] sm:$0xf]
        %v1958 = vld [vmem:[#allocation5 + $0xc0] sm:$0xf]
        %v1959 = vld [vmem:[#allocation5 + $0xc4] sm:$0xf]
        %v1960 = vld [vmem:[#allocation5 + $0xc8] sm:$0xf]
        %v1961 = vld [vmem:[#allocation5 + $0xcc] sm:$0xf]
        %v1962 = vld [vmem:[#allocation5 + $0xd0] sm:$0x1]
        %v1963 = vunpack.c.l.bf16 %v1962
        %v1964 = vperm.slane %v1963, 0
        %v1981 = vunpack.c.l.b16 %v1946
        %v1982 = vunpack.c.l.b16 %v1947
        %v1983 = vunpack.c.l.b16 %v1948
        %v1984 = vunpack.c.l.b16 %v1949
        %v1985 = vunpack.c.l.b16 %v1950
        %v1986 = vunpack.c.l.b16 %v1951
        %v1987 = vunpack.c.l.b16 %v1952
        %v1988 = vunpack.c.l.b16 %v1953
        %v1989 = vunpack.c.l.b16 %v1954
        %v1990 = vunpack.c.l.b16 %v1955
        %v1991 = vunpack.c.l.b16 %v1956
        %v1992 = vunpack.c.l.b16 %v1957
        %v1993 = vunpack.c.l.b16 %v1958
        %v1994 = vunpack.c.l.b16 %v1959
        %v1995 = vunpack.c.l.b16 %v1960
        %v1996 = vunpack.c.l.b16 %v1961
        %v1997 = vpack.c.b16 %v1982, %v1981
        %v1998 = vpack.c.b16 %v1984, %v1983
        %v1999 = vpack.c.b16 %v1986, %v1985
        %v2000 = vpack.c.b16 %v1988, %v1987
        %v2001 = vpack.c.b16 %v1990, %v1989
        %v2002 = vpack.c.b16 %v1992, %v1991
        %v2003 = vpack.c.b16 %v1994, %v1993
        %v2004 = vpack.c.b16 %v1996, %v1995
        %2013 = vmatpush.bf16.msra.mxu0 %v2004
        %2014 = vmatpush.bf16.msra.mxu0 %v2003
        %2015 = vmatpush.bf16.msra.mxu0 %v2002
        %2016 = vmatpush.bf16.msra.mxu0 %v2001
        %2017 = vmatpush.bf16.msra.mxu0 %v2000
        %2018 = vmatpush.bf16.msra.mxu0 %v1999
        %2019 = vmatpush.bf16.msra.mxu0 %v1998
        %2020 = vmatpush.bf16.msra.mxu0 %v1997
        %2021 = vmatmul.bf16.gmra.mxu0 %v418
        %v2022 = vpop.f32.mrf.mxu0
        %v2023 = vadd.f32 %v1964, %v2022
        %v2024 = vpop.f32.mrf.mxu0
        %v2025 = vadd.f32 %v1964, %v2024
        %2026 = vmatmul.bf16.gmra.mxu0 %v419
        %v2027 = vpop.f32.mrf.mxu0
        %v2028 = vadd.f32 %v1964, %v2027
        %v2029 = vpop.f32.mrf.mxu0
        %v2030 = vadd.f32 %v1964, %v2029
        %2031 = vmatmul.bf16.gmra.mxu0 %v420
        %v2032 = vpop.f32.mrf.mxu0
        %v2033 = vadd.f32 %v1964, %v2032
        %v2034 = vpop.f32.mrf.mxu0
        %v2035 = vadd.f32 %v1964, %v2034
        %2036 = vmatmul.bf16.gmra.mxu0 %v421
        %v2037 = vpop.f32.mrf.mxu0
        %v2038 = vadd.f32 %v1964, %v2037
        %v2039 = vpop.f32.mrf.mxu0
        %v2040 = vadd.f32 %v1964, %v2039
        %2041 = vmatmul.bf16.gmra.mxu0 %v422
        %v2042 = vpop.f32.mrf.mxu0
        %v2043 = vadd.f32 %v1964, %v2042
        %v2044 = vpop.f32.mrf.mxu0
        %v2045 = vadd.f32 %v1964, %v2044
        %2046 = vmatmul.bf16.gmra.mxu0 %v423
        %v2047 = vpop.f32.mrf.mxu0
        %v2048 = vadd.f32 %v1964, %v2047
        %v2049 = vpop.f32.mrf.mxu0
        %v2050 = vadd.f32 %v1964, %v2049
        %2051 = vmatmul.bf16.gmra.mxu0 %v424
        %v2052 = vpop.f32.mrf.mxu0
        %v2053 = vadd.f32 %v1964, %v2052
        %v2054 = vpop.f32.mrf.mxu0
        %v2055 = vadd.f32 %v1964, %v2054
        %2056 = vmatmul.bf16.gmra.mxu0 %v425
        %v2057 = vpop.f32.mrf.mxu0
        %v2058 = vadd.f32 %v1964, %v2057
        %v2059 = vpop.f32.mrf.mxu0
        %v2060 = vadd.f32 %v1964, %v2059
        %2061 = vmatmul.bf16.gmra.mxu0 %v426
        %v2062 = vpop.f32.mrf.mxu0
        %v2063 = vadd.f32 %v1964, %v2062
        %v2064 = vpop.f32.mrf.mxu0
        %v2065 = vadd.f32 %v1964, %v2064
        %2066 = vmatmul.bf16.gmra.mxu0 %v427
        %v2067 = vpop.f32.mrf.mxu0
        %v2068 = vadd.f32 %v1964, %v2067
        %v2069 = vpop.f32.mrf.mxu0
        %v2070 = vadd.f32 %v1964, %v2069
        %2071 = vmatmul.bf16.gmra.mxu0 %v428
        %v2072 = vpop.f32.mrf.mxu0
        %v2073 = vadd.f32 %v1964, %v2072
        %v2074 = vpop.f32.mrf.mxu0
        %v2075 = vadd.f32 %v1964, %v2074
        %2076 = vmatmul.bf16.gmra.mxu0 %v429
        %v2077 = vpop.f32.mrf.mxu0
        %v2078 = vadd.f32 %v1964, %v2077
        %v2079 = vpop.f32.mrf.mxu0
        %v2080 = vadd.f32 %v1964, %v2079
        %2081 = vmatmul.bf16.gmra.mxu0 %v430
        %v2082 = vpop.f32.mrf.mxu0
        %v2083 = vadd.f32 %v1964, %v2082
        %v2084 = vpop.f32.mrf.mxu0
        %v2085 = vadd.f32 %v1964, %v2084
        %2086 = vmatmul.bf16.gmra.mxu0 %v431
        %v2087 = vpop.f32.mrf.mxu0
        %v2088 = vadd.f32 %v1964, %v2087
        %v2089 = vpop.f32.mrf.mxu0
        %v2090 = vadd.f32 %v1964, %v2089
        %2091 = vmatmul.bf16.gmra.mxu0 %v432
        %v2092 = vpop.f32.mrf.mxu0
        %v2093 = vadd.f32 %v1964, %v2092
        %v2094 = vpop.f32.mrf.mxu0
        %v2095 = vadd.f32 %v1964, %v2094
        %2096 = vmatmul.bf16.gmra.mxu0 %v433
        %v2097 = vpop.f32.mrf.mxu0
        %v2098 = vadd.f32 %v1964, %v2097
        %v2099 = vpop.f32.mrf.mxu0
        %v2100 = vadd.f32 %v1964, %v2099
        %2101 = vdwg.mxu0
        %2134 = vrot.lane.b32.xlu0 %v2023, 96
        %v2135 = vpop.permute.xlu0 %2134
        %2136 = vrot.lane.b32.xlu0 %v2025, 96
        %v2137 = vpop.permute.xlu0 %2136
        %2138 = vrot.lane.b32.xlu0 %v2028, 96
        %v2139 = vpop.permute.xlu0 %2138
        %2140 = vrot.lane.b32.xlu0 %v2030, 96
        %v2141 = vpop.permute.xlu0 %2140
        %2142 = vrot.lane.b32.xlu0 %v2033, 96
        %v2143 = vpop.permute.xlu0 %2142
        %2144 = vrot.lane.b32.xlu0 %v2035, 96
        %v2145 = vpop.permute.xlu0 %2144
        %2146 = vrot.lane.b32.xlu0 %v2038, 96
        %v2147 = vpop.permute.xlu0 %2146
        %2148 = vrot.lane.b32.xlu0 %v2040, 96
        %v2149 = vpop.permute.xlu0 %2148
        %2150 = vrot.lane.b32.xlu0 %v2043, 96
        %v2151 = vpop.permute.xlu0 %2150
        %2152 = vrot.lane.b32.xlu0 %v2045, 96
        %v2153 = vpop.permute.xlu0 %2152
        %2154 = vrot.lane.b32.xlu0 %v2048, 96
        %v2155 = vpop.permute.xlu0 %2154
        %2156 = vrot.lane.b32.xlu0 %v2050, 96
        %v2157 = vpop.permute.xlu0 %2156
        %2158 = vrot.lane.b32.xlu0 %v2053, 96
        %v2159 = vpop.permute.xlu0 %2158
        %2160 = vrot.lane.b32.xlu0 %v2055, 96
        %v2161 = vpop.permute.xlu0 %2160
        %2162 = vrot.lane.b32.xlu0 %v2058, 96
        %v2163 = vpop.permute.xlu0 %2162
        %2164 = vrot.lane.b32.xlu0 %v2060, 96
        %v2165 = vpop.permute.xlu0 %2164
        %2166 = vrot.lane.b32.xlu0 %v2063, 96
        %v2167 = vpop.permute.xlu0 %2166
        %2168 = vrot.lane.b32.xlu0 %v2065, 96
        %v2169 = vpop.permute.xlu0 %2168
        %2170 = vrot.lane.b32.xlu0 %v2068, 96
        %v2171 = vpop.permute.xlu0 %2170
        %2172 = vrot.lane.b32.xlu0 %v2070, 96
        %v2173 = vpop.permute.xlu0 %2172
        %2174 = vrot.lane.b32.xlu0 %v2073, 96
        %v2175 = vpop.permute.xlu0 %2174
        %2176 = vrot.lane.b32.xlu0 %v2075, 96
        %v2177 = vpop.permute.xlu0 %2176
        %2178 = vrot.lane.b32.xlu0 %v2078, 96
        %v2179 = vpop.permute.xlu0 %2178
        %2180 = vrot.lane.b32.xlu0 %v2080, 96
        %v2181 = vpop.permute.xlu0 %2180
        %2182 = vrot.lane.b32.xlu0 %v2083, 96
        %v2183 = vpop.permute.xlu0 %2182
        %2184 = vrot.lane.b32.xlu0 %v2085, 96
        %v2185 = vpop.permute.xlu0 %2184
        %2186 = vrot.lane.b32.xlu0 %v2088, 96
        %v2187 = vpop.permute.xlu0 %2186
        %2188 = vrot.lane.b32.xlu0 %v2090, 96
        %v2189 = vpop.permute.xlu0 %2188
        %2190 = vrot.lane.b32.xlu0 %v2093, 96
        %v2191 = vpop.permute.xlu0 %2190
        %2192 = vrot.lane.b32.xlu0 %v2095, 96
        %v2193 = vpop.permute.xlu0 %2192
        %2194 = vrot.lane.b32.xlu0 %v2098, 96
        %v2195 = vpop.permute.xlu0 %2194
        %2196 = vrot.lane.b32.xlu0 %v2100, 96
        %v2197 = vpop.permute.xlu0 %2196
        %v2230 = vmul.f32 %v716, %v2135
        %v2231 = vmul.f32 %v731, %v2137
        %v2232 = vmul.f32 %v746, %v2139
        %v2233 = vmul.f32 %v761, %v2141
        %v2234 = vmul.f32 %v776, %v2143
        %v2235 = vmul.f32 %v791, %v2145
        %v2236 = vmul.f32 %v806, %v2147
        %v2237 = vmul.f32 %v821, %v2149
        %v2238 = vmul.f32 %v836, %v2151
        %v2239 = vmul.f32 %v851, %v2153
        %v2240 = vmul.f32 %v866, %v2155
        %v2241 = vmul.f32 %v881, %v2157
        %v2242 = vmul.f32 %v896, %v2159
        %v2243 = vmul.f32 %v911, %v2161
        %v2244 = vmul.f32 %v926, %v2163
        %v2245 = vmul.f32 %v941, %v2165
        %v2246 = vmul.f32 %v956, %v2167
        %v2247 = vmul.f32 %v971, %v2169
        %v2248 = vmul.f32 %v986, %v2171
        %v2249 = vmul.f32 %v1001, %v2173
        %v2250 = vmul.f32 %v1016, %v2175
        %v2251 = vmul.f32 %v1031, %v2177
        %v2252 = vmul.f32 %v1046, %v2179
        %v2253 = vmul.f32 %v1061, %v2181
        %v2254 = vmul.f32 %v1076, %v2183
        %v2255 = vmul.f32 %v1091, %v2185
        %v2256 = vmul.f32 %v1106, %v2187
        %v2257 = vmul.f32 %v1121, %v2189
        %v2258 = vmul.f32 %v1136, %v2191
        %v2259 = vmul.f32 %v1151, %v2193
        %v2260 = vmul.f32 %v1166, %v2195
        %v2261 = vmul.f32 %v1181, %v2197
        %v2262 = vadd.f32 %v2023, %v2230
        %v2263 = vadd.f32 %v2025, %v2231
        %v2264 = vadd.f32 %v2028, %v2232
        %v2265 = vadd.f32 %v2030, %v2233
        %v2266 = vadd.f32 %v2033, %v2234
        %v2267 = vadd.f32 %v2035, %v2235
        %v2268 = vadd.f32 %v2038, %v2236
        %v2269 = vadd.f32 %v2040, %v2237
        %v2270 = vadd.f32 %v2043, %v2238
        %v2271 = vadd.f32 %v2045, %v2239
        %v2272 = vadd.f32 %v2048, %v2240
        %v2273 = vadd.f32 %v2050, %v2241
        %v2274 = vadd.f32 %v2053, %v2242
        %v2275 = vadd.f32 %v2055, %v2243
        %v2276 = vadd.f32 %v2058, %v2244
        %v2277 = vadd.f32 %v2060, %v2245
        %v2278 = vadd.f32 %v2063, %v2246
        %v2279 = vadd.f32 %v2065, %v2247
        %v2280 = vadd.f32 %v2068, %v2248
        %v2281 = vadd.f32 %v2070, %v2249
        %v2282 = vadd.f32 %v2073, %v2250
        %v2283 = vadd.f32 %v2075, %v2251
        %v2284 = vadd.f32 %v2078, %v2252
        %v2285 = vadd.f32 %v2080, %v2253
        %v2286 = vadd.f32 %v2083, %v2254
        %v2287 = vadd.f32 %v2085, %v2255
        %v2288 = vadd.f32 %v2088, %v2256
        %v2289 = vadd.f32 %v2090, %v2257
        %v2290 = vadd.f32 %v2093, %v2258
        %v2291 = vadd.f32 %v2095, %v2259
        %v2292 = vadd.f32 %v2098, %v2260
        %v2293 = vadd.f32 %v2100, %v2261
        %v2294 = vtanh.pop %v2262
        %v2295 = vtanh.pop %v2263
        %v2296 = vtanh.pop %v2264
        %v2297 = vtanh.pop %v2265
        %v2298 = vtanh.pop %v2266
        %v2299 = vtanh.pop %v2267
        %v2300 = vtanh.pop %v2268
        %v2301 = vtanh.pop %v2269
        %v2302 = vtanh.pop %v2270
        %v2303 = vtanh.pop %v2271
        %v2304 = vtanh.pop %v2272
        %v2305 = vtanh.pop %v2273
        %v2306 = vtanh.pop %v2274
        %v2307 = vtanh.pop %v2275
        %v2308 = vtanh.pop %v2276
        %v2309 = vtanh.pop %v2277
        %v2310 = vtanh.pop %v2278
        %v2311 = vtanh.pop %v2279
        %v2312 = vtanh.pop %v2280
        %v2313 = vtanh.pop %v2281
        %v2314 = vtanh.pop %v2282
        %v2315 = vtanh.pop %v2283
        %v2316 = vtanh.pop %v2284
        %v2317 = vtanh.pop %v2285
        %v2318 = vtanh.pop %v2286
        %v2319 = vtanh.pop %v2287
        %v2320 = vtanh.pop %v2288
        %v2321 = vtanh.pop %v2289
        %v2322 = vtanh.pop %v2290
        %v2323 = vtanh.pop %v2291
        %v2324 = vtanh.pop %v2292
        %v2325 = vtanh.pop %v2293
        %v2326 = vsub.f32 1.0, %v1480
        %v2327 = vsub.f32 1.0, %v1495
        %v2328 = vsub.f32 1.0, %v1510
        %v2329 = vsub.f32 1.0, %v1525
        %v2330 = vsub.f32 1.0, %v1540
        %v2331 = vsub.f32 1.0, %v1555
        %v2332 = vsub.f32 1.0, %v1570
        %v2333 = vsub.f32 1.0, %v1585
        %v2334 = vsub.f32 1.0, %v1600
        %v2335 = vsub.f32 1.0, %v1615
        %v2336 = vsub.f32 1.0, %v1630
        %v2337 = vsub.f32 1.0, %v1645
        %v2338 = vsub.f32 1.0, %v1660
        %v2339 = vsub.f32 1.0, %v1675
        %v2340 = vsub.f32 1.0, %v1690
        %v2341 = vsub.f32 1.0, %v1705
        %v2342 = vsub.f32 1.0, %v1720
        %v2343 = vsub.f32 1.0, %v1735
        %v2344 = vsub.f32 1.0, %v1750
        %v2345 = vsub.f32 1.0, %v1765
        %v2346 = vsub.f32 1.0, %v1780
        %v2347 = vsub.f32 1.0, %v1795
        %v2348 = vsub.f32 1.0, %v1810
        %v2349 = vsub.f32 1.0, %v1825
        %v2350 = vsub.f32 1.0, %v1840
        %v2351 = vsub.f32 1.0, %v1855
        %v2352 = vsub.f32 1.0, %v1870
        %v2353 = vsub.f32 1.0, %v1885
        %v2354 = vsub.f32 1.0, %v1900
        %v2355 = vsub.f32 1.0, %v1915
        %v2356 = vsub.f32 1.0, %v1930
        %v2357 = vsub.f32 1.0, %v1945
        %v2358 = vmul.f32 %v2326, %v2294
        %v2359 = vmul.f32 %v2327, %v2295
        %v2360 = vmul.f32 %v2328, %v2296
        %v2361 = vmul.f32 %v2329, %v2297
        %v2362 = vmul.f32 %v2330, %v2298
        %v2363 = vmul.f32 %v2331, %v2299
        %v2364 = vmul.f32 %v2332, %v2300
        %v2365 = vmul.f32 %v2333, %v2301
        %v2366 = vmul.f32 %v2334, %v2302
        %v2367 = vmul.f32 %v2335, %v2303
        %v2368 = vmul.f32 %v2336, %v2304
        %v2369 = vmul.f32 %v2337, %v2305
        %v2370 = vmul.f32 %v2338, %v2306
        %v2371 = vmul.f32 %v2339, %v2307
        %v2372 = vmul.f32 %v2340, %v2308
        %v2373 = vmul.f32 %v2341, %v2309
        %v2374 = vmul.f32 %v2342, %v2310
        %v2375 = vmul.f32 %v2343, %v2311
        %v2376 = vmul.f32 %v2344, %v2312
        %v2377 = vmul.f32 %v2345, %v2313
        %v2378 = vmul.f32 %v2346, %v2314
        %v2379 = vmul.f32 %v2347, %v2315
        %v2380 = vmul.f32 %v2348, %v2316
        %v2381 = vmul.f32 %v2349, %v2317
        %v2382 = vmul.f32 %v2350, %v2318
        %v2383 = vmul.f32 %v2351, %v2319
        %v2384 = vmul.f32 %v2352, %v2320
        %v2385 = vmul.f32 %v2353, %v2321
        %v2386 = vmul.f32 %v2354, %v2322
        %v2387 = vmul.f32 %v2355, %v2323
        %v2388 = vmul.f32 %v2356, %v2324
        %v2389 = vmul.f32 %v2357, %v2325
        %2422 = vrot.lane.b32.xlu0 %v338, 32
        %v2423 = vpop.permute.xlu0 %2422
        %2424 = vrot.lane.b32.xlu0 %v339, 32
        %v2425 = vpop.permute.xlu0 %2424
        %2426 = vrot.lane.b32.xlu0 %v340, 32
        %v2427 = vpop.permute.xlu0 %2426
        %2428 = vrot.lane.b32.xlu0 %v341, 32
        %v2429 = vpop.permute.xlu0 %2428
        %2430 = vrot.lane.b32.xlu0 %v342, 32
        %v2431 = vpop.permute.xlu0 %2430
        %2432 = vrot.lane.b32.xlu0 %v343, 32
        %v2433 = vpop.permute.xlu0 %2432
        %2434 = vrot.lane.b32.xlu0 %v344, 32
        %v2435 = vpop.permute.xlu0 %2434
        %2436 = vrot.lane.b32.xlu0 %v345, 32
        %v2437 = vpop.permute.xlu0 %2436
        %2438 = vrot.lane.b32.xlu0 %v346, 32
        %v2439 = vpop.permute.xlu0 %2438
        %2440 = vrot.lane.b32.xlu0 %v347, 32
        %v2441 = vpop.permute.xlu0 %2440
        %2442 = vrot.lane.b32.xlu0 %v348, 32
        %v2443 = vpop.permute.xlu0 %2442
        %2444 = vrot.lane.b32.xlu0 %v349, 32
        %v2445 = vpop.permute.xlu0 %2444
        %2446 = vrot.lane.b32.xlu0 %v350, 32
        %v2447 = vpop.permute.xlu0 %2446
        %2448 = vrot.lane.b32.xlu0 %v351, 32
        %v2449 = vpop.permute.xlu0 %2448
        %2450 = vrot.lane.b32.xlu0 %v352, 32
        %v2451 = vpop.permute.xlu0 %2450
        %2452 = vrot.lane.b32.xlu0 %v353, 32
        %v2453 = vpop.permute.xlu0 %2452
        %2454 = vrot.lane.b32.xlu0 %v354, 32
        %v2455 = vpop.permute.xlu0 %2454
        %2456 = vrot.lane.b32.xlu0 %v355, 32
        %v2457 = vpop.permute.xlu0 %2456
        %2458 = vrot.lane.b32.xlu0 %v356, 32
        %v2459 = vpop.permute.xlu0 %2458
        %2460 = vrot.lane.b32.xlu0 %v357, 32
        %v2461 = vpop.permute.xlu0 %2460
        %2462 = vrot.lane.b32.xlu0 %v358, 32
        %v2463 = vpop.permute.xlu0 %2462
        %2464 = vrot.lane.b32.xlu0 %v359, 32
        %v2465 = vpop.permute.xlu0 %2464
        %2466 = vrot.lane.b32.xlu0 %v360, 32
        %v2467 = vpop.permute.xlu0 %2466
        %2468 = vrot.lane.b32.xlu0 %v361, 32
        %v2469 = vpop.permute.xlu0 %2468
        %2470 = vrot.lane.b32.xlu0 %v362, 32
        %v2471 = vpop.permute.xlu0 %2470
        %2472 = vrot.lane.b32.xlu0 %v363, 32
        %v2473 = vpop.permute.xlu0 %2472
        %2474 = vrot.lane.b32.xlu0 %v364, 32
        %v2475 = vpop.permute.xlu0 %2474
        %2476 = vrot.lane.b32.xlu0 %v365, 32
        %v2477 = vpop.permute.xlu0 %2476
        %2478 = vrot.lane.b32.xlu0 %v366, 32
        %v2479 = vpop.permute.xlu0 %2478
        %2480 = vrot.lane.b32.xlu0 %v367, 32
        %v2481 = vpop.permute.xlu0 %2480
        %2482 = vrot.lane.b32.xlu0 %v368, 32
        %v2483 = vpop.permute.xlu0 %2482
        %2484 = vrot.lane.b32.xlu0 %v369, 32
        %v2485 = vpop.permute.xlu0 %2484
        %v2518 = vmul.f32 %v1480, %v2423
        %v2519 = vmul.f32 %v1495, %v2425
        %v2520 = vmul.f32 %v1510, %v2427
        %v2521 = vmul.f32 %v1525, %v2429
        %v2522 = vmul.f32 %v1540, %v2431
        %v2523 = vmul.f32 %v1555, %v2433
        %v2524 = vmul.f32 %v1570, %v2435
        %v2525 = vmul.f32 %v1585, %v2437
        %v2526 = vmul.f32 %v1600, %v2439
        %v2527 = vmul.f32 %v1615, %v2441
        %v2528 = vmul.f32 %v1630, %v2443
        %v2529 = vmul.f32 %v1645, %v2445
        %v2530 = vmul.f32 %v1660, %v2447
        %v2531 = vmul.f32 %v1675, %v2449
        %v2532 = vmul.f32 %v1690, %v2451
        %v2533 = vmul.f32 %v1705, %v2453
        %v2534 = vmul.f32 %v1720, %v2455
        %v2535 = vmul.f32 %v1735, %v2457
        %v2536 = vmul.f32 %v1750, %v2459
        %v2537 = vmul.f32 %v1765, %v2461
        %v2538 = vmul.f32 %v1780, %v2463
        %v2539 = vmul.f32 %v1795, %v2465
        %v2540 = vmul.f32 %v1810, %v2467
        %v2541 = vmul.f32 %v1825, %v2469
        %v2542 = vmul.f32 %v1840, %v2471
        %v2543 = vmul.f32 %v1855, %v2473
        %v2544 = vmul.f32 %v1870, %v2475
        %v2545 = vmul.f32 %v1885, %v2477
        %v2546 = vmul.f32 %v1900, %v2479
        %v2547 = vmul.f32 %v1915, %v2481
        %v2548 = vmul.f32 %v1930, %v2483
        %v2549 = vmul.f32 %v1945, %v2485
        %v2550 = vadd.f32 %v2358, %v2518
        %v2551 = vadd.f32 %v2359, %v2519
        %v2552 = vadd.f32 %v2360, %v2520
        %v2553 = vadd.f32 %v2361, %v2521
        %v2554 = vadd.f32 %v2362, %v2522
        %v2555 = vadd.f32 %v2363, %v2523
        %v2556 = vadd.f32 %v2364, %v2524
        %v2557 = vadd.f32 %v2365, %v2525
        %v2558 = vadd.f32 %v2366, %v2526
        %v2559 = vadd.f32 %v2367, %v2527
        %v2560 = vadd.f32 %v2368, %v2528
        %v2561 = vadd.f32 %v2369, %v2529
        %v2562 = vadd.f32 %v2370, %v2530
        %v2563 = vadd.f32 %v2371, %v2531
        %v2564 = vadd.f32 %v2372, %v2532
        %v2565 = vadd.f32 %v2373, %v2533
        %v2566 = vadd.f32 %v2374, %v2534
        %v2567 = vadd.f32 %v2375, %v2535
        %v2568 = vadd.f32 %v2376, %v2536
        %v2569 = vadd.f32 %v2377, %v2537
        %v2570 = vadd.f32 %v2378, %v2538
        %v2571 = vadd.f32 %v2379, %v2539
        %v2572 = vadd.f32 %v2380, %v2540
        %v2573 = vadd.f32 %v2381, %v2541
        %v2574 = vadd.f32 %v2382, %v2542
        %v2575 = vadd.f32 %v2383, %v2543
        %v2576 = vadd.f32 %v2384, %v2544
        %v2577 = vadd.f32 %v2385, %v2545
        %v2578 = vadd.f32 %v2386, %v2546
        %v2579 = vadd.f32 %v2387, %v2547
        %v2580 = vadd.f32 %v2388, %v2548
        %v2581 = vadd.f32 %v2389, %v2549
        %vm2582 = vcmask 261120
        %v2583 = vsel %vm2582, %v2550, 0.0
        %v2584 = vsel %vm2582, %v2551, 0.0
        %v2585 = vsel %vm2582, %v2552, 0.0
        %v2586 = vsel %vm2582, %v2553, 0.0
        %v2587 = vsel %vm2582, %v2554, 0.0
        %v2588 = vsel %vm2582, %v2555, 0.0
        %v2589 = vsel %vm2582, %v2556, 0.0
        %v2590 = vsel %vm2582, %v2557, 0.0
        %v2591 = vsel %vm2582, %v2558, 0.0
        %v2592 = vsel %vm2582, %v2559, 0.0
        %v2593 = vsel %vm2582, %v2560, 0.0
        %v2594 = vsel %vm2582, %v2561, 0.0
        %v2595 = vsel %vm2582, %v2562, 0.0
        %v2596 = vsel %vm2582, %v2563, 0.0
        %v2597 = vsel %vm2582, %v2564, 0.0
        %v2598 = vsel %vm2582, %v2565, 0.0
        %v2599 = vsel %vm2582, %v2566, 0.0
        %v2600 = vsel %vm2582, %v2567, 0.0
        %v2601 = vsel %vm2582, %v2568, 0.0
        %v2602 = vsel %vm2582, %v2569, 0.0
        %v2603 = vsel %vm2582, %v2570, 0.0
        %v2604 = vsel %vm2582, %v2571, 0.0
        %v2605 = vsel %vm2582, %v2572, 0.0
        %v2606 = vsel %vm2582, %v2573, 0.0
        %v2607 = vsel %vm2582, %v2574, 0.0
        %v2608 = vsel %vm2582, %v2575, 0.0
        %v2609 = vsel %vm2582, %v2576, 0.0
        %v2610 = vsel %vm2582, %v2577, 0.0
        %v2611 = vsel %vm2582, %v2578, 0.0
        %v2612 = vsel %vm2582, %v2579, 0.0
        %v2613 = vsel %vm2582, %v2580, 0.0
        %v2614 = vsel %vm2582, %v2581, 0.0
        %s2615 = scalar_lea.vmem %s179, 512 [#allocation2]
        %v2616 = vld [vmem:[%s2615] sm:$0xff]
        %v2617 = vld [vmem:[%s2615 + $0x8] sm:$0xff]
        %v2618 = vld [vmem:[%s2615 + $0x10] sm:$0xff]
        %v2619 = vld [vmem:[%s2615 + $0x18] sm:$0xff]
        %v2620 = vld [vmem:[%s2615 + $0x20] sm:$0xff]
        %v2621 = vld [vmem:[%s2615 + $0x28] sm:$0xff]
        %v2622 = vld [vmem:[%s2615 + $0x30] sm:$0xff]
        %v2623 = vld [vmem:[%s2615 + $0x38] sm:$0xff]
        %v2624 = vld [vmem:[%s2615 + $0x40] sm:$0xff]
        %v2625 = vld [vmem:[%s2615 + $0x48] sm:$0xff]
        %v2626 = vld [vmem:[%s2615 + $0x50] sm:$0xff]
        %v2627 = vld [vmem:[%s2615 + $0x58] sm:$0xff]
        %v2628 = vld [vmem:[%s2615 + $0x60] sm:$0xff]
        %v2629 = vld [vmem:[%s2615 + $0x68] sm:$0xff]
        %v2630 = vld [vmem:[%s2615 + $0x70] sm:$0xff]
        %v2631 = vld [vmem:[%s2615 + $0x78] sm:$0xff]
        %v2632 = vld [vmem:[%s2615 + $0x80] sm:$0xff]
        %v2633 = vld [vmem:[%s2615 + $0x88] sm:$0xff]
        %v2634 = vld [vmem:[%s2615 + $0x90] sm:$0xff]
        %v2635 = vld [vmem:[%s2615 + $0x98] sm:$0xff]
        %v2636 = vld [vmem:[%s2615 + $0xa0] sm:$0xff]
        %v2637 = vld [vmem:[%s2615 + $0xa8] sm:$0xff]
        %v2638 = vld [vmem:[%s2615 + $0xb0] sm:$0xff]
        %v2639 = vld [vmem:[%s2615 + $0xb8] sm:$0xff]
        %v2640 = vld [vmem:[%s2615 + $0xc0] sm:$0xff]
        %v2641 = vld [vmem:[%s2615 + $0xc8] sm:$0xff]
        %v2642 = vld [vmem:[%s2615 + $0xd0] sm:$0xff]
        %v2643 = vld [vmem:[%s2615 + $0xd8] sm:$0xff]
        %v2644 = vld [vmem:[%s2615 + $0xe0] sm:$0xff]
        %v2645 = vld [vmem:[%s2615 + $0xe8] sm:$0xff]
        %v2646 = vld [vmem:[%s2615 + $0xf0] sm:$0xff]
        %v2647 = vld [vmem:[%s2615 + $0xf8] sm:$0xff]
        %v2648 = vadd.f32 %v2583, %v2616
        %v2649 = vadd.f32 %v2584, %v2617
        %v2650 = vadd.f32 %v2585, %v2618
        %v2651 = vadd.f32 %v2586, %v2619
        %v2652 = vadd.f32 %v2587, %v2620
        %v2653 = vadd.f32 %v2588, %v2621
        %v2654 = vadd.f32 %v2589, %v2622
        %v2655 = vadd.f32 %v2590, %v2623
        %v2656 = vadd.f32 %v2591, %v2624
        %v2657 = vadd.f32 %v2592, %v2625
        %v2658 = vadd.f32 %v2593, %v2626
        %v2659 = vadd.f32 %v2594, %v2627
        %v2660 = vadd.f32 %v2595, %v2628
        %v2661 = vadd.f32 %v2596, %v2629
        %v2662 = vadd.f32 %v2597, %v2630
        %v2663 = vadd.f32 %v2598, %v2631
        %v2664 = vadd.f32 %v2599, %v2632
        %v2665 = vadd.f32 %v2600, %v2633
        %v2666 = vadd.f32 %v2601, %v2634
        %v2667 = vadd.f32 %v2602, %v2635
        %v2668 = vadd.f32 %v2603, %v2636
        %v2669 = vadd.f32 %v2604, %v2637
        %v2670 = vadd.f32 %v2605, %v2638
        %v2671 = vadd.f32 %v2606, %v2639
        %v2672 = vadd.f32 %v2607, %v2640
        %v2673 = vadd.f32 %v2608, %v2641
        %v2674 = vadd.f32 %v2609, %v2642
        %v2675 = vadd.f32 %v2610, %v2643
        %v2676 = vadd.f32 %v2611, %v2644
        %v2677 = vadd.f32 %v2612, %v2645
        %v2678 = vadd.f32 %v2613, %v2646
        %v2679 = vadd.f32 %v2614, %v2647
        %v2680 = vld [vmem:[#allocation5 + $0xd8] sm:$0xf]
        %v2681 = vld [vmem:[#allocation5 + $0xdc] sm:$0xf]
        %v2682 = vld [vmem:[#allocation5 + $0xe0] sm:$0xf]
        %v2683 = vld [vmem:[#allocation5 + $0xe4] sm:$0xf]
        %v2684 = vld [vmem:[#allocation5 + $0xe8] sm:$0xf]
        %v2685 = vld [vmem:[#allocation5 + $0xec] sm:$0xf]
        %v2686 = vld [vmem:[#allocation5 + $0xf0] sm:$0xf]
        %v2687 = vld [vmem:[#allocation5 + $0xf4] sm:$0xf]
        %v2688 = vld [vmem:[#allocation5 + $0xf8] sm:$0xf]
        %v2689 = vld [vmem:[#allocation5 + $0xfc] sm:$0xf]
        %v2690 = vld [vmem:[#allocation5 + $0x100] sm:$0xf]
        %v2691 = vld [vmem:[#allocation5 + $0x104] sm:$0xf]
        %v2692 = vld [vmem:[#allocation5 + $0x108] sm:$0xf]
        %v2693 = vld [vmem:[#allocation5 + $0x10c] sm:$0xf]
        %v2694 = vld [vmem:[#allocation5 + $0x110] sm:$0xf]
        %v2695 = vld [vmem:[#allocation5 + $0x114] sm:$0xf]
        %v2696 = vpack.c.bf16 %v2649, %v2648
        %v2697 = vpack.c.bf16 %v2651, %v2650
        %v2698 = vpack.c.bf16 %v2653, %v2652
        %v2699 = vpack.c.bf16 %v2655, %v2654
        %v2700 = vpack.c.bf16 %v2657, %v2656
        %v2701 = vpack.c.bf16 %v2659, %v2658
        %v2702 = vpack.c.bf16 %v2661, %v2660
        %v2703 = vpack.c.bf16 %v2663, %v2662
        %v2704 = vpack.c.bf16 %v2665, %v2664
        %v2705 = vpack.c.bf16 %v2667, %v2666
        %v2706 = vpack.c.bf16 %v2669, %v2668
        %v2707 = vpack.c.bf16 %v2671, %v2670
        %v2708 = vpack.c.bf16 %v2673, %v2672
        %v2709 = vpack.c.bf16 %v2675, %v2674
        %v2710 = vpack.c.bf16 %v2677, %v2676
        %v2711 = vpack.c.bf16 %v2679, %v2678
        %v2712 = vld [vmem:[#allocation5 + $0x118] sm:$0x1]
        %v2713 = vunpack.c.l.bf16 %v2712
        %v2714 = vperm.slane %v2713, 0
        %v2731 = vunpack.c.l.b16 %v2680
        %v2732 = vunpack.c.l.b16 %v2681
        %v2733 = vunpack.c.l.b16 %v2682
        %v2734 = vunpack.c.l.b16 %v2683
        %v2735 = vunpack.c.l.b16 %v2684
        %v2736 = vunpack.c.l.b16 %v2685
        %v2737 = vunpack.c.l.b16 %v2686
        %v2738 = vunpack.c.l.b16 %v2687
        %v2739 = vunpack.c.l.b16 %v2688
        %v2740 = vunpack.c.l.b16 %v2689
        %v2741 = vunpack.c.l.b16 %v2690
        %v2742 = vunpack.c.l.b16 %v2691
        %v2743 = vunpack.c.l.b16 %v2692
        %v2744 = vunpack.c.l.b16 %v2693
        %v2745 = vunpack.c.l.b16 %v2694
        %v2746 = vunpack.c.l.b16 %v2695
        %v2747 = vpack.c.b16 %v2732, %v2731
        %v2748 = vpack.c.b16 %v2734, %v2733
        %v2749 = vpack.c.b16 %v2736, %v2735
        %v2750 = vpack.c.b16 %v2738, %v2737
        %v2751 = vpack.c.b16 %v2740, %v2739
        %v2752 = vpack.c.b16 %v2742, %v2741
        %v2753 = vpack.c.b16 %v2744, %v2743
        %v2754 = vpack.c.b16 %v2746, %v2745
        %2763 = vmatpush.bf16.msra.mxu0 %v2754
        %2764 = vmatpush.bf16.msra.mxu0 %v2753
        %2765 = vmatpush.bf16.msra.mxu0 %v2752
        %2766 = vmatpush.bf16.msra.mxu0 %v2751
        %2767 = vmatpush.bf16.msra.mxu0 %v2750
        %2768 = vmatpush.bf16.msra.mxu0 %v2749
        %2769 = vmatpush.bf16.msra.mxu0 %v2748
        %2770 = vmatpush.bf16.msra.mxu0 %v2747
        %2771 = vmatmul.bf16.gmra.mxu0 %v2696
        %v2772 = vpop.f32.mrf.mxu0
        %v2773 = vadd.f32 %v2714, %v2772
        %v2774 = vpop.f32.mrf.mxu0
        %v2775 = vadd.f32 %v2714, %v2774
        %2776 = vmatmul.bf16.gmra.mxu0 %v2697
        %v2777 = vpop.f32.mrf.mxu0
        %v2778 = vadd.f32 %v2714, %v2777
        %v2779 = vpop.f32.mrf.mxu0
        %v2780 = vadd.f32 %v2714, %v2779
        %2781 = vmatmul.bf16.gmra.mxu0 %v2698
        %v2782 = vpop.f32.mrf.mxu0
        %v2783 = vadd.f32 %v2714, %v2782
        %v2784 = vpop.f32.mrf.mxu0
        %v2785 = vadd.f32 %v2714, %v2784
        %2786 = vmatmul.bf16.gmra.mxu0 %v2699
        %v2787 = vpop.f32.mrf.mxu0
        %v2788 = vadd.f32 %v2714, %v2787
        %v2789 = vpop.f32.mrf.mxu0
        %v2790 = vadd.f32 %v2714, %v2789
        %2791 = vmatmul.bf16.gmra.mxu0 %v2700
        %v2792 = vpop.f32.mrf.mxu0
        %v2793 = vadd.f32 %v2714, %v2792
        %v2794 = vpop.f32.mrf.mxu0
        %v2795 = vadd.f32 %v2714, %v2794
        %2796 = vmatmul.bf16.gmra.mxu0 %v2701
        %v2797 = vpop.f32.mrf.mxu0
        %v2798 = vadd.f32 %v2714, %v2797
        %v2799 = vpop.f32.mrf.mxu0
        %v2800 = vadd.f32 %v2714, %v2799
        %2801 = vmatmul.bf16.gmra.mxu0 %v2702
        %v2802 = vpop.f32.mrf.mxu0
        %v2803 = vadd.f32 %v2714, %v2802
        %v2804 = vpop.f32.mrf.mxu0
        %v2805 = vadd.f32 %v2714, %v2804
        %2806 = vmatmul.bf16.gmra.mxu0 %v2703
        %v2807 = vpop.f32.mrf.mxu0
        %v2808 = vadd.f32 %v2714, %v2807
        %v2809 = vpop.f32.mrf.mxu0
        %v2810 = vadd.f32 %v2714, %v2809
        %2811 = vmatmul.bf16.gmra.mxu0 %v2704
        %v2812 = vpop.f32.mrf.mxu0
        %v2813 = vadd.f32 %v2714, %v2812
        %v2814 = vpop.f32.mrf.mxu0
        %v2815 = vadd.f32 %v2714, %v2814
        %2816 = vmatmul.bf16.gmra.mxu0 %v2705
        %v2817 = vpop.f32.mrf.mxu0
        %v2818 = vadd.f32 %v2714, %v2817
        %v2819 = vpop.f32.mrf.mxu0
        %v2820 = vadd.f32 %v2714, %v2819
        %2821 = vmatmul.bf16.gmra.mxu0 %v2706
        %v2822 = vpop.f32.mrf.mxu0
        %v2823 = vadd.f32 %v2714, %v2822
        %v2824 = vpop.f32.mrf.mxu0
        %v2825 = vadd.f32 %v2714, %v2824
        %2826 = vmatmul.bf16.gmra.mxu0 %v2707
        %v2827 = vpop.f32.mrf.mxu0
        %v2828 = vadd.f32 %v2714, %v2827
        %v2829 = vpop.f32.mrf.mxu0
        %v2830 = vadd.f32 %v2714, %v2829
        %2831 = vmatmul.bf16.gmra.mxu0 %v2708
        %v2832 = vpop.f32.mrf.mxu0
        %v2833 = vadd.f32 %v2714, %v2832
        %v2834 = vpop.f32.mrf.mxu0
        %v2835 = vadd.f32 %v2714, %v2834
        %2836 = vmatmul.bf16.gmra.mxu0 %v2709
        %v2837 = vpop.f32.mrf.mxu0
        %v2838 = vadd.f32 %v2714, %v2837
        %v2839 = vpop.f32.mrf.mxu0
        %v2840 = vadd.f32 %v2714, %v2839
        %2841 = vmatmul.bf16.gmra.mxu0 %v2710
        %v2842 = vpop.f32.mrf.mxu0
        %v2843 = vadd.f32 %v2714, %v2842
        %v2844 = vpop.f32.mrf.mxu0
        %v2845 = vadd.f32 %v2714, %v2844
        %2846 = vmatmul.bf16.gmra.mxu0 %v2711
        %v2847 = vpop.f32.mrf.mxu0
        %v2848 = vadd.f32 %v2714, %v2847
        %v2849 = vpop.f32.mrf.mxu0
        %v2850 = vadd.f32 %v2714, %v2849
        %2851 = vdwg.mxu0
        %v2852 = vxor.u32 %v2773, 2147483648
        %v2853 = vxor.u32 %v2775, 2147483648
        %v2854 = vxor.u32 %v2778, 2147483648
        %v2855 = vxor.u32 %v2780, 2147483648
        %v2856 = vxor.u32 %v2783, 2147483648
        %v2857 = vxor.u32 %v2785, 2147483648
        %v2858 = vxor.u32 %v2788, 2147483648
        %v2859 = vxor.u32 %v2790, 2147483648
        %v2860 = vxor.u32 %v2793, 2147483648
        %v2861 = vxor.u32 %v2795, 2147483648
        %v2862 = vxor.u32 %v2798, 2147483648
        %v2863 = vxor.u32 %v2800, 2147483648
        %v2864 = vxor.u32 %v2803, 2147483648
        %v2865 = vxor.u32 %v2805, 2147483648
        %v2866 = vxor.u32 %v2808, 2147483648
        %v2867 = vxor.u32 %v2810, 2147483648
        %v2868 = vxor.u32 %v2813, 2147483648
        %v2869 = vxor.u32 %v2815, 2147483648
        %v2870 = vxor.u32 %v2818, 2147483648
        %v2871 = vxor.u32 %v2820, 2147483648
        %v2872 = vxor.u32 %v2823, 2147483648
        %v2873 = vxor.u32 %v2825, 2147483648
        %v2874 = vxor.u32 %v2828, 2147483648
        %v2875 = vxor.u32 %v2830, 2147483648
        %v2876 = vxor.u32 %v2833, 2147483648
        %v2877 = vxor.u32 %v2835, 2147483648
        %v2878 = vxor.u32 %v2838, 2147483648
        %v2879 = vxor.u32 %v2840, 2147483648
        %v2880 = vxor.u32 %v2843, 2147483648
        %v2881 = vxor.u32 %v2845, 2147483648
        %v2882 = vxor.u32 %v2848, 2147483648
        %v2883 = vxor.u32 %v2850, 2147483648
        %v2884 = vmul.f32 %v2852, 1.442695
        %v2885 = vpow.pop %v2884
        %v2886 = vmul.f32 %v2853, 1.442695
        %v2887 = vpow.pop %v2886
        %v2888 = vmul.f32 %v2854, 1.442695
        %v2889 = vpow.pop %v2888
        %v2890 = vmul.f32 %v2855, 1.442695
        %v2891 = vpow.pop %v2890
        %v2892 = vmul.f32 %v2856, 1.442695
        %v2893 = vpow.pop %v2892
        %v2894 = vmul.f32 %v2857, 1.442695
        %v2895 = vpow.pop %v2894
        %v2896 = vmul.f32 %v2858, 1.442695
        %v2897 = vpow.pop %v2896
        %v2898 = vmul.f32 %v2859, 1.442695
        %v2899 = vpow.pop %v2898
        %v2900 = vmul.f32 %v2860, 1.442695
        %v2901 = vpow.pop %v2900
        %v2902 = vmul.f32 %v2861, 1.442695
        %v2903 = vpow.pop %v2902
        %v2904 = vmul.f32 %v2862, 1.442695
        %v2905 = vpow.pop %v2904
        %v2906 = vmul.f32 %v2863, 1.442695
        %v2907 = vpow.pop %v2906
        %v2908 = vmul.f32 %v2864, 1.442695
        %v2909 = vpow.pop %v2908
        %v2910 = vmul.f32 %v2865, 1.442695
        %v2911 = vpow.pop %v2910
        %v2912 = vmul.f32 %v2866, 1.442695
        %v2913 = vpow.pop %v2912
        %v2914 = vmul.f32 %v2867, 1.442695
        %v2915 = vpow.pop %v2914
        %v2916 = vmul.f32 %v2868, 1.442695
        %v2917 = vpow.pop %v2916
        %v2918 = vmul.f32 %v2869, 1.442695
        %v2919 = vpow.pop %v2918
        %v2920 = vmul.f32 %v2870, 1.442695
        %v2921 = vpow.pop %v2920
        %v2922 = vmul.f32 %v2871, 1.442695
        %v2923 = vpow.pop %v2922
        %v2924 = vmul.f32 %v2872, 1.442695
        %v2925 = vpow.pop %v2924
        %v2926 = vmul.f32 %v2873, 1.442695
        %v2927 = vpow.pop %v2926
        %v2928 = vmul.f32 %v2874, 1.442695
        %v2929 = vpow.pop %v2928
        %v2930 = vmul.f32 %v2875, 1.442695
        %v2931 = vpow.pop %v2930
        %v2932 = vmul.f32 %v2876, 1.442695
        %v2933 = vpow.pop %v2932
        %v2934 = vmul.f32 %v2877, 1.442695
        %v2935 = vpow.pop %v2934
        %v2936 = vmul.f32 %v2878, 1.442695
        %v2937 = vpow.pop %v2936
        %v2938 = vmul.f32 %v2879, 1.442695
        %v2939 = vpow.pop %v2938
        %v2940 = vmul.f32 %v2880, 1.442695
        %v2941 = vpow.pop %v2940
        %v2942 = vmul.f32 %v2881, 1.442695
        %v2943 = vpow.pop %v2942
        %v2944 = vmul.f32 %v2882, 1.442695
        %v2945 = vpow.pop %v2944
        %v2946 = vmul.f32 %v2883, 1.442695
        %v2947 = vpow.pop %v2946
        %v2948 = vadd.f32 %v2885, 1.0
        %v2949 = vadd.f32 %v2887, 1.0
        %v2950 = vadd.f32 %v2889, 1.0
        %v2951 = vadd.f32 %v2891, 1.0
        %v2952 = vadd.f32 %v2893, 1.0
        %v2953 = vadd.f32 %v2895, 1.0
        %v2954 = vadd.f32 %v2897, 1.0
        %v2955 = vadd.f32 %v2899, 1.0
        %v2956 = vadd.f32 %v2901, 1.0
        %v2957 = vadd.f32 %v2903, 1.0
        %v2958 = vadd.f32 %v2905, 1.0
        %v2959 = vadd.f32 %v2907, 1.0
        %v2960 = vadd.f32 %v2909, 1.0
        %v2961 = vadd.f32 %v2911, 1.0
        %v2962 = vadd.f32 %v2913, 1.0
        %v2963 = vadd.f32 %v2915, 1.0
        %v2964 = vadd.f32 %v2917, 1.0
        %v2965 = vadd.f32 %v2919, 1.0
        %v2966 = vadd.f32 %v2921, 1.0
        %v2967 = vadd.f32 %v2923, 1.0
        %v2968 = vadd.f32 %v2925, 1.0
        %v2969 = vadd.f32 %v2927, 1.0
        %v2970 = vadd.f32 %v2929, 1.0
        %v2971 = vadd.f32 %v2931, 1.0
        %v2972 = vadd.f32 %v2933, 1.0
        %v2973 = vadd.f32 %v2935, 1.0
        %v2974 = vadd.f32 %v2937, 1.0
        %v2975 = vadd.f32 %v2939, 1.0
        %v2976 = vadd.f32 %v2941, 1.0
        %v2977 = vadd.f32 %v2943, 1.0
        %v2978 = vadd.f32 %v2945, 1.0
        %v2979 = vadd.f32 %v2947, 1.0
        %v2980 = vrcp.pop %v2948
        %v2981 = vmul.f32 %v2948, %v2980
        %v2982 = vsub.f32 1.0, %v2981
        %v2983 = vmul.f32 %v2980, %v2982
        %v2984 = vadd.f32 %v2980, %v2983
        %vm2985 = vweird.f32 %v2948
        %vm2986 = vweird.f32 %v2980
        %vm2987 = vmor %vm2985, %vm2986
        %v2988 = vsel %vm2987, %v2980, %v2984
        %v2989 = vand.u32 2147483647, %v2948
        %vm2990 = vcmp.eq.f32.partialorder %v2989, 8.507059e+37
        %v2991 = vand.u32 %v2948, 2147483648
        %v2992 = vor.u32 1.1754944e-38, %v2991
        %v2993 = vsel %vm2990, %v2992, %v2988
        %v2994 = vmul.f32 1.0, %v2993
        %v2995 = vrcp.pop %v2949
        %v2996 = vmul.f32 %v2949, %v2995
        %v2997 = vsub.f32 1.0, %v2996
        %v2998 = vmul.f32 %v2995, %v2997
        %v2999 = vadd.f32 %v2995, %v2998
        %vm3000 = vweird.f32 %v2949
        %vm3001 = vweird.f32 %v2995
        %vm3002 = vmor %vm3000, %vm3001
        %v3003 = vsel %vm3002, %v2995, %v2999
        %v3004 = vand.u32 2147483647, %v2949
        %vm3005 = vcmp.eq.f32.partialorder %v3004, 8.507059e+37
        %v3006 = vand.u32 %v2949, 2147483648
        %v3007 = vor.u32 1.1754944e-38, %v3006
        %v3008 = vsel %vm3005, %v3007, %v3003
        %v3009 = vmul.f32 1.0, %v3008
        %v3010 = vrcp.pop %v2950
        %v3011 = vmul.f32 %v2950, %v3010
        %v3012 = vsub.f32 1.0, %v3011
        %v3013 = vmul.f32 %v3010, %v3012
        %v3014 = vadd.f32 %v3010, %v3013
        %vm3015 = vweird.f32 %v2950
        %vm3016 = vweird.f32 %v3010
        %vm3017 = vmor %vm3015, %vm3016
        %v3018 = vsel %vm3017, %v3010, %v3014
        %v3019 = vand.u32 2147483647, %v2950
        %vm3020 = vcmp.eq.f32.partialorder %v3019, 8.507059e+37
        %v3021 = vand.u32 %v2950, 2147483648
        %v3022 = vor.u32 1.1754944e-38, %v3021
        %v3023 = vsel %vm3020, %v3022, %v3018
        %v3024 = vmul.f32 1.0, %v3023
        %v3025 = vrcp.pop %v2951
        %v3026 = vmul.f32 %v2951, %v3025
        %v3027 = vsub.f32 1.0, %v3026
        %v3028 = vmul.f32 %v3025, %v3027
        %v3029 = vadd.f32 %v3025, %v3028
        %vm3030 = vweird.f32 %v2951
        %vm3031 = vweird.f32 %v3025
        %vm3032 = vmor %vm3030, %vm3031
        %v3033 = vsel %vm3032, %v3025, %v3029
        %v3034 = vand.u32 2147483647, %v2951
        %vm3035 = vcmp.eq.f32.partialorder %v3034, 8.507059e+37
        %v3036 = vand.u32 %v2951, 2147483648
        %v3037 = vor.u32 1.1754944e-38, %v3036
        %v3038 = vsel %vm3035, %v3037, %v3033
        %v3039 = vmul.f32 1.0, %v3038
        %v3040 = vrcp.pop %v2952
        %v3041 = vmul.f32 %v2952, %v3040
        %v3042 = vsub.f32 1.0, %v3041
        %v3043 = vmul.f32 %v3040, %v3042
        %v3044 = vadd.f32 %v3040, %v3043
        %vm3045 = vweird.f32 %v2952
        %vm3046 = vweird.f32 %v3040
        %vm3047 = vmor %vm3045, %vm3046
        %v3048 = vsel %vm3047, %v3040, %v3044
        %v3049 = vand.u32 2147483647, %v2952
        %vm3050 = vcmp.eq.f32.partialorder %v3049, 8.507059e+37
        %v3051 = vand.u32 %v2952, 2147483648
        %v3052 = vor.u32 1.1754944e-38, %v3051
        %v3053 = vsel %vm3050, %v3052, %v3048
        %v3054 = vmul.f32 1.0, %v3053
        %v3055 = vrcp.pop %v2953
        %v3056 = vmul.f32 %v2953, %v3055
        %v3057 = vsub.f32 1.0, %v3056
        %v3058 = vmul.f32 %v3055, %v3057
        %v3059 = vadd.f32 %v3055, %v3058
        %vm3060 = vweird.f32 %v2953
        %vm3061 = vweird.f32 %v3055
        %vm3062 = vmor %vm3060, %vm3061
        %v3063 = vsel %vm3062, %v3055, %v3059
        %v3064 = vand.u32 2147483647, %v2953
        %vm3065 = vcmp.eq.f32.partialorder %v3064, 8.507059e+37
        %v3066 = vand.u32 %v2953, 2147483648
        %v3067 = vor.u32 1.1754944e-38, %v3066
        %v3068 = vsel %vm3065, %v3067, %v3063
        %v3069 = vmul.f32 1.0, %v3068
        %v3070 = vrcp.pop %v2954
        %v3071 = vmul.f32 %v2954, %v3070
        %v3072 = vsub.f32 1.0, %v3071
        %v3073 = vmul.f32 %v3070, %v3072
        %v3074 = vadd.f32 %v3070, %v3073
        %vm3075 = vweird.f32 %v2954
        %vm3076 = vweird.f32 %v3070
        %vm3077 = vmor %vm3075, %vm3076
        %v3078 = vsel %vm3077, %v3070, %v3074
        %v3079 = vand.u32 2147483647, %v2954
        %vm3080 = vcmp.eq.f32.partialorder %v3079, 8.507059e+37
        %v3081 = vand.u32 %v2954, 2147483648
        %v3082 = vor.u32 1.1754944e-38, %v3081
        %v3083 = vsel %vm3080, %v3082, %v3078
        %v3084 = vmul.f32 1.0, %v3083
        %v3085 = vrcp.pop %v2955
        %v3086 = vmul.f32 %v2955, %v3085
        %v3087 = vsub.f32 1.0, %v3086
        %v3088 = vmul.f32 %v3085, %v3087
        %v3089 = vadd.f32 %v3085, %v3088
        %vm3090 = vweird.f32 %v2955
        %vm3091 = vweird.f32 %v3085
        %vm3092 = vmor %vm3090, %vm3091
        %v3093 = vsel %vm3092, %v3085, %v3089
        %v3094 = vand.u32 2147483647, %v2955
        %vm3095 = vcmp.eq.f32.partialorder %v3094, 8.507059e+37
        %v3096 = vand.u32 %v2955, 2147483648
        %v3097 = vor.u32 1.1754944e-38, %v3096
        %v3098 = vsel %vm3095, %v3097, %v3093
        %v3099 = vmul.f32 1.0, %v3098
        %v3100 = vrcp.pop %v2956
        %v3101 = vmul.f32 %v2956, %v3100
        %v3102 = vsub.f32 1.0, %v3101
        %v3103 = vmul.f32 %v3100, %v3102
        %v3104 = vadd.f32 %v3100, %v3103
        %vm3105 = vweird.f32 %v2956
        %vm3106 = vweird.f32 %v3100
        %vm3107 = vmor %vm3105, %vm3106
        %v3108 = vsel %vm3107, %v3100, %v3104
        %v3109 = vand.u32 2147483647, %v2956
        %vm3110 = vcmp.eq.f32.partialorder %v3109, 8.507059e+37
        %v3111 = vand.u32 %v2956, 2147483648
        %v3112 = vor.u32 1.1754944e-38, %v3111
        %v3113 = vsel %vm3110, %v3112, %v3108
        %v3114 = vmul.f32 1.0, %v3113
        %v3115 = vrcp.pop %v2957
        %v3116 = vmul.f32 %v2957, %v3115
        %v3117 = vsub.f32 1.0, %v3116
        %v3118 = vmul.f32 %v3115, %v3117
        %v3119 = vadd.f32 %v3115, %v3118
        %vm3120 = vweird.f32 %v2957
        %vm3121 = vweird.f32 %v3115
        %vm3122 = vmor %vm3120, %vm3121
        %v3123 = vsel %vm3122, %v3115, %v3119
        %v3124 = vand.u32 2147483647, %v2957
        %vm3125 = vcmp.eq.f32.partialorder %v3124, 8.507059e+37
        %v3126 = vand.u32 %v2957, 2147483648
        %v3127 = vor.u32 1.1754944e-38, %v3126
        %v3128 = vsel %vm3125, %v3127, %v3123
        %v3129 = vmul.f32 1.0, %v3128
        %v3130 = vrcp.pop %v2958
        %v3131 = vmul.f32 %v2958, %v3130
        %v3132 = vsub.f32 1.0, %v3131
        %v3133 = vmul.f32 %v3130, %v3132
        %v3134 = vadd.f32 %v3130, %v3133
        %vm3135 = vweird.f32 %v2958
        %vm3136 = vweird.f32 %v3130
        %vm3137 = vmor %vm3135, %vm3136
        %v3138 = vsel %vm3137, %v3130, %v3134
        %v3139 = vand.u32 2147483647, %v2958
        %vm3140 = vcmp.eq.f32.partialorder %v3139, 8.507059e+37
        %v3141 = vand.u32 %v2958, 2147483648
        %v3142 = vor.u32 1.1754944e-38, %v3141
        %v3143 = vsel %vm3140, %v3142, %v3138
        %v3144 = vmul.f32 1.0, %v3143
        %v3145 = vrcp.pop %v2959
        %v3146 = vmul.f32 %v2959, %v3145
        %v3147 = vsub.f32 1.0, %v3146
        %v3148 = vmul.f32 %v3145, %v3147
        %v3149 = vadd.f32 %v3145, %v3148
        %vm3150 = vweird.f32 %v2959
        %vm3151 = vweird.f32 %v3145
        %vm3152 = vmor %vm3150, %vm3151
        %v3153 = vsel %vm3152, %v3145, %v3149
        %v3154 = vand.u32 2147483647, %v2959
        %vm3155 = vcmp.eq.f32.partialorder %v3154, 8.507059e+37
        %v3156 = vand.u32 %v2959, 2147483648
        %v3157 = vor.u32 1.1754944e-38, %v3156
        %v3158 = vsel %vm3155, %v3157, %v3153
        %v3159 = vmul.f32 1.0, %v3158
        %v3160 = vrcp.pop %v2960
        %v3161 = vmul.f32 %v2960, %v3160
        %v3162 = vsub.f32 1.0, %v3161
        %v3163 = vmul.f32 %v3160, %v3162
        %v3164 = vadd.f32 %v3160, %v3163
        %vm3165 = vweird.f32 %v2960
        %vm3166 = vweird.f32 %v3160
        %vm3167 = vmor %vm3165, %vm3166
        %v3168 = vsel %vm3167, %v3160, %v3164
        %v3169 = vand.u32 2147483647, %v2960
        %vm3170 = vcmp.eq.f32.partialorder %v3169, 8.507059e+37
        %v3171 = vand.u32 %v2960, 2147483648
        %v3172 = vor.u32 1.1754944e-38, %v3171
        %v3173 = vsel %vm3170, %v3172, %v3168
        %v3174 = vmul.f32 1.0, %v3173
        %v3175 = vrcp.pop %v2961
        %v3176 = vmul.f32 %v2961, %v3175
        %v3177 = vsub.f32 1.0, %v3176
        %v3178 = vmul.f32 %v3175, %v3177
        %v3179 = vadd.f32 %v3175, %v3178
        %vm3180 = vweird.f32 %v2961
        %vm3181 = vweird.f32 %v3175
        %vm3182 = vmor %vm3180, %vm3181
        %v3183 = vsel %vm3182, %v3175, %v3179
        %v3184 = vand.u32 2147483647, %v2961
        %vm3185 = vcmp.eq.f32.partialorder %v3184, 8.507059e+37
        %v3186 = vand.u32 %v2961, 2147483648
        %v3187 = vor.u32 1.1754944e-38, %v3186
        %v3188 = vsel %vm3185, %v3187, %v3183
        %v3189 = vmul.f32 1.0, %v3188
        %v3190 = vrcp.pop %v2962
        %v3191 = vmul.f32 %v2962, %v3190
        %v3192 = vsub.f32 1.0, %v3191
        %v3193 = vmul.f32 %v3190, %v3192
        %v3194 = vadd.f32 %v3190, %v3193
        %vm3195 = vweird.f32 %v2962
        %vm3196 = vweird.f32 %v3190
        %vm3197 = vmor %vm3195, %vm3196
        %v3198 = vsel %vm3197, %v3190, %v3194
        %v3199 = vand.u32 2147483647, %v2962
        %vm3200 = vcmp.eq.f32.partialorder %v3199, 8.507059e+37
        %v3201 = vand.u32 %v2962, 2147483648
        %v3202 = vor.u32 1.1754944e-38, %v3201
        %v3203 = vsel %vm3200, %v3202, %v3198
        %v3204 = vmul.f32 1.0, %v3203
        %v3205 = vrcp.pop %v2963
        %v3206 = vmul.f32 %v2963, %v3205
        %v3207 = vsub.f32 1.0, %v3206
        %v3208 = vmul.f32 %v3205, %v3207
        %v3209 = vadd.f32 %v3205, %v3208
        %vm3210 = vweird.f32 %v2963
        %vm3211 = vweird.f32 %v3205
        %vm3212 = vmor %vm3210, %vm3211
        %v3213 = vsel %vm3212, %v3205, %v3209
        %v3214 = vand.u32 2147483647, %v2963
        %vm3215 = vcmp.eq.f32.partialorder %v3214, 8.507059e+37
        %v3216 = vand.u32 %v2963, 2147483648
        %v3217 = vor.u32 1.1754944e-38, %v3216
        %v3218 = vsel %vm3215, %v3217, %v3213
        %v3219 = vmul.f32 1.0, %v3218
        %v3220 = vrcp.pop %v2964
        %v3221 = vmul.f32 %v2964, %v3220
        %v3222 = vsub.f32 1.0, %v3221
        %v3223 = vmul.f32 %v3220, %v3222
        %v3224 = vadd.f32 %v3220, %v3223
        %vm3225 = vweird.f32 %v2964
        %vm3226 = vweird.f32 %v3220
        %vm3227 = vmor %vm3225, %vm3226
        %v3228 = vsel %vm3227, %v3220, %v3224
        %v3229 = vand.u32 2147483647, %v2964
        %vm3230 = vcmp.eq.f32.partialorder %v3229, 8.507059e+37
        %v3231 = vand.u32 %v2964, 2147483648
        %v3232 = vor.u32 1.1754944e-38, %v3231
        %v3233 = vsel %vm3230, %v3232, %v3228
        %v3234 = vmul.f32 1.0, %v3233
        %v3235 = vrcp.pop %v2965
        %v3236 = vmul.f32 %v2965, %v3235
        %v3237 = vsub.f32 1.0, %v3236
        %v3238 = vmul.f32 %v3235, %v3237
        %v3239 = vadd.f32 %v3235, %v3238
        %vm3240 = vweird.f32 %v2965
        %vm3241 = vweird.f32 %v3235
        %vm3242 = vmor %vm3240, %vm3241
        %v3243 = vsel %vm3242, %v3235, %v3239
        %v3244 = vand.u32 2147483647, %v2965
        %vm3245 = vcmp.eq.f32.partialorder %v3244, 8.507059e+37
        %v3246 = vand.u32 %v2965, 2147483648
        %v3247 = vor.u32 1.1754944e-38, %v3246
        %v3248 = vsel %vm3245, %v3247, %v3243
        %v3249 = vmul.f32 1.0, %v3248
        %v3250 = vrcp.pop %v2966
        %v3251 = vmul.f32 %v2966, %v3250
        %v3252 = vsub.f32 1.0, %v3251
        %v3253 = vmul.f32 %v3250, %v3252
        %v3254 = vadd.f32 %v3250, %v3253
        %vm3255 = vweird.f32 %v2966
        %vm3256 = vweird.f32 %v3250
        %vm3257 = vmor %vm3255, %vm3256
        %v3258 = vsel %vm3257, %v3250, %v3254
        %v3259 = vand.u32 2147483647, %v2966
        %vm3260 = vcmp.eq.f32.partialorder %v3259, 8.507059e+37
        %v3261 = vand.u32 %v2966, 2147483648
        %v3262 = vor.u32 1.1754944e-38, %v3261
        %v3263 = vsel %vm3260, %v3262, %v3258
        %v3264 = vmul.f32 1.0, %v3263
        %v3265 = vrcp.pop %v2967
        %v3266 = vmul.f32 %v2967, %v3265
        %v3267 = vsub.f32 1.0, %v3266
        %v3268 = vmul.f32 %v3265, %v3267
        %v3269 = vadd.f32 %v3265, %v3268
        %vm3270 = vweird.f32 %v2967
        %vm3271 = vweird.f32 %v3265
        %vm3272 = vmor %vm3270, %vm3271
        %v3273 = vsel %vm3272, %v3265, %v3269
        %v3274 = vand.u32 2147483647, %v2967
        %vm3275 = vcmp.eq.f32.partialorder %v3274, 8.507059e+37
        %v3276 = vand.u32 %v2967, 2147483648
        %v3277 = vor.u32 1.1754944e-38, %v3276
        %v3278 = vsel %vm3275, %v3277, %v3273
        %v3279 = vmul.f32 1.0, %v3278
        %v3280 = vrcp.pop %v2968
        %v3281 = vmul.f32 %v2968, %v3280
        %v3282 = vsub.f32 1.0, %v3281
        %v3283 = vmul.f32 %v3280, %v3282
        %v3284 = vadd.f32 %v3280, %v3283
        %vm3285 = vweird.f32 %v2968
        %vm3286 = vweird.f32 %v3280
        %vm3287 = vmor %vm3285, %vm3286
        %v3288 = vsel %vm3287, %v3280, %v3284
        %v3289 = vand.u32 2147483647, %v2968
        %vm3290 = vcmp.eq.f32.partialorder %v3289, 8.507059e+37
        %v3291 = vand.u32 %v2968, 2147483648
        %v3292 = vor.u32 1.1754944e-38, %v3291
        %v3293 = vsel %vm3290, %v3292, %v3288
        %v3294 = vmul.f32 1.0, %v3293
        %v3295 = vrcp.pop %v2969
        %v3296 = vmul.f32 %v2969, %v3295
        %v3297 = vsub.f32 1.0, %v3296
        %v3298 = vmul.f32 %v3295, %v3297
        %v3299 = vadd.f32 %v3295, %v3298
        %vm3300 = vweird.f32 %v2969
        %vm3301 = vweird.f32 %v3295
        %vm3302 = vmor %vm3300, %vm3301
        %v3303 = vsel %vm3302, %v3295, %v3299
        %v3304 = vand.u32 2147483647, %v2969
        %vm3305 = vcmp.eq.f32.partialorder %v3304, 8.507059e+37
        %v3306 = vand.u32 %v2969, 2147483648
        %v3307 = vor.u32 1.1754944e-38, %v3306
        %v3308 = vsel %vm3305, %v3307, %v3303
        %v3309 = vmul.f32 1.0, %v3308
        %v3310 = vrcp.pop %v2970
        %v3311 = vmul.f32 %v2970, %v3310
        %v3312 = vsub.f32 1.0, %v3311
        %v3313 = vmul.f32 %v3310, %v3312
        %v3314 = vadd.f32 %v3310, %v3313
        %vm3315 = vweird.f32 %v2970
        %vm3316 = vweird.f32 %v3310
        %vm3317 = vmor %vm3315, %vm3316
        %v3318 = vsel %vm3317, %v3310, %v3314
        %v3319 = vand.u32 2147483647, %v2970
        %vm3320 = vcmp.eq.f32.partialorder %v3319, 8.507059e+37
        %v3321 = vand.u32 %v2970, 2147483648
        %v3322 = vor.u32 1.1754944e-38, %v3321
        %v3323 = vsel %vm3320, %v3322, %v3318
        %v3324 = vmul.f32 1.0, %v3323
        %v3325 = vrcp.pop %v2971
        %v3326 = vmul.f32 %v2971, %v3325
        %v3327 = vsub.f32 1.0, %v3326
        %v3328 = vmul.f32 %v3325, %v3327
        %v3329 = vadd.f32 %v3325, %v3328
        %vm3330 = vweird.f32 %v2971
        %vm3331 = vweird.f32 %v3325
        %vm3332 = vmor %vm3330, %vm3331
        %v3333 = vsel %vm3332, %v3325, %v3329
        %v3334 = vand.u32 2147483647, %v2971
        %vm3335 = vcmp.eq.f32.partialorder %v3334, 8.507059e+37
        %v3336 = vand.u32 %v2971, 2147483648
        %v3337 = vor.u32 1.1754944e-38, %v3336
        %v3338 = vsel %vm3335, %v3337, %v3333
        %v3339 = vmul.f32 1.0, %v3338
        %v3340 = vrcp.pop %v2972
        %v3341 = vmul.f32 %v2972, %v3340
        %v3342 = vsub.f32 1.0, %v3341
        %v3343 = vmul.f32 %v3340, %v3342
        %v3344 = vadd.f32 %v3340, %v3343
        %vm3345 = vweird.f32 %v2972
        %vm3346 = vweird.f32 %v3340
        %vm3347 = vmor %vm3345, %vm3346
        %v3348 = vsel %vm3347, %v3340, %v3344
        %v3349 = vand.u32 2147483647, %v2972
        %vm3350 = vcmp.eq.f32.partialorder %v3349, 8.507059e+37
        %v3351 = vand.u32 %v2972, 2147483648
        %v3352 = vor.u32 1.1754944e-38, %v3351
        %v3353 = vsel %vm3350, %v3352, %v3348
        %v3354 = vmul.f32 1.0, %v3353
        %v3355 = vrcp.pop %v2973
        %v3356 = vmul.f32 %v2973, %v3355
        %v3357 = vsub.f32 1.0, %v3356
        %v3358 = vmul.f32 %v3355, %v3357
        %v3359 = vadd.f32 %v3355, %v3358
        %vm3360 = vweird.f32 %v2973
        %vm3361 = vweird.f32 %v3355
        %vm3362 = vmor %vm3360, %vm3361
        %v3363 = vsel %vm3362, %v3355, %v3359
        %v3364 = vand.u32 2147483647, %v2973
        %vm3365 = vcmp.eq.f32.partialorder %v3364, 8.507059e+37
        %v3366 = vand.u32 %v2973, 2147483648
        %v3367 = vor.u32 1.1754944e-38, %v3366
        %v3368 = vsel %vm3365, %v3367, %v3363
        %v3369 = vmul.f32 1.0, %v3368
        %v3370 = vrcp.pop %v2974
        %v3371 = vmul.f32 %v2974, %v3370
        %v3372 = vsub.f32 1.0, %v3371
        %v3373 = vmul.f32 %v3370, %v3372
        %v3374 = vadd.f32 %v3370, %v3373
        %vm3375 = vweird.f32 %v2974
        %vm3376 = vweird.f32 %v3370
        %vm3377 = vmor %vm3375, %vm3376
        %v3378 = vsel %vm3377, %v3370, %v3374
        %v3379 = vand.u32 2147483647, %v2974
        %vm3380 = vcmp.eq.f32.partialorder %v3379, 8.507059e+37
        %v3381 = vand.u32 %v2974, 2147483648
        %v3382 = vor.u32 1.1754944e-38, %v3381
        %v3383 = vsel %vm3380, %v3382, %v3378
        %v3384 = vmul.f32 1.0, %v3383
        %v3385 = vrcp.pop %v2975
        %v3386 = vmul.f32 %v2975, %v3385
        %v3387 = vsub.f32 1.0, %v3386
        %v3388 = vmul.f32 %v3385, %v3387
        %v3389 = vadd.f32 %v3385, %v3388
        %vm3390 = vweird.f32 %v2975
        %vm3391 = vweird.f32 %v3385
        %vm3392 = vmor %vm3390, %vm3391
        %v3393 = vsel %vm3392, %v3385, %v3389
        %v3394 = vand.u32 2147483647, %v2975
        %vm3395 = vcmp.eq.f32.partialorder %v3394, 8.507059e+37
        %v3396 = vand.u32 %v2975, 2147483648
        %v3397 = vor.u32 1.1754944e-38, %v3396
        %v3398 = vsel %vm3395, %v3397, %v3393
        %v3399 = vmul.f32 1.0, %v3398
        %v3400 = vrcp.pop %v2976
        %v3401 = vmul.f32 %v2976, %v3400
        %v3402 = vsub.f32 1.0, %v3401
        %v3403 = vmul.f32 %v3400, %v3402
        %v3404 = vadd.f32 %v3400, %v3403
        %vm3405 = vweird.f32 %v2976
        %vm3406 = vweird.f32 %v3400
        %vm3407 = vmor %vm3405, %vm3406
        %v3408 = vsel %vm3407, %v3400, %v3404
        %v3409 = vand.u32 2147483647, %v2976
        %vm3410 = vcmp.eq.f32.partialorder %v3409, 8.507059e+37
        %v3411 = vand.u32 %v2976, 2147483648
        %v3412 = vor.u32 1.1754944e-38, %v3411
        %v3413 = vsel %vm3410, %v3412, %v3408
        %v3414 = vmul.f32 1.0, %v3413
        %v3415 = vrcp.pop %v2977
        %v3416 = vmul.f32 %v2977, %v3415
        %v3417 = vsub.f32 1.0, %v3416
        %v3418 = vmul.f32 %v3415, %v3417
        %v3419 = vadd.f32 %v3415, %v3418
        %vm3420 = vweird.f32 %v2977
        %vm3421 = vweird.f32 %v3415
        %vm3422 = vmor %vm3420, %vm3421
        %v3423 = vsel %vm3422, %v3415, %v3419
        %v3424 = vand.u32 2147483647, %v2977
        %vm3425 = vcmp.eq.f32.partialorder %v3424, 8.507059e+37
        %v3426 = vand.u32 %v2977, 2147483648
        %v3427 = vor.u32 1.1754944e-38, %v3426
        %v3428 = vsel %vm3425, %v3427, %v3423
        %v3429 = vmul.f32 1.0, %v3428
        %v3430 = vrcp.pop %v2978
        %v3431 = vmul.f32 %v2978, %v3430
        %v3432 = vsub.f32 1.0, %v3431
        %v3433 = vmul.f32 %v3430, %v3432
        %v3434 = vadd.f32 %v3430, %v3433
        %vm3435 = vweird.f32 %v2978
        %vm3436 = vweird.f32 %v3430
        %vm3437 = vmor %vm3435, %vm3436
        %v3438 = vsel %vm3437, %v3430, %v3434
        %v3439 = vand.u32 2147483647, %v2978
        %vm3440 = vcmp.eq.f32.partialorder %v3439, 8.507059e+37
        %v3441 = vand.u32 %v2978, 2147483648
        %v3442 = vor.u32 1.1754944e-38, %v3441
        %v3443 = vsel %vm3440, %v3442, %v3438
        %v3444 = vmul.f32 1.0, %v3443
        %v3445 = vrcp.pop %v2979
        %v3446 = vmul.f32 %v2979, %v3445
        %v3447 = vsub.f32 1.0, %v3446
        %v3448 = vmul.f32 %v3445, %v3447
        %v3449 = vadd.f32 %v3445, %v3448
        %vm3450 = vweird.f32 %v2979
        %vm3451 = vweird.f32 %v3445
        %vm3452 = vmor %vm3450, %vm3451
        %v3453 = vsel %vm3452, %v3445, %v3449
        %v3454 = vand.u32 2147483647, %v2979
        %vm3455 = vcmp.eq.f32.partialorder %v3454, 8.507059e+37
        %v3456 = vand.u32 %v2979, 2147483648
        %v3457 = vor.u32 1.1754944e-38, %v3456
        %v3458 = vsel %vm3455, %v3457, %v3453
        %v3459 = vmul.f32 1.0, %v3458
        %v3460 = vld [vmem:[#allocation5 + $0x120] sm:$0xf]
        %v3461 = vld [vmem:[#allocation5 + $0x124] sm:$0xf]
        %v3462 = vld [vmem:[#allocation5 + $0x128] sm:$0xf]
        %v3463 = vld [vmem:[#allocation5 + $0x12c] sm:$0xf]
        %v3464 = vld [vmem:[#allocation5 + $0x130] sm:$0xf]
        %v3465 = vld [vmem:[#allocation5 + $0x134] sm:$0xf]
        %v3466 = vld [vmem:[#allocation5 + $0x138] sm:$0xf]
        %v3467 = vld [vmem:[#allocation5 + $0x13c] sm:$0xf]
        %v3468 = vld [vmem:[#allocation5 + $0x140] sm:$0xf]
        %v3469 = vld [vmem:[#allocation5 + $0x144] sm:$0xf]
        %v3470 = vld [vmem:[#allocation5 + $0x148] sm:$0xf]
        %v3471 = vld [vmem:[#allocation5 + $0x14c] sm:$0xf]
        %v3472 = vld [vmem:[#allocation5 + $0x150] sm:$0xf]
        %v3473 = vld [vmem:[#allocation5 + $0x154] sm:$0xf]
        %v3474 = vld [vmem:[#allocation5 + $0x158] sm:$0xf]
        %v3475 = vld [vmem:[#allocation5 + $0x15c] sm:$0xf]
        %v3476 = vld [vmem:[#allocation5 + $0x160] sm:$0x1]
        %v3477 = vunpack.c.l.bf16 %v3476
        %v3478 = vperm.slane %v3477, 0
        %v3495 = vunpack.c.l.b16 %v3460
        %v3496 = vunpack.c.l.b16 %v3461
        %v3497 = vunpack.c.l.b16 %v3462
        %v3498 = vunpack.c.l.b16 %v3463
        %v3499 = vunpack.c.l.b16 %v3464
        %v3500 = vunpack.c.l.b16 %v3465
        %v3501 = vunpack.c.l.b16 %v3466
        %v3502 = vunpack.c.l.b16 %v3467
        %v3503 = vunpack.c.l.b16 %v3468
        %v3504 = vunpack.c.l.b16 %v3469
        %v3505 = vunpack.c.l.b16 %v3470
        %v3506 = vunpack.c.l.b16 %v3471
        %v3507 = vunpack.c.l.b16 %v3472
        %v3508 = vunpack.c.l.b16 %v3473
        %v3509 = vunpack.c.l.b16 %v3474
        %v3510 = vunpack.c.l.b16 %v3475
        %v3511 = vpack.c.b16 %v3496, %v3495
        %v3512 = vpack.c.b16 %v3498, %v3497
        %v3513 = vpack.c.b16 %v3500, %v3499
        %v3514 = vpack.c.b16 %v3502, %v3501
        %v3515 = vpack.c.b16 %v3504, %v3503
        %v3516 = vpack.c.b16 %v3506, %v3505
        %v3517 = vpack.c.b16 %v3508, %v3507
        %v3518 = vpack.c.b16 %v3510, %v3509
        %3527 = vmatpush.bf16.msra.mxu0 %v3518
        %3528 = vmatpush.bf16.msra.mxu0 %v3517
        %3529 = vmatpush.bf16.msra.mxu0 %v3516
        %3530 = vmatpush.bf16.msra.mxu0 %v3515
        %3531 = vmatpush.bf16.msra.mxu0 %v3514
        %3532 = vmatpush.bf16.msra.mxu0 %v3513
        %3533 = vmatpush.bf16.msra.mxu0 %v3512
        %3534 = vmatpush.bf16.msra.mxu0 %v3511
        %3535 = vmatmul.bf16.gmra.mxu0 %v2696
        %v3536 = vpop.f32.mrf.mxu0
        %v3537 = vadd.f32 %v3478, %v3536
        %v3538 = vpop.f32.mrf.mxu0
        %v3539 = vadd.f32 %v3478, %v3538
        %3540 = vmatmul.bf16.gmra.mxu0 %v2697
        %v3541 = vpop.f32.mrf.mxu0
        %v3542 = vadd.f32 %v3478, %v3541
        %v3543 = vpop.f32.mrf.mxu0
        %v3544 = vadd.f32 %v3478, %v3543
        %3545 = vmatmul.bf16.gmra.mxu0 %v2698
        %v3546 = vpop.f32.mrf.mxu0
        %v3547 = vadd.f32 %v3478, %v3546
        %v3548 = vpop.f32.mrf.mxu0
        %v3549 = vadd.f32 %v3478, %v3548
        %3550 = vmatmul.bf16.gmra.mxu0 %v2699
        %v3551 = vpop.f32.mrf.mxu0
        %v3552 = vadd.f32 %v3478, %v3551
        %v3553 = vpop.f32.mrf.mxu0
        %v3554 = vadd.f32 %v3478, %v3553
        %3555 = vmatmul.bf16.gmra.mxu0 %v2700
        %v3556 = vpop.f32.mrf.mxu0
        %v3557 = vadd.f32 %v3478, %v3556
        %v3558 = vpop.f32.mrf.mxu0
        %v3559 = vadd.f32 %v3478, %v3558
        %3560 = vmatmul.bf16.gmra.mxu0 %v2701
        %v3561 = vpop.f32.mrf.mxu0
        %v3562 = vadd.f32 %v3478, %v3561
        %v3563 = vpop.f32.mrf.mxu0
        %v3564 = vadd.f32 %v3478, %v3563
        %3565 = vmatmul.bf16.gmra.mxu0 %v2702
        %v3566 = vpop.f32.mrf.mxu0
        %v3567 = vadd.f32 %v3478, %v3566
        %v3568 = vpop.f32.mrf.mxu0
        %v3569 = vadd.f32 %v3478, %v3568
        %3570 = vmatmul.bf16.gmra.mxu0 %v2703
        %v3571 = vpop.f32.mrf.mxu0
        %v3572 = vadd.f32 %v3478, %v3571
        %v3573 = vpop.f32.mrf.mxu0
        %v3574 = vadd.f32 %v3478, %v3573
        %3575 = vmatmul.bf16.gmra.mxu0 %v2704
        %v3576 = vpop.f32.mrf.mxu0
        %v3577 = vadd.f32 %v3478, %v3576
        %v3578 = vpop.f32.mrf.mxu0
        %v3579 = vadd.f32 %v3478, %v3578
        %3580 = vmatmul.bf16.gmra.mxu0 %v2705
        %v3581 = vpop.f32.mrf.mxu0
        %v3582 = vadd.f32 %v3478, %v3581
        %v3583 = vpop.f32.mrf.mxu0
        %v3584 = vadd.f32 %v3478, %v3583
        %3585 = vmatmul.bf16.gmra.mxu0 %v2706
        %v3586 = vpop.f32.mrf.mxu0
        %v3587 = vadd.f32 %v3478, %v3586
        %v3588 = vpop.f32.mrf.mxu0
        %v3589 = vadd.f32 %v3478, %v3588
        %3590 = vmatmul.bf16.gmra.mxu0 %v2707
        %v3591 = vpop.f32.mrf.mxu0
        %v3592 = vadd.f32 %v3478, %v3591
        %v3593 = vpop.f32.mrf.mxu0
        %v3594 = vadd.f32 %v3478, %v3593
        %3595 = vmatmul.bf16.gmra.mxu0 %v2708
        %v3596 = vpop.f32.mrf.mxu0
        %v3597 = vadd.f32 %v3478, %v3596
        %v3598 = vpop.f32.mrf.mxu0
        %v3599 = vadd.f32 %v3478, %v3598
        %3600 = vmatmul.bf16.gmra.mxu0 %v2709
        %v3601 = vpop.f32.mrf.mxu0
        %v3602 = vadd.f32 %v3478, %v3601
        %v3603 = vpop.f32.mrf.mxu0
        %v3604 = vadd.f32 %v3478, %v3603
        %3605 = vmatmul.bf16.gmra.mxu0 %v2710
        %v3606 = vpop.f32.mrf.mxu0
        %v3607 = vadd.f32 %v3478, %v3606
        %v3608 = vpop.f32.mrf.mxu0
        %v3609 = vadd.f32 %v3478, %v3608
        %3610 = vmatmul.bf16.gmra.mxu0 %v2711
        %v3611 = vpop.f32.mrf.mxu0
        %v3612 = vadd.f32 %v3478, %v3611
        %v3613 = vpop.f32.mrf.mxu0
        %v3614 = vadd.f32 %v3478, %v3613
        %3615 = vdwg.mxu0
        %v3616 = vxor.u32 %v3537, 2147483648
        %v3617 = vxor.u32 %v3539, 2147483648
        %v3618 = vxor.u32 %v3542, 2147483648
        %v3619 = vxor.u32 %v3544, 2147483648
        %v3620 = vxor.u32 %v3547, 2147483648
        %v3621 = vxor.u32 %v3549, 2147483648
        %v3622 = vxor.u32 %v3552, 2147483648
        %v3623 = vxor.u32 %v3554, 2147483648
        %v3624 = vxor.u32 %v3557, 2147483648
        %v3625 = vxor.u32 %v3559, 2147483648
        %v3626 = vxor.u32 %v3562, 2147483648
        %v3627 = vxor.u32 %v3564, 2147483648
        %v3628 = vxor.u32 %v3567, 2147483648
        %v3629 = vxor.u32 %v3569, 2147483648
        %v3630 = vxor.u32 %v3572, 2147483648
        %v3631 = vxor.u32 %v3574, 2147483648
        %v3632 = vxor.u32 %v3577, 2147483648
        %v3633 = vxor.u32 %v3579, 2147483648
        %v3634 = vxor.u32 %v3582, 2147483648
        %v3635 = vxor.u32 %v3584, 2147483648
        %v3636 = vxor.u32 %v3587, 2147483648
        %v3637 = vxor.u32 %v3589, 2147483648
        %v3638 = vxor.u32 %v3592, 2147483648
        %v3639 = vxor.u32 %v3594, 2147483648
        %v3640 = vxor.u32 %v3597, 2147483648
        %v3641 = vxor.u32 %v3599, 2147483648
        %v3642 = vxor.u32 %v3602, 2147483648
        %v3643 = vxor.u32 %v3604, 2147483648
        %v3644 = vxor.u32 %v3607, 2147483648
        %v3645 = vxor.u32 %v3609, 2147483648
        %v3646 = vxor.u32 %v3612, 2147483648
        %v3647 = vxor.u32 %v3614, 2147483648
        %v3648 = vmul.f32 %v3616, 1.442695
        %v3649 = vpow.pop %v3648
        %v3650 = vmul.f32 %v3617, 1.442695
        %v3651 = vpow.pop %v3650
        %v3652 = vmul.f32 %v3618, 1.442695
        %v3653 = vpow.pop %v3652
        %v3654 = vmul.f32 %v3619, 1.442695
        %v3655 = vpow.pop %v3654
        %v3656 = vmul.f32 %v3620, 1.442695
        %v3657 = vpow.pop %v3656
        %v3658 = vmul.f32 %v3621, 1.442695
        %v3659 = vpow.pop %v3658
        %v3660 = vmul.f32 %v3622, 1.442695
        %v3661 = vpow.pop %v3660
        %v3662 = vmul.f32 %v3623, 1.442695
        %v3663 = vpow.pop %v3662
        %v3664 = vmul.f32 %v3624, 1.442695
        %v3665 = vpow.pop %v3664
        %v3666 = vmul.f32 %v3625, 1.442695
        %v3667 = vpow.pop %v3666
        %v3668 = vmul.f32 %v3626, 1.442695
        %v3669 = vpow.pop %v3668
        %v3670 = vmul.f32 %v3627, 1.442695
        %v3671 = vpow.pop %v3670
        %v3672 = vmul.f32 %v3628, 1.442695
        %v3673 = vpow.pop %v3672
        %v3674 = vmul.f32 %v3629, 1.442695
        %v3675 = vpow.pop %v3674
        %v3676 = vmul.f32 %v3630, 1.442695
        %v3677 = vpow.pop %v3676
        %v3678 = vmul.f32 %v3631, 1.442695
        %v3679 = vpow.pop %v3678
        %v3680 = vmul.f32 %v3632, 1.442695
        %v3681 = vpow.pop %v3680
        %v3682 = vmul.f32 %v3633, 1.442695
        %v3683 = vpow.pop %v3682
        %v3684 = vmul.f32 %v3634, 1.442695
        %v3685 = vpow.pop %v3684
        %v3686 = vmul.f32 %v3635, 1.442695
        %v3687 = vpow.pop %v3686
        %v3688 = vmul.f32 %v3636, 1.442695
        %v3689 = vpow.pop %v3688
        %v3690 = vmul.f32 %v3637, 1.442695
        %v3691 = vpow.pop %v3690
        %v3692 = vmul.f32 %v3638, 1.442695
        %v3693 = vpow.pop %v3692
        %v3694 = vmul.f32 %v3639, 1.442695
        %v3695 = vpow.pop %v3694
        %v3696 = vmul.f32 %v3640, 1.442695
        %v3697 = vpow.pop %v3696
        %v3698 = vmul.f32 %v3641, 1.442695
        %v3699 = vpow.pop %v3698
        %v3700 = vmul.f32 %v3642, 1.442695
        %v3701 = vpow.pop %v3700
        %v3702 = vmul.f32 %v3643, 1.442695
        %v3703 = vpow.pop %v3702
        %v3704 = vmul.f32 %v3644, 1.442695
        %v3705 = vpow.pop %v3704
        %v3706 = vmul.f32 %v3645, 1.442695
        %v3707 = vpow.pop %v3706
        %v3708 = vmul.f32 %v3646, 1.442695
        %v3709 = vpow.pop %v3708
        %v3710 = vmul.f32 %v3647, 1.442695
        %v3711 = vpow.pop %v3710
        %v3712 = vadd.f32 %v3649, 1.0
        %v3713 = vadd.f32 %v3651, 1.0
        %v3714 = vadd.f32 %v3653, 1.0
        %v3715 = vadd.f32 %v3655, 1.0
        %v3716 = vadd.f32 %v3657, 1.0
        %v3717 = vadd.f32 %v3659, 1.0
        %v3718 = vadd.f32 %v3661, 1.0
        %v3719 = vadd.f32 %v3663, 1.0
        %v3720 = vadd.f32 %v3665, 1.0
        %v3721 = vadd.f32 %v3667, 1.0
        %v3722 = vadd.f32 %v3669, 1.0
        %v3723 = vadd.f32 %v3671, 1.0
        %v3724 = vadd.f32 %v3673, 1.0
        %v3725 = vadd.f32 %v3675, 1.0
        %v3726 = vadd.f32 %v3677, 1.0
        %v3727 = vadd.f32 %v3679, 1.0
        %v3728 = vadd.f32 %v3681, 1.0
        %v3729 = vadd.f32 %v3683, 1.0
        %v3730 = vadd.f32 %v3685, 1.0
        %v3731 = vadd.f32 %v3687, 1.0
        %v3732 = vadd.f32 %v3689, 1.0
        %v3733 = vadd.f32 %v3691, 1.0
        %v3734 = vadd.f32 %v3693, 1.0
        %v3735 = vadd.f32 %v3695, 1.0
        %v3736 = vadd.f32 %v3697, 1.0
        %v3737 = vadd.f32 %v3699, 1.0
        %v3738 = vadd.f32 %v3701, 1.0
        %v3739 = vadd.f32 %v3703, 1.0
        %v3740 = vadd.f32 %v3705, 1.0
        %v3741 = vadd.f32 %v3707, 1.0
        %v3742 = vadd.f32 %v3709, 1.0
        %v3743 = vadd.f32 %v3711, 1.0
        %v3744 = vrcp.pop %v3712
        %v3745 = vmul.f32 %v3712, %v3744
        %v3746 = vsub.f32 1.0, %v3745
        %v3747 = vmul.f32 %v3744, %v3746
        %v3748 = vadd.f32 %v3744, %v3747
        %vm3749 = vweird.f32 %v3712
        %vm3750 = vweird.f32 %v3744
        %vm3751 = vmor %vm3749, %vm3750
        %v3752 = vsel %vm3751, %v3744, %v3748
        %v3753 = vand.u32 2147483647, %v3712
        %vm3754 = vcmp.eq.f32.partialorder %v3753, 8.507059e+37
        %v3755 = vand.u32 %v3712, 2147483648
        %v3756 = vor.u32 1.1754944e-38, %v3755
        %v3757 = vsel %vm3754, %v3756, %v3752
        %v3758 = vmul.f32 1.0, %v3757
        %v3759 = vrcp.pop %v3713
        %v3760 = vmul.f32 %v3713, %v3759
        %v3761 = vsub.f32 1.0, %v3760
        %v3762 = vmul.f32 %v3759, %v3761
        %v3763 = vadd.f32 %v3759, %v3762
        %vm3764 = vweird.f32 %v3713
        %vm3765 = vweird.f32 %v3759
        %vm3766 = vmor %vm3764, %vm3765
        %v3767 = vsel %vm3766, %v3759, %v3763
        %v3768 = vand.u32 2147483647, %v3713
        %vm3769 = vcmp.eq.f32.partialorder %v3768, 8.507059e+37
        %v3770 = vand.u32 %v3713, 2147483648
        %v3771 = vor.u32 1.1754944e-38, %v3770
        %v3772 = vsel %vm3769, %v3771, %v3767
        %v3773 = vmul.f32 1.0, %v3772
        %v3774 = vrcp.pop %v3714
        %v3775 = vmul.f32 %v3714, %v3774
        %v3776 = vsub.f32 1.0, %v3775
        %v3777 = vmul.f32 %v3774, %v3776
        %v3778 = vadd.f32 %v3774, %v3777
        %vm3779 = vweird.f32 %v3714
        %vm3780 = vweird.f32 %v3774
        %vm3781 = vmor %vm3779, %vm3780
        %v3782 = vsel %vm3781, %v3774, %v3778
        %v3783 = vand.u32 2147483647, %v3714
        %vm3784 = vcmp.eq.f32.partialorder %v3783, 8.507059e+37
        %v3785 = vand.u32 %v3714, 2147483648
        %v3786 = vor.u32 1.1754944e-38, %v3785
        %v3787 = vsel %vm3784, %v3786, %v3782
        %v3788 = vmul.f32 1.0, %v3787
        %v3789 = vrcp.pop %v3715
        %v3790 = vmul.f32 %v3715, %v3789
        %v3791 = vsub.f32 1.0, %v3790
        %v3792 = vmul.f32 %v3789, %v3791
        %v3793 = vadd.f32 %v3789, %v3792
        %vm3794 = vweird.f32 %v3715
        %vm3795 = vweird.f32 %v3789
        %vm3796 = vmor %vm3794, %vm3795
        %v3797 = vsel %vm3796, %v3789, %v3793
        %v3798 = vand.u32 2147483647, %v3715
        %vm3799 = vcmp.eq.f32.partialorder %v3798, 8.507059e+37
        %v3800 = vand.u32 %v3715, 2147483648
        %v3801 = vor.u32 1.1754944e-38, %v3800
        %v3802 = vsel %vm3799, %v3801, %v3797
        %v3803 = vmul.f32 1.0, %v3802
        %v3804 = vrcp.pop %v3716
        %v3805 = vmul.f32 %v3716, %v3804
        %v3806 = vsub.f32 1.0, %v3805
        %v3807 = vmul.f32 %v3804, %v3806
        %v3808 = vadd.f32 %v3804, %v3807
        %vm3809 = vweird.f32 %v3716
        %vm3810 = vweird.f32 %v3804
        %vm3811 = vmor %vm3809, %vm3810
        %v3812 = vsel %vm3811, %v3804, %v3808
        %v3813 = vand.u32 2147483647, %v3716
        %vm3814 = vcmp.eq.f32.partialorder %v3813, 8.507059e+37
        %v3815 = vand.u32 %v3716, 2147483648
        %v3816 = vor.u32 1.1754944e-38, %v3815
        %v3817 = vsel %vm3814, %v3816, %v3812
        %v3818 = vmul.f32 1.0, %v3817
        %v3819 = vrcp.pop %v3717
        %v3820 = vmul.f32 %v3717, %v3819
        %v3821 = vsub.f32 1.0, %v3820
        %v3822 = vmul.f32 %v3819, %v3821
        %v3823 = vadd.f32 %v3819, %v3822
        %vm3824 = vweird.f32 %v3717
        %vm3825 = vweird.f32 %v3819
        %vm3826 = vmor %vm3824, %vm3825
        %v3827 = vsel %vm3826, %v3819, %v3823
        %v3828 = vand.u32 2147483647, %v3717
        %vm3829 = vcmp.eq.f32.partialorder %v3828, 8.507059e+37
        %v3830 = vand.u32 %v3717, 2147483648
        %v3831 = vor.u32 1.1754944e-38, %v3830
        %v3832 = vsel %vm3829, %v3831, %v3827
        %v3833 = vmul.f32 1.0, %v3832
        %v3834 = vrcp.pop %v3718
        %v3835 = vmul.f32 %v3718, %v3834
        %v3836 = vsub.f32 1.0, %v3835
        %v3837 = vmul.f32 %v3834, %v3836
        %v3838 = vadd.f32 %v3834, %v3837
        %vm3839 = vweird.f32 %v3718
        %vm3840 = vweird.f32 %v3834
        %vm3841 = vmor %vm3839, %vm3840
        %v3842 = vsel %vm3841, %v3834, %v3838
        %v3843 = vand.u32 2147483647, %v3718
        %vm3844 = vcmp.eq.f32.partialorder %v3843, 8.507059e+37
        %v3845 = vand.u32 %v3718, 2147483648
        %v3846 = vor.u32 1.1754944e-38, %v3845
        %v3847 = vsel %vm3844, %v3846, %v3842
        %v3848 = vmul.f32 1.0, %v3847
        %v3849 = vrcp.pop %v3719
        %v3850 = vmul.f32 %v3719, %v3849
        %v3851 = vsub.f32 1.0, %v3850
        %v3852 = vmul.f32 %v3849, %v3851
        %v3853 = vadd.f32 %v3849, %v3852
        %vm3854 = vweird.f32 %v3719
        %vm3855 = vweird.f32 %v3849
        %vm3856 = vmor %vm3854, %vm3855
        %v3857 = vsel %vm3856, %v3849, %v3853
        %v3858 = vand.u32 2147483647, %v3719
        %vm3859 = vcmp.eq.f32.partialorder %v3858, 8.507059e+37
        %v3860 = vand.u32 %v3719, 2147483648
        %v3861 = vor.u32 1.1754944e-38, %v3860
        %v3862 = vsel %vm3859, %v3861, %v3857
        %v3863 = vmul.f32 1.0, %v3862
        %v3864 = vrcp.pop %v3720
        %v3865 = vmul.f32 %v3720, %v3864
        %v3866 = vsub.f32 1.0, %v3865
        %v3867 = vmul.f32 %v3864, %v3866
        %v3868 = vadd.f32 %v3864, %v3867
        %vm3869 = vweird.f32 %v3720
        %vm3870 = vweird.f32 %v3864
        %vm3871 = vmor %vm3869, %vm3870
        %v3872 = vsel %vm3871, %v3864, %v3868
        %v3873 = vand.u32 2147483647, %v3720
        %vm3874 = vcmp.eq.f32.partialorder %v3873, 8.507059e+37
        %v3875 = vand.u32 %v3720, 2147483648
        %v3876 = vor.u32 1.1754944e-38, %v3875
        %v3877 = vsel %vm3874, %v3876, %v3872
        %v3878 = vmul.f32 1.0, %v3877
        %v3879 = vrcp.pop %v3721
        %v3880 = vmul.f32 %v3721, %v3879
        %v3881 = vsub.f32 1.0, %v3880
        %v3882 = vmul.f32 %v3879, %v3881
        %v3883 = vadd.f32 %v3879, %v3882
        %vm3884 = vweird.f32 %v3721
        %vm3885 = vweird.f32 %v3879
        %vm3886 = vmor %vm3884, %vm3885
        %v3887 = vsel %vm3886, %v3879, %v3883
        %v3888 = vand.u32 2147483647, %v3721
        %vm3889 = vcmp.eq.f32.partialorder %v3888, 8.507059e+37
        %v3890 = vand.u32 %v3721, 2147483648
        %v3891 = vor.u32 1.1754944e-38, %v3890
        %v3892 = vsel %vm3889, %v3891, %v3887
        %v3893 = vmul.f32 1.0, %v3892
        %v3894 = vrcp.pop %v3722
        %v3895 = vmul.f32 %v3722, %v3894
        %v3896 = vsub.f32 1.0, %v3895
        %v3897 = vmul.f32 %v3894, %v3896
        %v3898 = vadd.f32 %v3894, %v3897
        %vm3899 = vweird.f32 %v3722
        %vm3900 = vweird.f32 %v3894
        %vm3901 = vmor %vm3899, %vm3900
        %v3902 = vsel %vm3901, %v3894, %v3898
        %v3903 = vand.u32 2147483647, %v3722
        %vm3904 = vcmp.eq.f32.partialorder %v3903, 8.507059e+37
        %v3905 = vand.u32 %v3722, 2147483648
        %v3906 = vor.u32 1.1754944e-38, %v3905
        %v3907 = vsel %vm3904, %v3906, %v3902
        %v3908 = vmul.f32 1.0, %v3907
        %v3909 = vrcp.pop %v3723
        %v3910 = vmul.f32 %v3723, %v3909
        %v3911 = vsub.f32 1.0, %v3910
        %v3912 = vmul.f32 %v3909, %v3911
        %v3913 = vadd.f32 %v3909, %v3912
        %vm3914 = vweird.f32 %v3723
        %vm3915 = vweird.f32 %v3909
        %vm3916 = vmor %vm3914, %vm3915
        %v3917 = vsel %vm3916, %v3909, %v3913
        %v3918 = vand.u32 2147483647, %v3723
        %vm3919 = vcmp.eq.f32.partialorder %v3918, 8.507059e+37
        %v3920 = vand.u32 %v3723, 2147483648
        %v3921 = vor.u32 1.1754944e-38, %v3920
        %v3922 = vsel %vm3919, %v3921, %v3917
        %v3923 = vmul.f32 1.0, %v3922
        %v3924 = vrcp.pop %v3724
        %v3925 = vmul.f32 %v3724, %v3924
        %v3926 = vsub.f32 1.0, %v3925
        %v3927 = vmul.f32 %v3924, %v3926
        %v3928 = vadd.f32 %v3924, %v3927
        %vm3929 = vweird.f32 %v3724
        %vm3930 = vweird.f32 %v3924
        %vm3931 = vmor %vm3929, %vm3930
        %v3932 = vsel %vm3931, %v3924, %v3928
        %v3933 = vand.u32 2147483647, %v3724
        %vm3934 = vcmp.eq.f32.partialorder %v3933, 8.507059e+37
        %v3935 = vand.u32 %v3724, 2147483648
        %v3936 = vor.u32 1.1754944e-38, %v3935
        %v3937 = vsel %vm3934, %v3936, %v3932
        %v3938 = vmul.f32 1.0, %v3937
        %v3939 = vrcp.pop %v3725
        %v3940 = vmul.f32 %v3725, %v3939
        %v3941 = vsub.f32 1.0, %v3940
        %v3942 = vmul.f32 %v3939, %v3941
        %v3943 = vadd.f32 %v3939, %v3942
        %vm3944 = vweird.f32 %v3725
        %vm3945 = vweird.f32 %v3939
        %vm3946 = vmor %vm3944, %vm3945
        %v3947 = vsel %vm3946, %v3939, %v3943
        %v3948 = vand.u32 2147483647, %v3725
        %vm3949 = vcmp.eq.f32.partialorder %v3948, 8.507059e+37
        %v3950 = vand.u32 %v3725, 2147483648
        %v3951 = vor.u32 1.1754944e-38, %v3950
        %v3952 = vsel %vm3949, %v3951, %v3947
        %v3953 = vmul.f32 1.0, %v3952
        %v3954 = vrcp.pop %v3726
        %v3955 = vmul.f32 %v3726, %v3954
        %v3956 = vsub.f32 1.0, %v3955
        %v3957 = vmul.f32 %v3954, %v3956
        %v3958 = vadd.f32 %v3954, %v3957
        %vm3959 = vweird.f32 %v3726
        %vm3960 = vweird.f32 %v3954
        %vm3961 = vmor %vm3959, %vm3960
        %v3962 = vsel %vm3961, %v3954, %v3958
        %v3963 = vand.u32 2147483647, %v3726
        %vm3964 = vcmp.eq.f32.partialorder %v3963, 8.507059e+37
        %v3965 = vand.u32 %v3726, 2147483648
        %v3966 = vor.u32 1.1754944e-38, %v3965
        %v3967 = vsel %vm3964, %v3966, %v3962
        %v3968 = vmul.f32 1.0, %v3967
        %v3969 = vrcp.pop %v3727
        %v3970 = vmul.f32 %v3727, %v3969
        %v3971 = vsub.f32 1.0, %v3970
        %v3972 = vmul.f32 %v3969, %v3971
        %v3973 = vadd.f32 %v3969, %v3972
        %vm3974 = vweird.f32 %v3727
        %vm3975 = vweird.f32 %v3969
        %vm3976 = vmor %vm3974, %vm3975
        %v3977 = vsel %vm3976, %v3969, %v3973
        %v3978 = vand.u32 2147483647, %v3727
        %vm3979 = vcmp.eq.f32.partialorder %v3978, 8.507059e+37
        %v3980 = vand.u32 %v3727, 2147483648
        %v3981 = vor.u32 1.1754944e-38, %v3980
        %v3982 = vsel %vm3979, %v3981, %v3977
        %v3983 = vmul.f32 1.0, %v3982
        %v3984 = vrcp.pop %v3728
        %v3985 = vmul.f32 %v3728, %v3984
        %v3986 = vsub.f32 1.0, %v3985
        %v3987 = vmul.f32 %v3984, %v3986
        %v3988 = vadd.f32 %v3984, %v3987
        %vm3989 = vweird.f32 %v3728
        %vm3990 = vweird.f32 %v3984
        %vm3991 = vmor %vm3989, %vm3990
        %v3992 = vsel %vm3991, %v3984, %v3988
        %v3993 = vand.u32 2147483647, %v3728
        %vm3994 = vcmp.eq.f32.partialorder %v3993, 8.507059e+37
        %v3995 = vand.u32 %v3728, 2147483648
        %v3996 = vor.u32 1.1754944e-38, %v3995
        %v3997 = vsel %vm3994, %v3996, %v3992
        %v3998 = vmul.f32 1.0, %v3997
        %v3999 = vrcp.pop %v3729
        %v4000 = vmul.f32 %v3729, %v3999
        %v4001 = vsub.f32 1.0, %v4000
        %v4002 = vmul.f32 %v3999, %v4001
        %v4003 = vadd.f32 %v3999, %v4002
        %vm4004 = vweird.f32 %v3729
        %vm4005 = vweird.f32 %v3999
        %vm4006 = vmor %vm4004, %vm4005
        %v4007 = vsel %vm4006, %v3999, %v4003
        %v4008 = vand.u32 2147483647, %v3729
        %vm4009 = vcmp.eq.f32.partialorder %v4008, 8.507059e+37
        %v4010 = vand.u32 %v3729, 2147483648
        %v4011 = vor.u32 1.1754944e-38, %v4010
        %v4012 = vsel %vm4009, %v4011, %v4007
        %v4013 = vmul.f32 1.0, %v4012
        %v4014 = vrcp.pop %v3730
        %v4015 = vmul.f32 %v3730, %v4014
        %v4016 = vsub.f32 1.0, %v4015
        %v4017 = vmul.f32 %v4014, %v4016
        %v4018 = vadd.f32 %v4014, %v4017
        %vm4019 = vweird.f32 %v3730
        %vm4020 = vweird.f32 %v4014
        %vm4021 = vmor %vm4019, %vm4020
        %v4022 = vsel %vm4021, %v4014, %v4018
        %v4023 = vand.u32 2147483647, %v3730
        %vm4024 = vcmp.eq.f32.partialorder %v4023, 8.507059e+37
        %v4025 = vand.u32 %v3730, 2147483648
        %v4026 = vor.u32 1.1754944e-38, %v4025
        %v4027 = vsel %vm4024, %v4026, %v4022
        %v4028 = vmul.f32 1.0, %v4027
        %v4029 = vrcp.pop %v3731
        %v4030 = vmul.f32 %v3731, %v4029
        %v4031 = vsub.f32 1.0, %v4030
        %v4032 = vmul.f32 %v4029, %v4031
        %v4033 = vadd.f32 %v4029, %v4032
        %vm4034 = vweird.f32 %v3731
        %vm4035 = vweird.f32 %v4029
        %vm4036 = vmor %vm4034, %vm4035
        %v4037 = vsel %vm4036, %v4029, %v4033
        %v4038 = vand.u32 2147483647, %v3731
        %vm4039 = vcmp.eq.f32.partialorder %v4038, 8.507059e+37
        %v4040 = vand.u32 %v3731, 2147483648
        %v4041 = vor.u32 1.1754944e-38, %v4040
        %v4042 = vsel %vm4039, %v4041, %v4037
        %v4043 = vmul.f32 1.0, %v4042
        %v4044 = vrcp.pop %v3732
        %v4045 = vmul.f32 %v3732, %v4044
        %v4046 = vsub.f32 1.0, %v4045
        %v4047 = vmul.f32 %v4044, %v4046
        %v4048 = vadd.f32 %v4044, %v4047
        %vm4049 = vweird.f32 %v3732
        %vm4050 = vweird.f32 %v4044
        %vm4051 = vmor %vm4049, %vm4050
        %v4052 = vsel %vm4051, %v4044, %v4048
        %v4053 = vand.u32 2147483647, %v3732
        %vm4054 = vcmp.eq.f32.partialorder %v4053, 8.507059e+37
        %v4055 = vand.u32 %v3732, 2147483648
        %v4056 = vor.u32 1.1754944e-38, %v4055
        %v4057 = vsel %vm4054, %v4056, %v4052
        %v4058 = vmul.f32 1.0, %v4057
        %v4059 = vrcp.pop %v3733
        %v4060 = vmul.f32 %v3733, %v4059
        %v4061 = vsub.f32 1.0, %v4060
        %v4062 = vmul.f32 %v4059, %v4061
        %v4063 = vadd.f32 %v4059, %v4062
        %vm4064 = vweird.f32 %v3733
        %vm4065 = vweird.f32 %v4059
        %vm4066 = vmor %vm4064, %vm4065
        %v4067 = vsel %vm4066, %v4059, %v4063
        %v4068 = vand.u32 2147483647, %v3733
        %vm4069 = vcmp.eq.f32.partialorder %v4068, 8.507059e+37
        %v4070 = vand.u32 %v3733, 2147483648
        %v4071 = vor.u32 1.1754944e-38, %v4070
        %v4072 = vsel %vm4069, %v4071, %v4067
        %v4073 = vmul.f32 1.0, %v4072
        %v4074 = vrcp.pop %v3734
        %v4075 = vmul.f32 %v3734, %v4074
        %v4076 = vsub.f32 1.0, %v4075
        %v4077 = vmul.f32 %v4074, %v4076
        %v4078 = vadd.f32 %v4074, %v4077
        %vm4079 = vweird.f32 %v3734
        %vm4080 = vweird.f32 %v4074
        %vm4081 = vmor %vm4079, %vm4080
        %v4082 = vsel %vm4081, %v4074, %v4078
        %v4083 = vand.u32 2147483647, %v3734
        %vm4084 = vcmp.eq.f32.partialorder %v4083, 8.507059e+37
        %v4085 = vand.u32 %v3734, 2147483648
        %v4086 = vor.u32 1.1754944e-38, %v4085
        %v4087 = vsel %vm4084, %v4086, %v4082
        %v4088 = vmul.f32 1.0, %v4087
        %v4089 = vrcp.pop %v3735
        %v4090 = vmul.f32 %v3735, %v4089
        %v4091 = vsub.f32 1.0, %v4090
        %v4092 = vmul.f32 %v4089, %v4091
        %v4093 = vadd.f32 %v4089, %v4092
        %vm4094 = vweird.f32 %v3735
        %vm4095 = vweird.f32 %v4089
        %vm4096 = vmor %vm4094, %vm4095
        %v4097 = vsel %vm4096, %v4089, %v4093
        %v4098 = vand.u32 2147483647, %v3735
        %vm4099 = vcmp.eq.f32.partialorder %v4098, 8.507059e+37
        %v4100 = vand.u32 %v3735, 2147483648
        %v4101 = vor.u32 1.1754944e-38, %v4100
        %v4102 = vsel %vm4099, %v4101, %v4097
        %v4103 = vmul.f32 1.0, %v4102
        %v4104 = vrcp.pop %v3736
        %v4105 = vmul.f32 %v3736, %v4104
        %v4106 = vsub.f32 1.0, %v4105
        %v4107 = vmul.f32 %v4104, %v4106
        %v4108 = vadd.f32 %v4104, %v4107
        %vm4109 = vweird.f32 %v3736
        %vm4110 = vweird.f32 %v4104
        %vm4111 = vmor %vm4109, %vm4110
        %v4112 = vsel %vm4111, %v4104, %v4108
        %v4113 = vand.u32 2147483647, %v3736
        %vm4114 = vcmp.eq.f32.partialorder %v4113, 8.507059e+37
        %v4115 = vand.u32 %v3736, 2147483648
        %v4116 = vor.u32 1.1754944e-38, %v4115
        %v4117 = vsel %vm4114, %v4116, %v4112
        %v4118 = vmul.f32 1.0, %v4117
        %v4119 = vrcp.pop %v3737
        %v4120 = vmul.f32 %v3737, %v4119
        %v4121 = vsub.f32 1.0, %v4120
        %v4122 = vmul.f32 %v4119, %v4121
        %v4123 = vadd.f32 %v4119, %v4122
        %vm4124 = vweird.f32 %v3737
        %vm4125 = vweird.f32 %v4119
        %vm4126 = vmor %vm4124, %vm4125
        %v4127 = vsel %vm4126, %v4119, %v4123
        %v4128 = vand.u32 2147483647, %v3737
        %vm4129 = vcmp.eq.f32.partialorder %v4128, 8.507059e+37
        %v4130 = vand.u32 %v3737, 2147483648
        %v4131 = vor.u32 1.1754944e-38, %v4130
        %v4132 = vsel %vm4129, %v4131, %v4127
        %v4133 = vmul.f32 1.0, %v4132
        %v4134 = vrcp.pop %v3738
        %v4135 = vmul.f32 %v3738, %v4134
        %v4136 = vsub.f32 1.0, %v4135
        %v4137 = vmul.f32 %v4134, %v4136
        %v4138 = vadd.f32 %v4134, %v4137
        %vm4139 = vweird.f32 %v3738
        %vm4140 = vweird.f32 %v4134
        %vm4141 = vmor %vm4139, %vm4140
        %v4142 = vsel %vm4141, %v4134, %v4138
        %v4143 = vand.u32 2147483647, %v3738
        %vm4144 = vcmp.eq.f32.partialorder %v4143, 8.507059e+37
        %v4145 = vand.u32 %v3738, 2147483648
        %v4146 = vor.u32 1.1754944e-38, %v4145
        %v4147 = vsel %vm4144, %v4146, %v4142
        %v4148 = vmul.f32 1.0, %v4147
        %v4149 = vrcp.pop %v3739
        %v4150 = vmul.f32 %v3739, %v4149
        %v4151 = vsub.f32 1.0, %v4150
        %v4152 = vmul.f32 %v4149, %v4151
        %v4153 = vadd.f32 %v4149, %v4152
        %vm4154 = vweird.f32 %v3739
        %vm4155 = vweird.f32 %v4149
        %vm4156 = vmor %vm4154, %vm4155
        %v4157 = vsel %vm4156, %v4149, %v4153
        %v4158 = vand.u32 2147483647, %v3739
        %vm4159 = vcmp.eq.f32.partialorder %v4158, 8.507059e+37
        %v4160 = vand.u32 %v3739, 2147483648
        %v4161 = vor.u32 1.1754944e-38, %v4160
        %v4162 = vsel %vm4159, %v4161, %v4157
        %v4163 = vmul.f32 1.0, %v4162
        %v4164 = vrcp.pop %v3740
        %v4165 = vmul.f32 %v3740, %v4164
        %v4166 = vsub.f32 1.0, %v4165
        %v4167 = vmul.f32 %v4164, %v4166
        %v4168 = vadd.f32 %v4164, %v4167
        %vm4169 = vweird.f32 %v3740
        %vm4170 = vweird.f32 %v4164
        %vm4171 = vmor %vm4169, %vm4170
        %v4172 = vsel %vm4171, %v4164, %v4168
        %v4173 = vand.u32 2147483647, %v3740
        %vm4174 = vcmp.eq.f32.partialorder %v4173, 8.507059e+37
        %v4175 = vand.u32 %v3740, 2147483648
        %v4176 = vor.u32 1.1754944e-38, %v4175
        %v4177 = vsel %vm4174, %v4176, %v4172
        %v4178 = vmul.f32 1.0, %v4177
        %v4179 = vrcp.pop %v3741
        %v4180 = vmul.f32 %v3741, %v4179
        %v4181 = vsub.f32 1.0, %v4180
        %v4182 = vmul.f32 %v4179, %v4181
        %v4183 = vadd.f32 %v4179, %v4182
        %vm4184 = vweird.f32 %v3741
        %vm4185 = vweird.f32 %v4179
        %vm4186 = vmor %vm4184, %vm4185
        %v4187 = vsel %vm4186, %v4179, %v4183
        %v4188 = vand.u32 2147483647, %v3741
        %vm4189 = vcmp.eq.f32.partialorder %v4188, 8.507059e+37
        %v4190 = vand.u32 %v3741, 2147483648
        %v4191 = vor.u32 1.1754944e-38, %v4190
        %v4192 = vsel %vm4189, %v4191, %v4187
        %v4193 = vmul.f32 1.0, %v4192
        %v4194 = vrcp.pop %v3742
        %v4195 = vmul.f32 %v3742, %v4194
        %v4196 = vsub.f32 1.0, %v4195
        %v4197 = vmul.f32 %v4194, %v4196
        %v4198 = vadd.f32 %v4194, %v4197
        %vm4199 = vweird.f32 %v3742
        %vm4200 = vweird.f32 %v4194
        %vm4201 = vmor %vm4199, %vm4200
        %v4202 = vsel %vm4201, %v4194, %v4198
        %v4203 = vand.u32 2147483647, %v3742
        %vm4204 = vcmp.eq.f32.partialorder %v4203, 8.507059e+37
        %v4205 = vand.u32 %v3742, 2147483648
        %v4206 = vor.u32 1.1754944e-38, %v4205
        %v4207 = vsel %vm4204, %v4206, %v4202
        %v4208 = vmul.f32 1.0, %v4207
        %v4209 = vrcp.pop %v3743
        %v4210 = vmul.f32 %v3743, %v4209
        %v4211 = vsub.f32 1.0, %v4210
        %v4212 = vmul.f32 %v4209, %v4211
        %v4213 = vadd.f32 %v4209, %v4212
        %vm4214 = vweird.f32 %v3743
        %vm4215 = vweird.f32 %v4209
        %vm4216 = vmor %vm4214, %vm4215
        %v4217 = vsel %vm4216, %v4209, %v4213
        %v4218 = vand.u32 2147483647, %v3743
        %vm4219 = vcmp.eq.f32.partialorder %v4218, 8.507059e+37
        %v4220 = vand.u32 %v3743, 2147483648
        %v4221 = vor.u32 1.1754944e-38, %v4220
        %v4222 = vsel %vm4219, %v4221, %v4217
        %v4223 = vmul.f32 1.0, %v4222
        %v4224 = vld [vmem:[#allocation5 + $0x168] sm:$0xf]
        %v4225 = vld [vmem:[#allocation5 + $0x16c] sm:$0xf]
        %v4226 = vld [vmem:[#allocation5 + $0x170] sm:$0xf]
        %v4227 = vld [vmem:[#allocation5 + $0x174] sm:$0xf]
        %v4228 = vld [vmem:[#allocation5 + $0x178] sm:$0xf]
        %v4229 = vld [vmem:[#allocation5 + $0x17c] sm:$0xf]
        %v4230 = vld [vmem:[#allocation5 + $0x180] sm:$0xf]
        %v4231 = vld [vmem:[#allocation5 + $0x184] sm:$0xf]
        %v4232 = vld [vmem:[#allocation5 + $0x188] sm:$0xf]
        %v4233 = vld [vmem:[#allocation5 + $0x18c] sm:$0xf]
        %v4234 = vld [vmem:[#allocation5 + $0x190] sm:$0xf]
        %v4235 = vld [vmem:[#allocation5 + $0x194] sm:$0xf]
        %v4236 = vld [vmem:[#allocation5 + $0x198] sm:$0xf]
        %v4237 = vld [vmem:[#allocation5 + $0x19c] sm:$0xf]
        %v4238 = vld [vmem:[#allocation5 + $0x1a0] sm:$0xf]
        %v4239 = vld [vmem:[#allocation5 + $0x1a4] sm:$0xf]
        %v4240 = vld [vmem:[#allocation5 + $0x1a8] sm:$0x1]
        %v4241 = vunpack.c.l.bf16 %v4240
        %v4242 = vperm.slane %v4241, 0
        %v4259 = vunpack.c.l.b16 %v4224
        %v4260 = vunpack.c.l.b16 %v4225
        %v4261 = vunpack.c.l.b16 %v4226
        %v4262 = vunpack.c.l.b16 %v4227
        %v4263 = vunpack.c.l.b16 %v4228
        %v4264 = vunpack.c.l.b16 %v4229
        %v4265 = vunpack.c.l.b16 %v4230
        %v4266 = vunpack.c.l.b16 %v4231
        %v4267 = vunpack.c.l.b16 %v4232
        %v4268 = vunpack.c.l.b16 %v4233
        %v4269 = vunpack.c.l.b16 %v4234
        %v4270 = vunpack.c.l.b16 %v4235
        %v4271 = vunpack.c.l.b16 %v4236
        %v4272 = vunpack.c.l.b16 %v4237
        %v4273 = vunpack.c.l.b16 %v4238
        %v4274 = vunpack.c.l.b16 %v4239
        %v4275 = vpack.c.b16 %v4260, %v4259
        %v4276 = vpack.c.b16 %v4262, %v4261
        %v4277 = vpack.c.b16 %v4264, %v4263
        %v4278 = vpack.c.b16 %v4266, %v4265
        %v4279 = vpack.c.b16 %v4268, %v4267
        %v4280 = vpack.c.b16 %v4270, %v4269
        %v4281 = vpack.c.b16 %v4272, %v4271
        %v4282 = vpack.c.b16 %v4274, %v4273
        %4291 = vmatpush.bf16.msra.mxu0 %v4282
        %4292 = vmatpush.bf16.msra.mxu0 %v4281
        %4293 = vmatpush.bf16.msra.mxu0 %v4280
        %4294 = vmatpush.bf16.msra.mxu0 %v4279
        %4295 = vmatpush.bf16.msra.mxu0 %v4278
        %4296 = vmatpush.bf16.msra.mxu0 %v4277
        %4297 = vmatpush.bf16.msra.mxu0 %v4276
        %4298 = vmatpush.bf16.msra.mxu0 %v4275
        %4299 = vmatmul.bf16.gmra.mxu0 %v2696
        %v4300 = vpop.f32.mrf.mxu0
        %v4301 = vadd.f32 %v4242, %v4300
        %v4302 = vpop.f32.mrf.mxu0
        %v4303 = vadd.f32 %v4242, %v4302
        %4304 = vmatmul.bf16.gmra.mxu0 %v2697
        %v4305 = vpop.f32.mrf.mxu0
        %v4306 = vadd.f32 %v4242, %v4305
        %v4307 = vpop.f32.mrf.mxu0
        %v4308 = vadd.f32 %v4242, %v4307
        %4309 = vmatmul.bf16.gmra.mxu0 %v2698
        %v4310 = vpop.f32.mrf.mxu0
        %v4311 = vadd.f32 %v4242, %v4310
        %v4312 = vpop.f32.mrf.mxu0
        %v4313 = vadd.f32 %v4242, %v4312
        %4314 = vmatmul.bf16.gmra.mxu0 %v2699
        %v4315 = vpop.f32.mrf.mxu0
        %v4316 = vadd.f32 %v4242, %v4315
        %v4317 = vpop.f32.mrf.mxu0
        %v4318 = vadd.f32 %v4242, %v4317
        %4319 = vmatmul.bf16.gmra.mxu0 %v2700
        %v4320 = vpop.f32.mrf.mxu0
        %v4321 = vadd.f32 %v4242, %v4320
        %v4322 = vpop.f32.mrf.mxu0
        %v4323 = vadd.f32 %v4242, %v4322
        %4324 = vmatmul.bf16.gmra.mxu0 %v2701
        %v4325 = vpop.f32.mrf.mxu0
        %v4326 = vadd.f32 %v4242, %v4325
        %v4327 = vpop.f32.mrf.mxu0
        %v4328 = vadd.f32 %v4242, %v4327
        %4329 = vmatmul.bf16.gmra.mxu0 %v2702
        %v4330 = vpop.f32.mrf.mxu0
        %v4331 = vadd.f32 %v4242, %v4330
        %v4332 = vpop.f32.mrf.mxu0
        %v4333 = vadd.f32 %v4242, %v4332
        %4334 = vmatmul.bf16.gmra.mxu0 %v2703
        %v4335 = vpop.f32.mrf.mxu0
        %v4336 = vadd.f32 %v4242, %v4335
        %v4337 = vpop.f32.mrf.mxu0
        %v4338 = vadd.f32 %v4242, %v4337
        %4339 = vmatmul.bf16.gmra.mxu0 %v2704
        %v4340 = vpop.f32.mrf.mxu0
        %v4341 = vadd.f32 %v4242, %v4340
        %v4342 = vpop.f32.mrf.mxu0
        %v4343 = vadd.f32 %v4242, %v4342
        %4344 = vmatmul.bf16.gmra.mxu0 %v2705
        %v4345 = vpop.f32.mrf.mxu0
        %v4346 = vadd.f32 %v4242, %v4345
        %v4347 = vpop.f32.mrf.mxu0
        %v4348 = vadd.f32 %v4242, %v4347
        %4349 = vmatmul.bf16.gmra.mxu0 %v2706
        %v4350 = vpop.f32.mrf.mxu0
        %v4351 = vadd.f32 %v4242, %v4350
        %v4352 = vpop.f32.mrf.mxu0
        %v4353 = vadd.f32 %v4242, %v4352
        %4354 = vmatmul.bf16.gmra.mxu0 %v2707
        %v4355 = vpop.f32.mrf.mxu0
        %v4356 = vadd.f32 %v4242, %v4355
        %v4357 = vpop.f32.mrf.mxu0
        %v4358 = vadd.f32 %v4242, %v4357
        %4359 = vmatmul.bf16.gmra.mxu0 %v2708
        %v4360 = vpop.f32.mrf.mxu0
        %v4361 = vadd.f32 %v4242, %v4360
        %v4362 = vpop.f32.mrf.mxu0
        %v4363 = vadd.f32 %v4242, %v4362
        %4364 = vmatmul.bf16.gmra.mxu0 %v2709
        %v4365 = vpop.f32.mrf.mxu0
        %v4366 = vadd.f32 %v4242, %v4365
        %v4367 = vpop.f32.mrf.mxu0
        %v4368 = vadd.f32 %v4242, %v4367
        %4369 = vmatmul.bf16.gmra.mxu0 %v2710
        %v4370 = vpop.f32.mrf.mxu0
        %v4371 = vadd.f32 %v4242, %v4370
        %v4372 = vpop.f32.mrf.mxu0
        %v4373 = vadd.f32 %v4242, %v4372
        %4374 = vmatmul.bf16.gmra.mxu0 %v2711
        %v4375 = vpop.f32.mrf.mxu0
        %v4376 = vadd.f32 %v4242, %v4375
        %v4377 = vpop.f32.mrf.mxu0
        %v4378 = vadd.f32 %v4242, %v4377
        %4379 = vdwg.mxu0
        %4412 = vrot.lane.b32.xlu0 %v4301, 96
        %v4413 = vpop.permute.xlu0 %4412
        %4414 = vrot.lane.b32.xlu0 %v4303, 96
        %v4415 = vpop.permute.xlu0 %4414
        %4416 = vrot.lane.b32.xlu0 %v4306, 96
        %v4417 = vpop.permute.xlu0 %4416
        %4418 = vrot.lane.b32.xlu0 %v4308, 96
        %v4419 = vpop.permute.xlu0 %4418
        %4420 = vrot.lane.b32.xlu0 %v4311, 96
        %v4421 = vpop.permute.xlu0 %4420
        %4422 = vrot.lane.b32.xlu0 %v4313, 96
        %v4423 = vpop.permute.xlu0 %4422
        %4424 = vrot.lane.b32.xlu0 %v4316, 96
        %v4425 = vpop.permute.xlu0 %4424
        %4426 = vrot.lane.b32.xlu0 %v4318, 96
        %v4427 = vpop.permute.xlu0 %4426
        %4428 = vrot.lane.b32.xlu0 %v4321, 96
        %v4429 = vpop.permute.xlu0 %4428
        %4430 = vrot.lane.b32.xlu0 %v4323, 96
        %v4431 = vpop.permute.xlu0 %4430
        %4432 = vrot.lane.b32.xlu0 %v4326, 96
        %v4433 = vpop.permute.xlu0 %4432
        %4434 = vrot.lane.b32.xlu0 %v4328, 96
        %v4435 = vpop.permute.xlu0 %4434
        %4436 = vrot.lane.b32.xlu0 %v4331, 96
        %v4437 = vpop.permute.xlu0 %4436
        %4438 = vrot.lane.b32.xlu0 %v4333, 96
        %v4439 = vpop.permute.xlu0 %4438
        %4440 = vrot.lane.b32.xlu0 %v4336, 96
        %v4441 = vpop.permute.xlu0 %4440
        %4442 = vrot.lane.b32.xlu0 %v4338, 96
        %v4443 = vpop.permute.xlu0 %4442
        %4444 = vrot.lane.b32.xlu0 %v4341, 96
        %v4445 = vpop.permute.xlu0 %4444
        %4446 = vrot.lane.b32.xlu0 %v4343, 96
        %v4447 = vpop.permute.xlu0 %4446
        %4448 = vrot.lane.b32.xlu0 %v4346, 96
        %v4449 = vpop.permute.xlu0 %4448
        %4450 = vrot.lane.b32.xlu0 %v4348, 96
        %v4451 = vpop.permute.xlu0 %4450
        %4452 = vrot.lane.b32.xlu0 %v4351, 96
        %v4453 = vpop.permute.xlu0 %4452
        %4454 = vrot.lane.b32.xlu0 %v4353, 96
        %v4455 = vpop.permute.xlu0 %4454
        %4456 = vrot.lane.b32.xlu0 %v4356, 96
        %v4457 = vpop.permute.xlu0 %4456
        %4458 = vrot.lane.b32.xlu0 %v4358, 96
        %v4459 = vpop.permute.xlu0 %4458
        %4460 = vrot.lane.b32.xlu0 %v4361, 96
        %v4461 = vpop.permute.xlu0 %4460
        %4462 = vrot.lane.b32.xlu0 %v4363, 96
        %v4463 = vpop.permute.xlu0 %4462
        %4464 = vrot.lane.b32.xlu0 %v4366, 96
        %v4465 = vpop.permute.xlu0 %4464
        %4466 = vrot.lane.b32.xlu0 %v4368, 96
        %v4467 = vpop.permute.xlu0 %4466
        %4468 = vrot.lane.b32.xlu0 %v4371, 96
        %v4469 = vpop.permute.xlu0 %4468
        %4470 = vrot.lane.b32.xlu0 %v4373, 96
        %v4471 = vpop.permute.xlu0 %4470
        %4472 = vrot.lane.b32.xlu0 %v4376, 96
        %v4473 = vpop.permute.xlu0 %4472
        %4474 = vrot.lane.b32.xlu0 %v4378, 96
        %v4475 = vpop.permute.xlu0 %4474
        %v4508 = vmul.f32 %v2994, %v4413
        %v4509 = vmul.f32 %v3009, %v4415
        %v4510 = vmul.f32 %v3024, %v4417
        %v4511 = vmul.f32 %v3039, %v4419
        %v4512 = vmul.f32 %v3054, %v4421
        %v4513 = vmul.f32 %v3069, %v4423
        %v4514 = vmul.f32 %v3084, %v4425
        %v4515 = vmul.f32 %v3099, %v4427
        %v4516 = vmul.f32 %v3114, %v4429
        %v4517 = vmul.f32 %v3129, %v4431
        %v4518 = vmul.f32 %v3144, %v4433
        %v4519 = vmul.f32 %v3159, %v4435
        %v4520 = vmul.f32 %v3174, %v4437
        %v4521 = vmul.f32 %v3189, %v4439
        %v4522 = vmul.f32 %v3204, %v4441
        %v4523 = vmul.f32 %v3219, %v4443
        %v4524 = vmul.f32 %v3234, %v4445
        %v4525 = vmul.f32 %v3249, %v4447
        %v4526 = vmul.f32 %v3264, %v4449
        %v4527 = vmul.f32 %v3279, %v4451
        %v4528 = vmul.f32 %v3294, %v4453
        %v4529 = vmul.f32 %v3309, %v4455
        %v4530 = vmul.f32 %v3324, %v4457
        %v4531 = vmul.f32 %v3339, %v4459
        %v4532 = vmul.f32 %v3354, %v4461
        %v4533 = vmul.f32 %v3369, %v4463
        %v4534 = vmul.f32 %v3384, %v4465
        %v4535 = vmul.f32 %v3399, %v4467
        %v4536 = vmul.f32 %v3414, %v4469
        %v4537 = vmul.f32 %v3429, %v4471
        %v4538 = vmul.f32 %v3444, %v4473
        %v4539 = vmul.f32 %v3459, %v4475
        %v4540 = vadd.f32 %v4301, %v4508
        %v4541 = vadd.f32 %v4303, %v4509
        %v4542 = vadd.f32 %v4306, %v4510
        %v4543 = vadd.f32 %v4308, %v4511
        %v4544 = vadd.f32 %v4311, %v4512
        %v4545 = vadd.f32 %v4313, %v4513
        %v4546 = vadd.f32 %v4316, %v4514
        %v4547 = vadd.f32 %v4318, %v4515
        %v4548 = vadd.f32 %v4321, %v4516
        %v4549 = vadd.f32 %v4323, %v4517
        %v4550 = vadd.f32 %v4326, %v4518
        %v4551 = vadd.f32 %v4328, %v4519
        %v4552 = vadd.f32 %v4331, %v4520
        %v4553 = vadd.f32 %v4333, %v4521
        %v4554 = vadd.f32 %v4336, %v4522
        %v4555 = vadd.f32 %v4338, %v4523
        %v4556 = vadd.f32 %v4341, %v4524
        %v4557 = vadd.f32 %v4343, %v4525
        %v4558 = vadd.f32 %v4346, %v4526
        %v4559 = vadd.f32 %v4348, %v4527
        %v4560 = vadd.f32 %v4351, %v4528
        %v4561 = vadd.f32 %v4353, %v4529
        %v4562 = vadd.f32 %v4356, %v4530
        %v4563 = vadd.f32 %v4358, %v4531
        %v4564 = vadd.f32 %v4361, %v4532
        %v4565 = vadd.f32 %v4363, %v4533
        %v4566 = vadd.f32 %v4366, %v4534
        %v4567 = vadd.f32 %v4368, %v4535
        %v4568 = vadd.f32 %v4371, %v4536
        %v4569 = vadd.f32 %v4373, %v4537
        %v4570 = vadd.f32 %v4376, %v4538
        %v4571 = vadd.f32 %v4378, %v4539
        %v4572 = vtanh.pop %v4540
        %v4573 = vtanh.pop %v4541
        %v4574 = vtanh.pop %v4542
        %v4575 = vtanh.pop %v4543
        %v4576 = vtanh.pop %v4544
        %v4577 = vtanh.pop %v4545
        %v4578 = vtanh.pop %v4546
        %v4579 = vtanh.pop %v4547
        %v4580 = vtanh.pop %v4548
        %v4581 = vtanh.pop %v4549
        %v4582 = vtanh.pop %v4550
        %v4583 = vtanh.pop %v4551
        %v4584 = vtanh.pop %v4552
        %v4585 = vtanh.pop %v4553
        %v4586 = vtanh.pop %v4554
        %v4587 = vtanh.pop %v4555
        %v4588 = vtanh.pop %v4556
        %v4589 = vtanh.pop %v4557
        %v4590 = vtanh.pop %v4558
        %v4591 = vtanh.pop %v4559
        %v4592 = vtanh.pop %v4560
        %v4593 = vtanh.pop %v4561
        %v4594 = vtanh.pop %v4562
        %v4595 = vtanh.pop %v4563
        %v4596 = vtanh.pop %v4564
        %v4597 = vtanh.pop %v4565
        %v4598 = vtanh.pop %v4566
        %v4599 = vtanh.pop %v4567
        %v4600 = vtanh.pop %v4568
        %v4601 = vtanh.pop %v4569
        %v4602 = vtanh.pop %v4570
        %v4603 = vtanh.pop %v4571
        %v4604 = vsub.f32 1.0, %v3758
        %v4605 = vsub.f32 1.0, %v3773
        %v4606 = vsub.f32 1.0, %v3788
        %v4607 = vsub.f32 1.0, %v3803
        %v4608 = vsub.f32 1.0, %v3818
        %v4609 = vsub.f32 1.0, %v3833
        %v4610 = vsub.f32 1.0, %v3848
        %v4611 = vsub.f32 1.0, %v3863
        %v4612 = vsub.f32 1.0, %v3878
        %v4613 = vsub.f32 1.0, %v3893
        %v4614 = vsub.f32 1.0, %v3908
        %v4615 = vsub.f32 1.0, %v3923
        %v4616 = vsub.f32 1.0, %v3938
        %v4617 = vsub.f32 1.0, %v3953
        %v4618 = vsub.f32 1.0, %v3968
        %v4619 = vsub.f32 1.0, %v3983
        %v4620 = vsub.f32 1.0, %v3998
        %v4621 = vsub.f32 1.0, %v4013
        %v4622 = vsub.f32 1.0, %v4028
        %v4623 = vsub.f32 1.0, %v4043
        %v4624 = vsub.f32 1.0, %v4058
        %v4625 = vsub.f32 1.0, %v4073
        %v4626 = vsub.f32 1.0, %v4088
        %v4627 = vsub.f32 1.0, %v4103
        %v4628 = vsub.f32 1.0, %v4118
        %v4629 = vsub.f32 1.0, %v4133
        %v4630 = vsub.f32 1.0, %v4148
        %v4631 = vsub.f32 1.0, %v4163
        %v4632 = vsub.f32 1.0, %v4178
        %v4633 = vsub.f32 1.0, %v4193
        %v4634 = vsub.f32 1.0, %v4208
        %v4635 = vsub.f32 1.0, %v4223
        %v4636 = vmul.f32 %v4604, %v4572
        %v4637 = vmul.f32 %v4605, %v4573
        %v4638 = vmul.f32 %v4606, %v4574
        %v4639 = vmul.f32 %v4607, %v4575
        %v4640 = vmul.f32 %v4608, %v4576
        %v4641 = vmul.f32 %v4609, %v4577
        %v4642 = vmul.f32 %v4610, %v4578
        %v4643 = vmul.f32 %v4611, %v4579
        %v4644 = vmul.f32 %v4612, %v4580
        %v4645 = vmul.f32 %v4613, %v4581
        %v4646 = vmul.f32 %v4614, %v4582
        %v4647 = vmul.f32 %v4615, %v4583
        %v4648 = vmul.f32 %v4616, %v4584
        %v4649 = vmul.f32 %v4617, %v4585
        %v4650 = vmul.f32 %v4618, %v4586
        %v4651 = vmul.f32 %v4619, %v4587
        %v4652 = vmul.f32 %v4620, %v4588
        %v4653 = vmul.f32 %v4621, %v4589
        %v4654 = vmul.f32 %v4622, %v4590
        %v4655 = vmul.f32 %v4623, %v4591
        %v4656 = vmul.f32 %v4624, %v4592
        %v4657 = vmul.f32 %v4625, %v4593
        %v4658 = vmul.f32 %v4626, %v4594
        %v4659 = vmul.f32 %v4627, %v4595
        %v4660 = vmul.f32 %v4628, %v4596
        %v4661 = vmul.f32 %v4629, %v4597
        %v4662 = vmul.f32 %v4630, %v4598
        %v4663 = vmul.f32 %v4631, %v4599
        %v4664 = vmul.f32 %v4632, %v4600
        %v4665 = vmul.f32 %v4633, %v4601
        %v4666 = vmul.f32 %v4634, %v4602
        %v4667 = vmul.f32 %v4635, %v4603
        %4700 = vrot.lane.b32.xlu0 %v2616, 32
        %v4701 = vpop.permute.xlu0 %4700
        %4702 = vrot.lane.b32.xlu0 %v2617, 32
        %v4703 = vpop.permute.xlu0 %4702
        %4704 = vrot.lane.b32.xlu0 %v2618, 32
        %v4705 = vpop.permute.xlu0 %4704
        %4706 = vrot.lane.b32.xlu0 %v2619, 32
        %v4707 = vpop.permute.xlu0 %4706
        %4708 = vrot.lane.b32.xlu0 %v2620, 32
        %v4709 = vpop.permute.xlu0 %4708
        %4710 = vrot.lane.b32.xlu0 %v2621, 32
        %v4711 = vpop.permute.xlu0 %4710
        %4712 = vrot.lane.b32.xlu0 %v2622, 32
        %v4713 = vpop.permute.xlu0 %4712
        %4714 = vrot.lane.b32.xlu0 %v2623, 32
        %v4715 = vpop.permute.xlu0 %4714
        %4716 = vrot.lane.b32.xlu0 %v2624, 32
        %v4717 = vpop.permute.xlu0 %4716
        %4718 = vrot.lane.b32.xlu0 %v2625, 32
        %v4719 = vpop.permute.xlu0 %4718
        %4720 = vrot.lane.b32.xlu0 %v2626, 32
        %v4721 = vpop.permute.xlu0 %4720
        %4722 = vrot.lane.b32.xlu0 %v2627, 32
        %v4723 = vpop.permute.xlu0 %4722
        %4724 = vrot.lane.b32.xlu0 %v2628, 32
        %v4725 = vpop.permute.xlu0 %4724
        %4726 = vrot.lane.b32.xlu0 %v2629, 32
        %v4727 = vpop.permute.xlu0 %4726
        %4728 = vrot.lane.b32.xlu0 %v2630, 32
        %v4729 = vpop.permute.xlu0 %4728
        %4730 = vrot.lane.b32.xlu0 %v2631, 32
        %v4731 = vpop.permute.xlu0 %4730
        %4732 = vrot.lane.b32.xlu0 %v2632, 32
        %v4733 = vpop.permute.xlu0 %4732
        %4734 = vrot.lane.b32.xlu0 %v2633, 32
        %v4735 = vpop.permute.xlu0 %4734
        %4736 = vrot.lane.b32.xlu0 %v2634, 32
        %v4737 = vpop.permute.xlu0 %4736
        %4738 = vrot.lane.b32.xlu0 %v2635, 32
        %v4739 = vpop.permute.xlu0 %4738
        %4740 = vrot.lane.b32.xlu0 %v2636, 32
        %v4741 = vpop.permute.xlu0 %4740
        %4742 = vrot.lane.b32.xlu0 %v2637, 32
        %v4743 = vpop.permute.xlu0 %4742
        %4744 = vrot.lane.b32.xlu0 %v2638, 32
        %v4745 = vpop.permute.xlu0 %4744
        %4746 = vrot.lane.b32.xlu0 %v2639, 32
        %v4747 = vpop.permute.xlu0 %4746
        %4748 = vrot.lane.b32.xlu0 %v2640, 32
        %v4749 = vpop.permute.xlu0 %4748
        %4750 = vrot.lane.b32.xlu0 %v2641, 32
        %v4751 = vpop.permute.xlu0 %4750
        %4752 = vrot.lane.b32.xlu0 %v2642, 32
        %v4753 = vpop.permute.xlu0 %4752
        %4754 = vrot.lane.b32.xlu0 %v2643, 32
        %v4755 = vpop.permute.xlu0 %4754
        %4756 = vrot.lane.b32.xlu0 %v2644, 32
        %v4757 = vpop.permute.xlu0 %4756
        %4758 = vrot.lane.b32.xlu0 %v2645, 32
        %v4759 = vpop.permute.xlu0 %4758
        %4760 = vrot.lane.b32.xlu0 %v2646, 32
        %v4761 = vpop.permute.xlu0 %4760
        %4762 = vrot.lane.b32.xlu0 %v2647, 32
        %v4763 = vpop.permute.xlu0 %4762
        %v4796 = vmul.f32 %v3758, %v4701
        %v4797 = vmul.f32 %v3773, %v4703
        %v4798 = vmul.f32 %v3788, %v4705
        %v4799 = vmul.f32 %v3803, %v4707
        %v4800 = vmul.f32 %v3818, %v4709
        %v4801 = vmul.f32 %v3833, %v4711
        %v4802 = vmul.f32 %v3848, %v4713
        %v4803 = vmul.f32 %v3863, %v4715
        %v4804 = vmul.f32 %v3878, %v4717
        %v4805 = vmul.f32 %v3893, %v4719
        %v4806 = vmul.f32 %v3908, %v4721
        %v4807 = vmul.f32 %v3923, %v4723
        %v4808 = vmul.f32 %v3938, %v4725
        %v4809 = vmul.f32 %v3953, %v4727
        %v4810 = vmul.f32 %v3968, %v4729
        %v4811 = vmul.f32 %v3983, %v4731
        %v4812 = vmul.f32 %v3998, %v4733
        %v4813 = vmul.f32 %v4013, %v4735
        %v4814 = vmul.f32 %v4028, %v4737
        %v4815 = vmul.f32 %v4043, %v4739
        %v4816 = vmul.f32 %v4058, %v4741
        %v4817 = vmul.f32 %v4073, %v4743
        %v4818 = vmul.f32 %v4088, %v4745
        %v4819 = vmul.f32 %v4103, %v4747
        %v4820 = vmul.f32 %v4118, %v4749
        %v4821 = vmul.f32 %v4133, %v4751
        %v4822 = vmul.f32 %v4148, %v4753
        %v4823 = vmul.f32 %v4163, %v4755
        %v4824 = vmul.f32 %v4178, %v4757
        %v4825 = vmul.f32 %v4193, %v4759
        %v4826 = vmul.f32 %v4208, %v4761
        %v4827 = vmul.f32 %v4223, %v4763
        %v4828 = vadd.f32 %v4636, %v4796
        %v4829 = vadd.f32 %v4637, %v4797
        %v4830 = vadd.f32 %v4638, %v4798
        %v4831 = vadd.f32 %v4639, %v4799
        %v4832 = vadd.f32 %v4640, %v4800
        %v4833 = vadd.f32 %v4641, %v4801
        %v4834 = vadd.f32 %v4642, %v4802
        %v4835 = vadd.f32 %v4643, %v4803
        %v4836 = vadd.f32 %v4644, %v4804
        %v4837 = vadd.f32 %v4645, %v4805
        %v4838 = vadd.f32 %v4646, %v4806
        %v4839 = vadd.f32 %v4647, %v4807
        %v4840 = vadd.f32 %v4648, %v4808
        %v4841 = vadd.f32 %v4649, %v4809
        %v4842 = vadd.f32 %v4650, %v4810
        %v4843 = vadd.f32 %v4651, %v4811
        %v4844 = vadd.f32 %v4652, %v4812
        %v4845 = vadd.f32 %v4653, %v4813
        %v4846 = vadd.f32 %v4654, %v4814
        %v4847 = vadd.f32 %v4655, %v4815
        %v4848 = vadd.f32 %v4656, %v4816
        %v4849 = vadd.f32 %v4657, %v4817
        %v4850 = vadd.f32 %v4658, %v4818
        %v4851 = vadd.f32 %v4659, %v4819
        %v4852 = vadd.f32 %v4660, %v4820
        %v4853 = vadd.f32 %v4661, %v4821
        %v4854 = vadd.f32 %v4662, %v4822
        %v4855 = vadd.f32 %v4663, %v4823
        %v4856 = vadd.f32 %v4664, %v4824
        %v4857 = vadd.f32 %v4665, %v4825
        %v4858 = vadd.f32 %v4666, %v4826
        %v4859 = vadd.f32 %v4667, %v4827
        %v4860 = vmax.f32 %v4828, 0.0
        %v4861 = vmax.f32 %v4829, 0.0
        %v4862 = vmax.f32 %v4830, 0.0
        %v4863 = vmax.f32 %v4831, 0.0
        %v4864 = vmax.f32 %v4832, 0.0
        %v4865 = vmax.f32 %v4833, 0.0
        %v4866 = vmax.f32 %v4834, 0.0
        %v4867 = vmax.f32 %v4835, 0.0
        %v4868 = vmax.f32 %v4836, 0.0
        %v4869 = vmax.f32 %v4837, 0.0
        %v4870 = vmax.f32 %v4838, 0.0
        %v4871 = vmax.f32 %v4839, 0.0
        %v4872 = vmax.f32 %v4840, 0.0
        %v4873 = vmax.f32 %v4841, 0.0
        %v4874 = vmax.f32 %v4842, 0.0
        %v4875 = vmax.f32 %v4843, 0.0
        %v4876 = vmax.f32 %v4844, 0.0
        %v4877 = vmax.f32 %v4845, 0.0
        %v4878 = vmax.f32 %v4846, 0.0
        %v4879 = vmax.f32 %v4847, 0.0
        %v4880 = vmax.f32 %v4848, 0.0
        %v4881 = vmax.f32 %v4849, 0.0
        %v4882 = vmax.f32 %v4850, 0.0
        %v4883 = vmax.f32 %v4851, 0.0
        %v4884 = vmax.f32 %v4852, 0.0
        %v4885 = vmax.f32 %v4853, 0.0
        %v4886 = vmax.f32 %v4854, 0.0
        %v4887 = vmax.f32 %v4855, 0.0
        %v4888 = vmax.f32 %v4856, 0.0
        %v4889 = vmax.f32 %v4857, 0.0
        %v4890 = vmax.f32 %v4858, 0.0
        %v4891 = vmax.f32 %v4859, 0.0
        %v4892 = vld [vmem:[#allocation5 + $0x1b0] sm:$0xf]
        %v4893 = vld [vmem:[#allocation5 + $0x1b4] sm:$0xf]
        %v4894 = vld [vmem:[#allocation5 + $0x1b8] sm:$0xf]
        %v4895 = vld [vmem:[#allocation5 + $0x1bc] sm:$0xf]
        %v4896 = vpack.c.bf16 %v4861, %v4860
        %v4897 = vpack.c.bf16 %v4863, %v4862
        %v4898 = vpack.c.bf16 %v4865, %v4864
        %v4899 = vpack.c.bf16 %v4867, %v4866
        %v4900 = vpack.c.bf16 %v4869, %v4868
        %v4901 = vpack.c.bf16 %v4871, %v4870
        %v4902 = vpack.c.bf16 %v4873, %v4872
        %v4903 = vpack.c.bf16 %v4875, %v4874
        %v4904 = vpack.c.bf16 %v4877, %v4876
        %v4905 = vpack.c.bf16 %v4879, %v4878
        %v4906 = vpack.c.bf16 %v4881, %v4880
        %v4907 = vpack.c.bf16 %v4883, %v4882
        %v4908 = vpack.c.bf16 %v4885, %v4884
        %v4909 = vpack.c.bf16 %v4887, %v4886
        %v4910 = vpack.c.bf16 %v4889, %v4888
        %v4911 = vpack.c.bf16 %v4891, %v4890
        %v4912 = vld [vmem:[#allocation5 + $0x1c0] sm:$0x1]
        %v4913 = vunpack.c.l.bf16 %v4912
        %v4914 = vperm.slane %v4913, 0
        %v4919 = vunpack.c.l.b16 %v4892
        %v4920 = vunpack.c.l.b16 %v4893
        %v4921 = vunpack.c.l.b16 %v4894
        %v4922 = vunpack.c.l.b16 %v4895
        %v4923 = vpack.c.b16 %v4920, %v4919
        %v4924 = vpack.c.b16 %v4922, %v4921
        %v4928 = vsel %vm2582, %v4896, 0
        %v4931 = vsel %vm2582, %v4897, 0
        %v4934 = vsel %vm2582, %v4898, 0
        %v4937 = vsel %vm2582, %v4899, 0
        %v4940 = vsel %vm2582, %v4900, 0
        %v4943 = vsel %vm2582, %v4901, 0
        %v4946 = vsel %vm2582, %v4902, 0
        %v4949 = vsel %vm2582, %v4903, 0
        %v4952 = vsel %vm2582, %v4904, 0
        %v4955 = vsel %vm2582, %v4905, 0
        %v4958 = vsel %vm2582, %v4906, 0
        %v4961 = vsel %vm2582, %v4907, 0
        %v4964 = vsel %vm2582, %v4908, 0
        %v4967 = vsel %vm2582, %v4909, 0
        %v4970 = vsel %vm2582, %v4910, 0
        %v4973 = vsel %vm2582, %v4911, 0
        %4975 = vmatpush.bf16.msra.mxu0 0
        %4976 = vmatpush.bf16.msra.mxu0 0
        %4977 = vmatpush.bf16.msra.mxu0 0
        %4978 = vmatpush.bf16.msra.mxu0 0
        %4979 = vmatpush.bf16.msra.mxu0 0
        %4980 = vmatpush.bf16.msra.mxu0 0
        %4981 = vmatpush.bf16.msra.mxu0 %v4924
        %4982 = vmatpush.bf16.msra.mxu0 %v4923
        %4983 = vmatmul.bf16.gmra.mxu0 %v4928
        %v4984 = vpop.f32.mrf.mxu0
        %v4985 = vadd.f32 %v4914, %v4984
        %v4986 = vpop.f32.mrf.mxu0
        %v4987 = vadd.f32 %v4914, %v4986
        %4988 = vmatmul.bf16.gmra.mxu0 %v4931
        %v4989 = vpop.f32.mrf.mxu0
        %v4990 = vadd.f32 %v4914, %v4989
        %v4991 = vpop.f32.mrf.mxu0
        %v4992 = vadd.f32 %v4914, %v4991
        %4993 = vmatmul.bf16.gmra.mxu0 %v4934
        %v4994 = vpop.f32.mrf.mxu0
        %v4995 = vadd.f32 %v4914, %v4994
        %v4996 = vpop.f32.mrf.mxu0
        %v4997 = vadd.f32 %v4914, %v4996
        %4998 = vmatmul.bf16.gmra.mxu0 %v4937
        %v4999 = vpop.f32.mrf.mxu0
        %v5000 = vadd.f32 %v4914, %v4999
        %v5001 = vpop.f32.mrf.mxu0
        %v5002 = vadd.f32 %v4914, %v5001
        %5003 = vmatmul.bf16.gmra.mxu0 %v4940
        %v5004 = vpop.f32.mrf.mxu0
        %v5005 = vadd.f32 %v4914, %v5004
        %v5006 = vpop.f32.mrf.mxu0
        %v5007 = vadd.f32 %v4914, %v5006
        %5008 = vmatmul.bf16.gmra.mxu0 %v4943
        %v5009 = vpop.f32.mrf.mxu0
        %v5010 = vadd.f32 %v4914, %v5009
        %v5011 = vpop.f32.mrf.mxu0
        %v5012 = vadd.f32 %v4914, %v5011
        %5013 = vmatmul.bf16.gmra.mxu0 %v4946
        %v5014 = vpop.f32.mrf.mxu0
        %v5015 = vadd.f32 %v4914, %v5014
        %v5016 = vpop.f32.mrf.mxu0
        %v5017 = vadd.f32 %v4914, %v5016
        %5018 = vmatmul.bf16.gmra.mxu0 %v4949
        %v5019 = vpop.f32.mrf.mxu0
        %v5020 = vadd.f32 %v4914, %v5019
        %v5021 = vpop.f32.mrf.mxu0
        %v5022 = vadd.f32 %v4914, %v5021
        %5023 = vmatmul.bf16.gmra.mxu0 %v4952
        %v5024 = vpop.f32.mrf.mxu0
        %v5025 = vadd.f32 %v4914, %v5024
        %v5026 = vpop.f32.mrf.mxu0
        %v5027 = vadd.f32 %v4914, %v5026
        %5028 = vmatmul.bf16.gmra.mxu0 %v4955
        %v5029 = vpop.f32.mrf.mxu0
        %v5030 = vadd.f32 %v4914, %v5029
        %v5031 = vpop.f32.mrf.mxu0
        %v5032 = vadd.f32 %v4914, %v5031
        %5033 = vmatmul.bf16.gmra.mxu0 %v4958
        %v5034 = vpop.f32.mrf.mxu0
        %v5035 = vadd.f32 %v4914, %v5034
        %v5036 = vpop.f32.mrf.mxu0
        %v5037 = vadd.f32 %v4914, %v5036
        %5038 = vmatmul.bf16.gmra.mxu0 %v4961
        %v5039 = vpop.f32.mrf.mxu0
        %v5040 = vadd.f32 %v4914, %v5039
        %v5041 = vpop.f32.mrf.mxu0
        %v5042 = vadd.f32 %v4914, %v5041
        %5043 = vmatmul.bf16.gmra.mxu0 %v4964
        %v5044 = vpop.f32.mrf.mxu0
        %v5045 = vadd.f32 %v4914, %v5044
        %v5046 = vpop.f32.mrf.mxu0
        %v5047 = vadd.f32 %v4914, %v5046
        %5048 = vmatmul.bf16.gmra.mxu0 %v4967
        %v5049 = vpop.f32.mrf.mxu0
        %v5050 = vadd.f32 %v4914, %v5049
        %v5051 = vpop.f32.mrf.mxu0
        %v5052 = vadd.f32 %v4914, %v5051
        %5053 = vmatmul.bf16.gmra.mxu0 %v4970
        %v5054 = vpop.f32.mrf.mxu0
        %v5055 = vadd.f32 %v4914, %v5054
        %v5056 = vpop.f32.mrf.mxu0
        %v5057 = vadd.f32 %v4914, %v5056
        %5058 = vmatmul.bf16.gmra.mxu0 %v4973
        %v5059 = vpop.f32.mrf.mxu0
        %v5060 = vadd.f32 %v4914, %v5059
        %v5061 = vpop.f32.mrf.mxu0
        %v5062 = vadd.f32 %v4914, %v5061
        %5063 = vdwg.mxu0
        %v5064 = vmax.f32 %v4985, 0.0
        %v5065 = vmax.f32 %v4987, 0.0
        %v5066 = vmax.f32 %v4990, 0.0
        %v5067 = vmax.f32 %v4992, 0.0
        %v5068 = vmax.f32 %v4995, 0.0
        %v5069 = vmax.f32 %v4997, 0.0
        %v5070 = vmax.f32 %v5000, 0.0
        %v5071 = vmax.f32 %v5002, 0.0
        %v5072 = vmax.f32 %v5005, 0.0
        %v5073 = vmax.f32 %v5007, 0.0
        %v5074 = vmax.f32 %v5010, 0.0
        %v5075 = vmax.f32 %v5012, 0.0
        %v5076 = vmax.f32 %v5015, 0.0
        %v5077 = vmax.f32 %v5017, 0.0
        %v5078 = vmax.f32 %v5020, 0.0
        %v5079 = vmax.f32 %v5022, 0.0
        %v5080 = vmax.f32 %v5025, 0.0
        %v5081 = vmax.f32 %v5027, 0.0
        %v5082 = vmax.f32 %v5030, 0.0
        %v5083 = vmax.f32 %v5032, 0.0
        %v5084 = vmax.f32 %v5035, 0.0
        %v5085 = vmax.f32 %v5037, 0.0
        %v5086 = vmax.f32 %v5040, 0.0
        %v5087 = vmax.f32 %v5042, 0.0
        %v5088 = vmax.f32 %v5045, 0.0
        %v5089 = vmax.f32 %v5047, 0.0
        %v5090 = vmax.f32 %v5050, 0.0
        %v5091 = vmax.f32 %v5052, 0.0
        %v5092 = vmax.f32 %v5055, 0.0
        %v5093 = vmax.f32 %v5057, 0.0
        %v5094 = vmax.f32 %v5060, 0.0
        %v5095 = vmax.f32 %v5062, 0.0
        %v5096 = vld [vmem:[#allocation5 + $0x1c8] sm:$0xf]
        %v5097 = vld [vmem:[#allocation5 + $0x1cc] sm:$0xf]
        %v5098 = vld [vmem:[#allocation5 + $0x1d0] sm:$0xf]
        %v5099 = vld [vmem:[#allocation5 + $0x1d4] sm:$0xf]
        %v5100 = vpack.c.bf16 %v5065, %v5064
        %v5101 = vpack.c.bf16 %v5067, %v5066
        %v5102 = vpack.c.bf16 %v5069, %v5068
        %v5103 = vpack.c.bf16 %v5071, %v5070
        %v5104 = vpack.c.bf16 %v5073, %v5072
        %v5105 = vpack.c.bf16 %v5075, %v5074
        %v5106 = vpack.c.bf16 %v5077, %v5076
        %v5107 = vpack.c.bf16 %v5079, %v5078
        %v5108 = vpack.c.bf16 %v5081, %v5080
        %v5109 = vpack.c.bf16 %v5083, %v5082
        %v5110 = vpack.c.bf16 %v5085, %v5084
        %v5111 = vpack.c.bf16 %v5087, %v5086
        %v5112 = vpack.c.bf16 %v5089, %v5088
        %v5113 = vpack.c.bf16 %v5091, %v5090
        %v5114 = vpack.c.bf16 %v5093, %v5092
        %v5115 = vpack.c.bf16 %v5095, %v5094
        %v5116 = vld [vmem:[#allocation5 + $0x1d8] sm:$0x1]
        %v5117 = vunpack.c.l.bf16 %v5116
        %v5118 = vperm.slane %v5117, 0
        %v5123 = vunpack.c.l.b16 %v5096
        %v5124 = vunpack.c.l.b16 %v5097
        %v5125 = vunpack.c.l.b16 %v5098
        %v5126 = vunpack.c.l.b16 %v5099
        %v5127 = vpack.c.b16 %v5124, %v5123
        %v5128 = vpack.c.b16 %v5126, %v5125
        %v5132 = vsel %vm2582, %v5100, 0
        %v5135 = vsel %vm2582, %v5101, 0
        %v5138 = vsel %vm2582, %v5102, 0
        %v5141 = vsel %vm2582, %v5103, 0
        %v5144 = vsel %vm2582, %v5104, 0
        %v5147 = vsel %vm2582, %v5105, 0
        %v5150 = vsel %vm2582, %v5106, 0
        %v5153 = vsel %vm2582, %v5107, 0
        %v5156 = vsel %vm2582, %v5108, 0
        %v5159 = vsel %vm2582, %v5109, 0
        %v5162 = vsel %vm2582, %v5110, 0
        %v5165 = vsel %vm2582, %v5111, 0
        %v5168 = vsel %vm2582, %v5112, 0
        %v5171 = vsel %vm2582, %v5113, 0
        %v5174 = vsel %vm2582, %v5114, 0
        %v5177 = vsel %vm2582, %v5115, 0
        %5179 = vmatpush.bf16.msra.mxu0 0
        %5180 = vmatpush.bf16.msra.mxu0 0
        %5181 = vmatpush.bf16.msra.mxu0 0
        %5182 = vmatpush.bf16.msra.mxu0 0
        %5183 = vmatpush.bf16.msra.mxu0 0
        %5184 = vmatpush.bf16.msra.mxu0 0
        %5185 = vmatpush.bf16.msra.mxu0 %v5128
        %5186 = vmatpush.bf16.msra.mxu0 %v5127
        %5187 = vmatmul.bf16.gmra.mxu0 %v5132
        %v5188 = vpop.f32.mrf.mxu0
        %v5189 = vadd.f32 %v5118, %v5188
        %v5190 = vpop.f32.mrf.mxu0
        %v5191 = vadd.f32 %v5118, %v5190
        %5192 = vmatmul.bf16.gmra.mxu0 %v5135
        %v5193 = vpop.f32.mrf.mxu0
        %v5194 = vadd.f32 %v5118, %v5193
        %v5195 = vpop.f32.mrf.mxu0
        %v5196 = vadd.f32 %v5118, %v5195
        %5197 = vmatmul.bf16.gmra.mxu0 %v5138
        %v5198 = vpop.f32.mrf.mxu0
        %v5199 = vadd.f32 %v5118, %v5198
        %v5200 = vpop.f32.mrf.mxu0
        %v5201 = vadd.f32 %v5118, %v5200
        %5202 = vmatmul.bf16.gmra.mxu0 %v5141
        %v5203 = vpop.f32.mrf.mxu0
        %v5204 = vadd.f32 %v5118, %v5203
        %v5205 = vpop.f32.mrf.mxu0
        %v5206 = vadd.f32 %v5118, %v5205
        %5207 = vmatmul.bf16.gmra.mxu0 %v5144
        %v5208 = vpop.f32.mrf.mxu0
        %v5209 = vadd.f32 %v5118, %v5208
        %v5210 = vpop.f32.mrf.mxu0
        %v5211 = vadd.f32 %v5118, %v5210
        %5212 = vmatmul.bf16.gmra.mxu0 %v5147
        %v5213 = vpop.f32.mrf.mxu0
        %v5214 = vadd.f32 %v5118, %v5213
        %v5215 = vpop.f32.mrf.mxu0
        %v5216 = vadd.f32 %v5118, %v5215
        %5217 = vmatmul.bf16.gmra.mxu0 %v5150
        %v5218 = vpop.f32.mrf.mxu0
        %v5219 = vadd.f32 %v5118, %v5218
        %v5220 = vpop.f32.mrf.mxu0
        %v5221 = vadd.f32 %v5118, %v5220
        %5222 = vmatmul.bf16.gmra.mxu0 %v5153
        %v5223 = vpop.f32.mrf.mxu0
        %v5224 = vadd.f32 %v5118, %v5223
        %v5225 = vpop.f32.mrf.mxu0
        %v5226 = vadd.f32 %v5118, %v5225
        %5227 = vmatmul.bf16.gmra.mxu0 %v5156
        %v5228 = vpop.f32.mrf.mxu0
        %v5229 = vadd.f32 %v5118, %v5228
        %v5230 = vpop.f32.mrf.mxu0
        %v5231 = vadd.f32 %v5118, %v5230
        %5232 = vmatmul.bf16.gmra.mxu0 %v5159
        %v5233 = vpop.f32.mrf.mxu0
        %v5234 = vadd.f32 %v5118, %v5233
        %v5235 = vpop.f32.mrf.mxu0
        %v5236 = vadd.f32 %v5118, %v5235
        %5237 = vmatmul.bf16.gmra.mxu0 %v5162
        %v5238 = vpop.f32.mrf.mxu0
        %v5239 = vadd.f32 %v5118, %v5238
        %v5240 = vpop.f32.mrf.mxu0
        %v5241 = vadd.f32 %v5118, %v5240
        %5242 = vmatmul.bf16.gmra.mxu0 %v5165
        %v5243 = vpop.f32.mrf.mxu0
        %v5244 = vadd.f32 %v5118, %v5243
        %v5245 = vpop.f32.mrf.mxu0
        %v5246 = vadd.f32 %v5118, %v5245
        %5247 = vmatmul.bf16.gmra.mxu0 %v5168
        %v5248 = vpop.f32.mrf.mxu0
        %v5249 = vadd.f32 %v5118, %v5248
        %v5250 = vpop.f32.mrf.mxu0
        %v5251 = vadd.f32 %v5118, %v5250
        %5252 = vmatmul.bf16.gmra.mxu0 %v5171
        %v5253 = vpop.f32.mrf.mxu0
        %v5254 = vadd.f32 %v5118, %v5253
        %v5255 = vpop.f32.mrf.mxu0
        %v5256 = vadd.f32 %v5118, %v5255
        %5257 = vmatmul.bf16.gmra.mxu0 %v5174
        %v5258 = vpop.f32.mrf.mxu0
        %v5259 = vadd.f32 %v5118, %v5258
        %v5260 = vpop.f32.mrf.mxu0
        %v5261 = vadd.f32 %v5118, %v5260
        %5262 = vmatmul.bf16.gmra.mxu0 %v5177
        %v5263 = vpop.f32.mrf.mxu0
        %v5264 = vadd.f32 %v5118, %v5263
        %v5265 = vpop.f32.mrf.mxu0
        %v5266 = vadd.f32 %v5118, %v5265
        %5267 = vdwg.mxu0
        %v5268 = vmax.f32 %v5189, 0.0
        %v5269 = vmax.f32 %v5191, 0.0
        %v5270 = vmax.f32 %v5194, 0.0
        %v5271 = vmax.f32 %v5196, 0.0
        %v5272 = vmax.f32 %v5199, 0.0
        %v5273 = vmax.f32 %v5201, 0.0
        %v5274 = vmax.f32 %v5204, 0.0
        %v5275 = vmax.f32 %v5206, 0.0
        %v5276 = vmax.f32 %v5209, 0.0
        %v5277 = vmax.f32 %v5211, 0.0
        %v5278 = vmax.f32 %v5214, 0.0
        %v5279 = vmax.f32 %v5216, 0.0
        %v5280 = vmax.f32 %v5219, 0.0
        %v5281 = vmax.f32 %v5221, 0.0
        %v5282 = vmax.f32 %v5224, 0.0
        %v5283 = vmax.f32 %v5226, 0.0
        %v5284 = vmax.f32 %v5229, 0.0
        %v5285 = vmax.f32 %v5231, 0.0
        %v5286 = vmax.f32 %v5234, 0.0
        %v5287 = vmax.f32 %v5236, 0.0
        %v5288 = vmax.f32 %v5239, 0.0
        %v5289 = vmax.f32 %v5241, 0.0
        %v5290 = vmax.f32 %v5244, 0.0
        %v5291 = vmax.f32 %v5246, 0.0
        %v5292 = vmax.f32 %v5249, 0.0
        %v5293 = vmax.f32 %v5251, 0.0
        %v5294 = vmax.f32 %v5254, 0.0
        %v5295 = vmax.f32 %v5256, 0.0
        %v5296 = vmax.f32 %v5259, 0.0
        %v5297 = vmax.f32 %v5261, 0.0
        %v5298 = vmax.f32 %v5264, 0.0
        %v5299 = vmax.f32 %v5266, 0.0
        %v5300 = vld [vmem:[#allocation5 + $0x1e0] sm:$0xf]
        %v5301 = vld [vmem:[#allocation5 + $0x1e4] sm:$0xf]
        %v5302 = vld [vmem:[#allocation5 + $0x1e8] sm:$0xf]
        %v5303 = vpack.c.bf16 %v5269, %v5268
        %v5304 = vpack.c.bf16 %v5271, %v5270
        %v5305 = vpack.c.bf16 %v5273, %v5272
        %v5306 = vpack.c.bf16 %v5275, %v5274
        %v5307 = vpack.c.bf16 %v5277, %v5276
        %v5308 = vpack.c.bf16 %v5279, %v5278
        %v5309 = vpack.c.bf16 %v5281, %v5280
        %v5310 = vpack.c.bf16 %v5283, %v5282
        %v5311 = vpack.c.bf16 %v5285, %v5284
        %v5312 = vpack.c.bf16 %v5287, %v5286
        %v5313 = vpack.c.bf16 %v5289, %v5288
        %v5314 = vpack.c.bf16 %v5291, %v5290
        %v5315 = vpack.c.bf16 %v5293, %v5292
        %v5316 = vpack.c.bf16 %v5295, %v5294
        %v5317 = vpack.c.bf16 %v5297, %v5296
        %v5318 = vpack.c.bf16 %v5299, %v5298
        %v5319 = vld [vmem:[#allocation5 + $0x1f0] sm:$0x1]
        %v5320 = vunpack.c.l.bf16 %v5319
        %v5321 = vperm.slane %v5320, 0
        %v5325 = vunpack.c.l.b16 %v5300
        %v5326 = vunpack.c.l.b16 %v5301
        %v5327 = vunpack.c.l.b16 %v5302
        %v5328 = vpack.c.b16 %v5326, %v5325
        %v5329 = vpack.c.b16 %v5327, %v5327
        %vm5331 = vcmask 195584
        %v5333 = vsel %vm5331, %v5303, 0
        %v5336 = vsel %vm5331, %v5304, 0
        %v5339 = vsel %vm5331, %v5305, 0
        %v5342 = vsel %vm5331, %v5306, 0
        %v5345 = vsel %vm5331, %v5307, 0
        %v5348 = vsel %vm5331, %v5308, 0
        %v5351 = vsel %vm5331, %v5309, 0
        %v5354 = vsel %vm5331, %v5310, 0
        %v5357 = vsel %vm5331, %v5311, 0
        %v5360 = vsel %vm5331, %v5312, 0
        %v5363 = vsel %vm5331, %v5313, 0
        %v5366 = vsel %vm5331, %v5314, 0
        %v5369 = vsel %vm5331, %v5315, 0
        %v5372 = vsel %vm5331, %v5316, 0
        %v5375 = vsel %vm5331, %v5317, 0
        %v5378 = vsel %vm5331, %v5318, 0
        %vm5380 = vcmask 1043456
        %v5382 = vsel %vm5380, %v5329, 0
        %5384 = vmatpush.bf16.msra.mxu0 0
        %5385 = vmatpush.bf16.msra.mxu0 0
        %5386 = vmatpush.bf16.msra.mxu0 0
        %5387 = vmatpush.bf16.msra.mxu0 0
        %5388 = vmatpush.bf16.msra.mxu0 0
        %5389 = vmatpush.bf16.msra.mxu0 0
        %5390 = vmatpush.bf16.msra.mxu0 %v5382
        %5391 = vmatpush.bf16.msra.mxu0 %v5328
        %5392 = vmatmul.bf16.gmra.mxu0 %v5333
        %v5393 = vpop.f32.mrf.mxu0
        %v5394 = vadd.f32 %v5321, %v5393
        %v5395 = vpop.f32.mrf.mxu0
        %v5396 = vadd.f32 %v5321, %v5395
        %5397 = vmatmul.bf16.gmra.mxu0 %v5336
        %v5398 = vpop.f32.mrf.mxu0
        %v5399 = vadd.f32 %v5321, %v5398
        %v5400 = vpop.f32.mrf.mxu0
        %v5401 = vadd.f32 %v5321, %v5400
        %5402 = vmatmul.bf16.gmra.mxu0 %v5339
        %v5403 = vpop.f32.mrf.mxu0
        %v5404 = vadd.f32 %v5321, %v5403
        %v5405 = vpop.f32.mrf.mxu0
        %v5406 = vadd.f32 %v5321, %v5405
        %5407 = vmatmul.bf16.gmra.mxu0 %v5342
        %v5408 = vpop.f32.mrf.mxu0
        %v5409 = vadd.f32 %v5321, %v5408
        %v5410 = vpop.f32.mrf.mxu0
        %v5411 = vadd.f32 %v5321, %v5410
        %5412 = vmatmul.bf16.gmra.mxu0 %v5345
        %v5413 = vpop.f32.mrf.mxu0
        %v5414 = vadd.f32 %v5321, %v5413
        %v5415 = vpop.f32.mrf.mxu0
        %v5416 = vadd.f32 %v5321, %v5415
        %5417 = vmatmul.bf16.gmra.mxu0 %v5348
        %v5418 = vpop.f32.mrf.mxu0
        %v5419 = vadd.f32 %v5321, %v5418
        %v5420 = vpop.f32.mrf.mxu0
        %v5421 = vadd.f32 %v5321, %v5420
        %5422 = vmatmul.bf16.gmra.mxu0 %v5351
        %v5423 = vpop.f32.mrf.mxu0
        %v5424 = vadd.f32 %v5321, %v5423
        %v5425 = vpop.f32.mrf.mxu0
        %v5426 = vadd.f32 %v5321, %v5425
        %5427 = vmatmul.bf16.gmra.mxu0 %v5354
        %v5428 = vpop.f32.mrf.mxu0
        %v5429 = vadd.f32 %v5321, %v5428
        %v5430 = vpop.f32.mrf.mxu0
        %v5431 = vadd.f32 %v5321, %v5430
        %5432 = vmatmul.bf16.gmra.mxu0 %v5357
        %v5433 = vpop.f32.mrf.mxu0
        %v5434 = vadd.f32 %v5321, %v5433
        %v5435 = vpop.f32.mrf.mxu0
        %v5436 = vadd.f32 %v5321, %v5435
        %5437 = vmatmul.bf16.gmra.mxu0 %v5360
        %v5438 = vpop.f32.mrf.mxu0
        %v5439 = vadd.f32 %v5321, %v5438
        %v5440 = vpop.f32.mrf.mxu0
        %v5441 = vadd.f32 %v5321, %v5440
        %5442 = vmatmul.bf16.gmra.mxu0 %v5363
        %v5443 = vpop.f32.mrf.mxu0
        %v5444 = vadd.f32 %v5321, %v5443
        %v5445 = vpop.f32.mrf.mxu0
        %v5446 = vadd.f32 %v5321, %v5445
        %5447 = vmatmul.bf16.gmra.mxu0 %v5366
        %v5448 = vpop.f32.mrf.mxu0
        %v5449 = vadd.f32 %v5321, %v5448
        %v5450 = vpop.f32.mrf.mxu0
        %v5451 = vadd.f32 %v5321, %v5450
        %5452 = vmatmul.bf16.gmra.mxu0 %v5369
        %v5453 = vpop.f32.mrf.mxu0
        %v5454 = vadd.f32 %v5321, %v5453
        %v5455 = vpop.f32.mrf.mxu0
        %v5456 = vadd.f32 %v5321, %v5455
        %5457 = vmatmul.bf16.gmra.mxu0 %v5372
        %v5458 = vpop.f32.mrf.mxu0
        %v5459 = vadd.f32 %v5321, %v5458
        %v5460 = vpop.f32.mrf.mxu0
        %v5461 = vadd.f32 %v5321, %v5460
        %5462 = vmatmul.bf16.gmra.mxu0 %v5375
        %v5463 = vpop.f32.mrf.mxu0
        %v5464 = vadd.f32 %v5321, %v5463
        %v5465 = vpop.f32.mrf.mxu0
        %v5466 = vadd.f32 %v5321, %v5465
        %5467 = vmatmul.bf16.gmra.mxu0 %v5378
        %v5468 = vpop.f32.mrf.mxu0
        %v5469 = vadd.f32 %v5321, %v5468
        %v5470 = vpop.f32.mrf.mxu0
        %v5471 = vadd.f32 %v5321, %v5470
        %5472 = vdwg.mxu0
        %v5473 = vmax.f32 %v5394, 0.0
        %v5474 = vmax.f32 %v5396, 0.0
        %v5475 = vmax.f32 %v5399, 0.0
        %v5476 = vmax.f32 %v5401, 0.0
        %v5477 = vmax.f32 %v5404, 0.0
        %v5478 = vmax.f32 %v5406, 0.0
        %v5479 = vmax.f32 %v5409, 0.0
        %v5480 = vmax.f32 %v5411, 0.0
        %v5481 = vmax.f32 %v5414, 0.0
        %v5482 = vmax.f32 %v5416, 0.0
        %v5483 = vmax.f32 %v5419, 0.0
        %v5484 = vmax.f32 %v5421, 0.0
        %v5485 = vmax.f32 %v5424, 0.0
        %v5486 = vmax.f32 %v5426, 0.0
        %v5487 = vmax.f32 %v5429, 0.0
        %v5488 = vmax.f32 %v5431, 0.0
        %v5489 = vmax.f32 %v5434, 0.0
        %v5490 = vmax.f32 %v5436, 0.0
        %v5491 = vmax.f32 %v5439, 0.0
        %v5492 = vmax.f32 %v5441, 0.0
        %v5493 = vmax.f32 %v5444, 0.0
        %v5494 = vmax.f32 %v5446, 0.0
        %v5495 = vmax.f32 %v5449, 0.0
        %v5496 = vmax.f32 %v5451, 0.0
        %v5497 = vmax.f32 %v5454, 0.0
        %v5498 = vmax.f32 %v5456, 0.0
        %v5499 = vmax.f32 %v5459, 0.0
        %v5500 = vmax.f32 %v5461, 0.0
        %v5501 = vmax.f32 %v5464, 0.0
        %v5502 = vmax.f32 %v5466, 0.0
        %v5503 = vmax.f32 %v5469, 0.0
        %v5504 = vmax.f32 %v5471, 0.0
        %v5505 = vld [vmem:[#allocation5 + $0x1f8] sm:$0xf]
        %v5506 = vld [vmem:[#allocation5 + $0x1fc] sm:$0xf]
        %v5507 = vld [vmem:[#allocation5 + $0x200] sm:$0xf]
        %v5508 = vld [vmem:[#allocation5 + $0x204] sm:$0xf]
        %v5509 = vld [vmem:[#allocation5 + $0x208] sm:$0xf]
        %v5510 = vpack.c.bf16 %v5474, %v5473
        %v5511 = vpack.c.bf16 %v5476, %v5475
        %v5512 = vpack.c.bf16 %v5478, %v5477
        %v5513 = vpack.c.bf16 %v5480, %v5479
        %v5514 = vpack.c.bf16 %v5482, %v5481
        %v5515 = vpack.c.bf16 %v5484, %v5483
        %v5516 = vpack.c.bf16 %v5486, %v5485
        %v5517 = vpack.c.bf16 %v5488, %v5487
        %v5518 = vpack.c.bf16 %v5490, %v5489
        %v5519 = vpack.c.bf16 %v5492, %v5491
        %v5520 = vpack.c.bf16 %v5494, %v5493
        %v5521 = vpack.c.bf16 %v5496, %v5495
        %v5522 = vpack.c.bf16 %v5498, %v5497
        %v5523 = vpack.c.bf16 %v5500, %v5499
        %v5524 = vpack.c.bf16 %v5502, %v5501
        %v5525 = vpack.c.bf16 %v5504, %v5503
        %v5526 = vld [vmem:[#allocation5 + $0x210] sm:$0x1]
        %v5527 = vunpack.c.l.bf16 %v5526
        %v5528 = vperm.slane %v5527, 0
        %v5534 = vunpack.c.l.b16 %v5505
        %v5535 = vunpack.c.l.b16 %v5506
        %v5536 = vunpack.c.l.b16 %v5507
        %v5537 = vunpack.c.l.b16 %v5508
        %v5538 = vunpack.c.l.b16 %v5509
        %v5539 = vpack.c.b16 %v5535, %v5534
        %v5540 = vpack.c.b16 %v5537, %v5536
        %v5541 = vpack.c.b16 %v5538, %v5538
        %vm5544 = vcmask 326656
        %v5546 = vsel %vm5544, %v5510, 0
        %v5549 = vsel %vm5544, %v5511, 0
        %v5552 = vsel %vm5544, %v5512, 0
        %v5555 = vsel %vm5544, %v5513, 0
        %v5558 = vsel %vm5544, %v5514, 0
        %v5561 = vsel %vm5544, %v5515, 0
        %v5564 = vsel %vm5544, %v5516, 0
        %v5567 = vsel %vm5544, %v5517, 0
        %v5570 = vsel %vm5544, %v5518, 0
        %v5573 = vsel %vm5544, %v5519, 0
        %v5576 = vsel %vm5544, %v5520, 0
        %v5579 = vsel %vm5544, %v5521, 0
        %v5582 = vsel %vm5544, %v5522, 0
        %v5585 = vsel %vm5544, %v5523, 0
        %v5588 = vsel %vm5544, %v5524, 0
        %v5591 = vsel %vm5544, %v5525, 0
        %v5594 = vsel %vm5380, %v5541, 0
        %5596 = vmatpush.bf16.msra.mxu0 0
        %5597 = vmatpush.bf16.msra.mxu0 0
        %5598 = vmatpush.bf16.msra.mxu0 0
        %5599 = vmatpush.bf16.msra.mxu0 0
        %5600 = vmatpush.bf16.msra.mxu0 0
        %5601 = vmatpush.bf16.msra.mxu0 %v5594
        %5602 = vmatpush.bf16.msra.mxu0 %v5540
        %5603 = vmatpush.bf16.msra.mxu0 %v5539
        %5604 = vmatmul.bf16.gmra.mxu0 %v5546
        %v5605 = vpop.f32.mrf.mxu0
        %v5606 = vadd.f32 %v5528, %v5605
        %v5607 = vpop.f32.mrf.mxu0
        %v5608 = vadd.f32 %v5528, %v5607
        %5609 = vmatmul.bf16.gmra.mxu0 %v5549
        %v5610 = vpop.f32.mrf.mxu0
        %v5611 = vadd.f32 %v5528, %v5610
        %v5612 = vpop.f32.mrf.mxu0
        %v5613 = vadd.f32 %v5528, %v5612
        %5614 = vmatmul.bf16.gmra.mxu0 %v5552
        %v5615 = vpop.f32.mrf.mxu0
        %v5616 = vadd.f32 %v5528, %v5615
        %v5617 = vpop.f32.mrf.mxu0
        %v5618 = vadd.f32 %v5528, %v5617
        %5619 = vmatmul.bf16.gmra.mxu0 %v5555
        %v5620 = vpop.f32.mrf.mxu0
        %v5621 = vadd.f32 %v5528, %v5620
        %v5622 = vpop.f32.mrf.mxu0
        %v5623 = vadd.f32 %v5528, %v5622
        %5624 = vmatmul.bf16.gmra.mxu0 %v5558
        %v5625 = vpop.f32.mrf.mxu0
        %v5626 = vadd.f32 %v5528, %v5625
        %v5627 = vpop.f32.mrf.mxu0
        %v5628 = vadd.f32 %v5528, %v5627
        %5629 = vmatmul.bf16.gmra.mxu0 %v5561
        %v5630 = vpop.f32.mrf.mxu0
        %v5631 = vadd.f32 %v5528, %v5630
        %v5632 = vpop.f32.mrf.mxu0
        %v5633 = vadd.f32 %v5528, %v5632
        %5634 = vmatmul.bf16.gmra.mxu0 %v5564
        %v5635 = vpop.f32.mrf.mxu0
        %v5636 = vadd.f32 %v5528, %v5635
        %v5637 = vpop.f32.mrf.mxu0
        %v5638 = vadd.f32 %v5528, %v5637
        %5639 = vmatmul.bf16.gmra.mxu0 %v5567
        %v5640 = vpop.f32.mrf.mxu0
        %v5641 = vadd.f32 %v5528, %v5640
        %v5642 = vpop.f32.mrf.mxu0
        %v5643 = vadd.f32 %v5528, %v5642
        %5644 = vmatmul.bf16.gmra.mxu0 %v5570
        %v5645 = vpop.f32.mrf.mxu0
        %v5646 = vadd.f32 %v5528, %v5645
        %v5647 = vpop.f32.mrf.mxu0
        %v5648 = vadd.f32 %v5528, %v5647
        %5649 = vmatmul.bf16.gmra.mxu0 %v5573
        %v5650 = vpop.f32.mrf.mxu0
        %v5651 = vadd.f32 %v5528, %v5650
        %v5652 = vpop.f32.mrf.mxu0
        %v5653 = vadd.f32 %v5528, %v5652
        %5654 = vmatmul.bf16.gmra.mxu0 %v5576
        %v5655 = vpop.f32.mrf.mxu0
        %v5656 = vadd.f32 %v5528, %v5655
        %v5657 = vpop.f32.mrf.mxu0
        %v5658 = vadd.f32 %v5528, %v5657
        %5659 = vmatmul.bf16.gmra.mxu0 %v5579
        %v5660 = vpop.f32.mrf.mxu0
        %v5661 = vadd.f32 %v5528, %v5660
        %v5662 = vpop.f32.mrf.mxu0
        %v5663 = vadd.f32 %v5528, %v5662
        %5664 = vmatmul.bf16.gmra.mxu0 %v5582
        %v5665 = vpop.f32.mrf.mxu0
        %v5666 = vadd.f32 %v5528, %v5665
        %v5667 = vpop.f32.mrf.mxu0
        %v5668 = vadd.f32 %v5528, %v5667
        %5669 = vmatmul.bf16.gmra.mxu0 %v5585
        %v5670 = vpop.f32.mrf.mxu0
        %v5671 = vadd.f32 %v5528, %v5670
        %v5672 = vpop.f32.mrf.mxu0
        %v5673 = vadd.f32 %v5528, %v5672
        %5674 = vmatmul.bf16.gmra.mxu0 %v5588
        %v5675 = vpop.f32.mrf.mxu0
        %v5676 = vadd.f32 %v5528, %v5675
        %v5677 = vpop.f32.mrf.mxu0
        %v5678 = vadd.f32 %v5528, %v5677
        %5679 = vmatmul.bf16.gmra.mxu0 %v5591
        %v5680 = vpop.f32.mrf.mxu0
        %v5681 = vadd.f32 %v5528, %v5680
        %v5682 = vpop.f32.mrf.mxu0
        %v5683 = vadd.f32 %v5528, %v5682
        %5684 = vdwg.mxu0
        %v5685 = vmax.f32 %v5606, 0.0
        %v5686 = vmax.f32 %v5608, 0.0
        %v5687 = vmax.f32 %v5611, 0.0
        %v5688 = vmax.f32 %v5613, 0.0
        %v5689 = vmax.f32 %v5616, 0.0
        %v5690 = vmax.f32 %v5618, 0.0
        %v5691 = vmax.f32 %v5621, 0.0
        %v5692 = vmax.f32 %v5623, 0.0
        %v5693 = vmax.f32 %v5626, 0.0
        %v5694 = vmax.f32 %v5628, 0.0
        %v5695 = vmax.f32 %v5631, 0.0
        %v5696 = vmax.f32 %v5633, 0.0
        %v5697 = vmax.f32 %v5636, 0.0
        %v5698 = vmax.f32 %v5638, 0.0
        %v5699 = vmax.f32 %v5641, 0.0
        %v5700 = vmax.f32 %v5643, 0.0
        %v5701 = vmax.f32 %v5646, 0.0
        %v5702 = vmax.f32 %v5648, 0.0
        %v5703 = vmax.f32 %v5651, 0.0
        %v5704 = vmax.f32 %v5653, 0.0
        %v5705 = vmax.f32 %v5656, 0.0
        %v5706 = vmax.f32 %v5658, 0.0
        %v5707 = vmax.f32 %v5661, 0.0
        %v5708 = vmax.f32 %v5663, 0.0
        %v5709 = vmax.f32 %v5666, 0.0
        %v5710 = vmax.f32 %v5668, 0.0
        %v5711 = vmax.f32 %v5671, 0.0
        %v5712 = vmax.f32 %v5673, 0.0
        %v5713 = vmax.f32 %v5676, 0.0
        %v5714 = vmax.f32 %v5678, 0.0
        %v5715 = vmax.f32 %v5681, 0.0
        %v5716 = vmax.f32 %v5683, 0.0
        %v5717 = vld [vmem:[#allocation5 + $0x218] sm:$0xf]
        %v5718 = vld [vmem:[#allocation5 + $0x21c] sm:$0xf]
        %v5719 = vld [vmem:[#allocation5 + $0x220] sm:$0xf]
        %v5720 = vpack.c.bf16 %v5686, %v5685
        %v5721 = vpack.c.bf16 %v5688, %v5687
        %v5722 = vpack.c.bf16 %v5690, %v5689
        %v5723 = vpack.c.bf16 %v5692, %v5691
        %v5724 = vpack.c.bf16 %v5694, %v5693
        %v5725 = vpack.c.bf16 %v5696, %v5695
        %v5726 = vpack.c.bf16 %v5698, %v5697
        %v5727 = vpack.c.bf16 %v5700, %v5699
        %v5728 = vpack.c.bf16 %v5702, %v5701
        %v5729 = vpack.c.bf16 %v5704, %v5703
        %v5730 = vpack.c.bf16 %v5706, %v5705
        %v5731 = vpack.c.bf16 %v5708, %v5707
        %v5732 = vpack.c.bf16 %v5710, %v5709
        %v5733 = vpack.c.bf16 %v5712, %v5711
        %v5734 = vpack.c.bf16 %v5714, %v5713
        %v5735 = vpack.c.bf16 %v5716, %v5715
        %v5736 = vld [vmem:[#allocation5 + $0x228] sm:$0x1]
        %v5737 = vunpack.c.l.bf16 %v5736
        %v5738 = vperm.slane %v5737, 0
        %v5742 = vunpack.c.l.b16 %v5717
        %v5743 = vunpack.c.l.b16 %v5718
        %v5744 = vunpack.c.l.b16 %v5719
        %v5745 = vpack.c.b16 %v5743, %v5742
        %v5746 = vpack.c.b16 %v5744, %v5744
        %v5749 = vsel %vm5331, %v5720, 0
        %v5752 = vsel %vm5331, %v5721, 0
        %v5755 = vsel %vm5331, %v5722, 0
        %v5758 = vsel %vm5331, %v5723, 0
        %v5761 = vsel %vm5331, %v5724, 0
        %v5764 = vsel %vm5331, %v5725, 0
        %v5767 = vsel %vm5331, %v5726, 0
        %v5770 = vsel %vm5331, %v5727, 0
        %v5773 = vsel %vm5331, %v5728, 0
        %v5776 = vsel %vm5331, %v5729, 0
        %v5779 = vsel %vm5331, %v5730, 0
        %v5782 = vsel %vm5331, %v5731, 0
        %v5785 = vsel %vm5331, %v5732, 0
        %v5788 = vsel %vm5331, %v5733, 0
        %v5791 = vsel %vm5331, %v5734, 0
        %v5794 = vsel %vm5331, %v5735, 0
        %v5797 = vsel %vm5380, %v5746, 0
        %5799 = vmatpush.bf16.msra.mxu0 0
        %5800 = vmatpush.bf16.msra.mxu0 0
        %5801 = vmatpush.bf16.msra.mxu0 0
        %5802 = vmatpush.bf16.msra.mxu0 0
        %5803 = vmatpush.bf16.msra.mxu0 0
        %5804 = vmatpush.bf16.msra.mxu0 0
        %5805 = vmatpush.bf16.msra.mxu0 %v5797
        %5806 = vmatpush.bf16.msra.mxu0 %v5745
        %5807 = vmatmul.bf16.gmra.mxu0 %v5749
        %v5808 = vpop.f32.mrf.mxu0
        %v5809 = vadd.f32 %v5738, %v5808
        %v5810 = vpop.f32.mrf.mxu0
        %v5811 = vadd.f32 %v5738, %v5810
        %5812 = vmatmul.bf16.gmra.mxu0 %v5752
        %v5813 = vpop.f32.mrf.mxu0
        %v5814 = vadd.f32 %v5738, %v5813
        %v5815 = vpop.f32.mrf.mxu0
        %v5816 = vadd.f32 %v5738, %v5815
        %5817 = vmatmul.bf16.gmra.mxu0 %v5755
        %v5818 = vpop.f32.mrf.mxu0
        %v5819 = vadd.f32 %v5738, %v5818
        %v5820 = vpop.f32.mrf.mxu0
        %v5821 = vadd.f32 %v5738, %v5820
        %5822 = vmatmul.bf16.gmra.mxu0 %v5758
        %v5823 = vpop.f32.mrf.mxu0
        %v5824 = vadd.f32 %v5738, %v5823
        %v5825 = vpop.f32.mrf.mxu0
        %v5826 = vadd.f32 %v5738, %v5825
        %5827 = vmatmul.bf16.gmra.mxu0 %v5761
        %v5828 = vpop.f32.mrf.mxu0
        %v5829 = vadd.f32 %v5738, %v5828
        %v5830 = vpop.f32.mrf.mxu0
        %v5831 = vadd.f32 %v5738, %v5830
        %5832 = vmatmul.bf16.gmra.mxu0 %v5764
        %v5833 = vpop.f32.mrf.mxu0
        %v5834 = vadd.f32 %v5738, %v5833
        %v5835 = vpop.f32.mrf.mxu0
        %v5836 = vadd.f32 %v5738, %v5835
        %5837 = vmatmul.bf16.gmra.mxu0 %v5767
        %v5838 = vpop.f32.mrf.mxu0
        %v5839 = vadd.f32 %v5738, %v5838
        %v5840 = vpop.f32.mrf.mxu0
        %v5841 = vadd.f32 %v5738, %v5840
        %5842 = vmatmul.bf16.gmra.mxu0 %v5770
        %v5843 = vpop.f32.mrf.mxu0
        %v5844 = vadd.f32 %v5738, %v5843
        %v5845 = vpop.f32.mrf.mxu0
        %v5846 = vadd.f32 %v5738, %v5845
        %5847 = vmatmul.bf16.gmra.mxu0 %v5773
        %v5848 = vpop.f32.mrf.mxu0
        %v5849 = vadd.f32 %v5738, %v5848
        %v5850 = vpop.f32.mrf.mxu0
        %v5851 = vadd.f32 %v5738, %v5850
        %5852 = vmatmul.bf16.gmra.mxu0 %v5776
        %v5853 = vpop.f32.mrf.mxu0
        %v5854 = vadd.f32 %v5738, %v5853
        %v5855 = vpop.f32.mrf.mxu0
        %v5856 = vadd.f32 %v5738, %v5855
        %5857 = vmatmul.bf16.gmra.mxu0 %v5779
        %v5858 = vpop.f32.mrf.mxu0
        %v5859 = vadd.f32 %v5738, %v5858
        %v5860 = vpop.f32.mrf.mxu0
        %v5861 = vadd.f32 %v5738, %v5860
        %5862 = vmatmul.bf16.gmra.mxu0 %v5782
        %v5863 = vpop.f32.mrf.mxu0
        %v5864 = vadd.f32 %v5738, %v5863
        %v5865 = vpop.f32.mrf.mxu0
        %v5866 = vadd.f32 %v5738, %v5865
        %5867 = vmatmul.bf16.gmra.mxu0 %v5785
        %v5868 = vpop.f32.mrf.mxu0
        %v5869 = vadd.f32 %v5738, %v5868
        %v5870 = vpop.f32.mrf.mxu0
        %v5871 = vadd.f32 %v5738, %v5870
        %5872 = vmatmul.bf16.gmra.mxu0 %v5788
        %v5873 = vpop.f32.mrf.mxu0
        %v5874 = vadd.f32 %v5738, %v5873
        %v5875 = vpop.f32.mrf.mxu0
        %v5876 = vadd.f32 %v5738, %v5875
        %5877 = vmatmul.bf16.gmra.mxu0 %v5791
        %v5878 = vpop.f32.mrf.mxu0
        %v5879 = vadd.f32 %v5738, %v5878
        %v5880 = vpop.f32.mrf.mxu0
        %v5881 = vadd.f32 %v5738, %v5880
        %5882 = vmatmul.bf16.gmra.mxu0 %v5794
        %v5883 = vpop.f32.mrf.mxu0
        %v5884 = vadd.f32 %v5738, %v5883
        %v5885 = vpop.f32.mrf.mxu0
        %v5886 = vadd.f32 %v5738, %v5885
        %5887 = vdwg.mxu0
        %v5888 = vmax.f32 %v5809, 0.0
        %v5889 = vmax.f32 %v5811, 0.0
        %v5890 = vmax.f32 %v5814, 0.0
        %v5891 = vmax.f32 %v5816, 0.0
        %v5892 = vmax.f32 %v5819, 0.0
        %v5893 = vmax.f32 %v5821, 0.0
        %v5894 = vmax.f32 %v5824, 0.0
        %v5895 = vmax.f32 %v5826, 0.0
        %v5896 = vmax.f32 %v5829, 0.0
        %v5897 = vmax.f32 %v5831, 0.0
        %v5898 = vmax.f32 %v5834, 0.0
        %v5899 = vmax.f32 %v5836, 0.0
        %v5900 = vmax.f32 %v5839, 0.0
        %v5901 = vmax.f32 %v5841, 0.0
        %v5902 = vmax.f32 %v5844, 0.0
        %v5903 = vmax.f32 %v5846, 0.0
        %v5904 = vmax.f32 %v5849, 0.0
        %v5905 = vmax.f32 %v5851, 0.0
        %v5906 = vmax.f32 %v5854, 0.0
        %v5907 = vmax.f32 %v5856, 0.0
        %v5908 = vmax.f32 %v5859, 0.0
        %v5909 = vmax.f32 %v5861, 0.0
        %v5910 = vmax.f32 %v5864, 0.0
        %v5911 = vmax.f32 %v5866, 0.0
        %v5912 = vmax.f32 %v5869, 0.0
        %v5913 = vmax.f32 %v5871, 0.0
        %v5914 = vmax.f32 %v5874, 0.0
        %v5915 = vmax.f32 %v5876, 0.0
        %v5916 = vmax.f32 %v5879, 0.0
        %v5917 = vmax.f32 %v5881, 0.0
        %v5918 = vmax.f32 %v5884, 0.0
        %v5919 = vmax.f32 %v5886, 0.0
        %v5920 = vld [vmem:[#allocation5 + $0x230] sm:$0xf]
        %v5921 = vld [vmem:[#allocation5 + $0x234] sm:$0xf]
        %v5922 = vld [vmem:[#allocation5 + $0x238] sm:$0xf]
        %v5923 = vpack.c.bf16 %v5889, %v5888
        %v5924 = vpack.c.bf16 %v5891, %v5890
        %v5925 = vpack.c.bf16 %v5893, %v5892
        %v5926 = vpack.c.bf16 %v5895, %v5894
        %v5927 = vpack.c.bf16 %v5897, %v5896
        %v5928 = vpack.c.bf16 %v5899, %v5898
        %v5929 = vpack.c.bf16 %v5901, %v5900
        %v5930 = vpack.c.bf16 %v5903, %v5902
        %v5931 = vpack.c.bf16 %v5905, %v5904
        %v5932 = vpack.c.bf16 %v5907, %v5906
        %v5933 = vpack.c.bf16 %v5909, %v5908
        %v5934 = vpack.c.bf16 %v5911, %v5910
        %v5935 = vpack.c.bf16 %v5913, %v5912
        %v5936 = vpack.c.bf16 %v5915, %v5914
        %v5937 = vpack.c.bf16 %v5917, %v5916
        %v5938 = vpack.c.bf16 %v5919, %v5918
        %v5939 = vld [vmem:[#allocation5 + $0x240] sm:$0x1]
        %v5940 = vunpack.c.l.bf16 %v5939
        %v5941 = vperm.slane %v5940, 0
        %v5945 = vunpack.c.l.b16 %v5920
        %v5946 = vunpack.c.l.b16 %v5921
        %v5947 = vunpack.c.l.b16 %v5922
        %v5948 = vpack.c.b16 %v5946, %v5945
        %v5949 = vpack.c.b16 %v5947, %v5947
        %v5952 = vsel %vm5331, %v5923, 0
        %v5955 = vsel %vm5331, %v5924, 0
        %v5958 = vsel %vm5331, %v5925, 0
        %v5961 = vsel %vm5331, %v5926, 0
        %v5964 = vsel %vm5331, %v5927, 0
        %v5967 = vsel %vm5331, %v5928, 0
        %v5970 = vsel %vm5331, %v5929, 0
        %v5973 = vsel %vm5331, %v5930, 0
        %v5976 = vsel %vm5331, %v5931, 0
        %v5979 = vsel %vm5331, %v5932, 0
        %v5982 = vsel %vm5331, %v5933, 0
        %v5985 = vsel %vm5331, %v5934, 0
        %v5988 = vsel %vm5331, %v5935, 0
        %v5991 = vsel %vm5331, %v5936, 0
        %v5994 = vsel %vm5331, %v5937, 0
        %v5997 = vsel %vm5331, %v5938, 0
        %v6000 = vsel %vm5380, %v5949, 0
        %6002 = vmatpush.bf16.msra.mxu0 0
        %6003 = vmatpush.bf16.msra.mxu0 0
        %6004 = vmatpush.bf16.msra.mxu0 0
        %6005 = vmatpush.bf16.msra.mxu0 0
        %6006 = vmatpush.bf16.msra.mxu0 0
        %6007 = vmatpush.bf16.msra.mxu0 0
        %6008 = vmatpush.bf16.msra.mxu0 %v6000
        %6009 = vmatpush.bf16.msra.mxu0 %v5948
        %6010 = vmatmul.bf16.gmra.mxu0 %v5952
        %v6011 = vpop.f32.mrf.mxu0
        %v6012 = vadd.f32 %v5941, %v6011
        %v6013 = vpop.f32.mrf.mxu0
        %v6014 = vadd.f32 %v5941, %v6013
        %6015 = vmatmul.bf16.gmra.mxu0 %v5955
        %v6016 = vpop.f32.mrf.mxu0
        %v6017 = vadd.f32 %v5941, %v6016
        %v6018 = vpop.f32.mrf.mxu0
        %v6019 = vadd.f32 %v5941, %v6018
        %6020 = vmatmul.bf16.gmra.mxu0 %v5958
        %v6021 = vpop.f32.mrf.mxu0
        %v6022 = vadd.f32 %v5941, %v6021
        %v6023 = vpop.f32.mrf.mxu0
        %v6024 = vadd.f32 %v5941, %v6023
        %6025 = vmatmul.bf16.gmra.mxu0 %v5961
        %v6026 = vpop.f32.mrf.mxu0
        %v6027 = vadd.f32 %v5941, %v6026
        %v6028 = vpop.f32.mrf.mxu0
        %v6029 = vadd.f32 %v5941, %v6028
        %6030 = vmatmul.bf16.gmra.mxu0 %v5964
        %v6031 = vpop.f32.mrf.mxu0
        %v6032 = vadd.f32 %v5941, %v6031
        %v6033 = vpop.f32.mrf.mxu0
        %v6034 = vadd.f32 %v5941, %v6033
        %6035 = vmatmul.bf16.gmra.mxu0 %v5967
        %v6036 = vpop.f32.mrf.mxu0
        %v6037 = vadd.f32 %v5941, %v6036
        %v6038 = vpop.f32.mrf.mxu0
        %v6039 = vadd.f32 %v5941, %v6038
        %6040 = vmatmul.bf16.gmra.mxu0 %v5970
        %v6041 = vpop.f32.mrf.mxu0
        %v6042 = vadd.f32 %v5941, %v6041
        %v6043 = vpop.f32.mrf.mxu0
        %v6044 = vadd.f32 %v5941, %v6043
        %6045 = vmatmul.bf16.gmra.mxu0 %v5973
        %v6046 = vpop.f32.mrf.mxu0
        %v6047 = vadd.f32 %v5941, %v6046
        %v6048 = vpop.f32.mrf.mxu0
        %v6049 = vadd.f32 %v5941, %v6048
        %6050 = vmatmul.bf16.gmra.mxu0 %v5976
        %v6051 = vpop.f32.mrf.mxu0
        %v6052 = vadd.f32 %v5941, %v6051
        %v6053 = vpop.f32.mrf.mxu0
        %v6054 = vadd.f32 %v5941, %v6053
        %6055 = vmatmul.bf16.gmra.mxu0 %v5979
        %v6056 = vpop.f32.mrf.mxu0
        %v6057 = vadd.f32 %v5941, %v6056
        %v6058 = vpop.f32.mrf.mxu0
        %v6059 = vadd.f32 %v5941, %v6058
        %6060 = vmatmul.bf16.gmra.mxu0 %v5982
        %v6061 = vpop.f32.mrf.mxu0
        %v6062 = vadd.f32 %v5941, %v6061
        %v6063 = vpop.f32.mrf.mxu0
        %v6064 = vadd.f32 %v5941, %v6063
        %6065 = vmatmul.bf16.gmra.mxu0 %v5985
        %v6066 = vpop.f32.mrf.mxu0
        %v6067 = vadd.f32 %v5941, %v6066
        %v6068 = vpop.f32.mrf.mxu0
        %v6069 = vadd.f32 %v5941, %v6068
        %6070 = vmatmul.bf16.gmra.mxu0 %v5988
        %v6071 = vpop.f32.mrf.mxu0
        %v6072 = vadd.f32 %v5941, %v6071
        %v6073 = vpop.f32.mrf.mxu0
        %v6074 = vadd.f32 %v5941, %v6073
        %6075 = vmatmul.bf16.gmra.mxu0 %v5991
        %v6076 = vpop.f32.mrf.mxu0
        %v6077 = vadd.f32 %v5941, %v6076
        %v6078 = vpop.f32.mrf.mxu0
        %v6079 = vadd.f32 %v5941, %v6078
        %6080 = vmatmul.bf16.gmra.mxu0 %v5994
        %v6081 = vpop.f32.mrf.mxu0
        %v6082 = vadd.f32 %v5941, %v6081
        %v6083 = vpop.f32.mrf.mxu0
        %v6084 = vadd.f32 %v5941, %v6083
        %6085 = vmatmul.bf16.gmra.mxu0 %v5997
        %v6086 = vpop.f32.mrf.mxu0
        %v6087 = vadd.f32 %v5941, %v6086
        %v6088 = vpop.f32.mrf.mxu0
        %v6089 = vadd.f32 %v5941, %v6088
        %6090 = vdwg.mxu0
        %v6091 = vmax.f32 %v6012, 0.0
        %v6092 = vmax.f32 %v6014, 0.0
        %v6093 = vmax.f32 %v6017, 0.0
        %v6094 = vmax.f32 %v6019, 0.0
        %v6095 = vmax.f32 %v6022, 0.0
        %v6096 = vmax.f32 %v6024, 0.0
        %v6097 = vmax.f32 %v6027, 0.0
        %v6098 = vmax.f32 %v6029, 0.0
        %v6099 = vmax.f32 %v6032, 0.0
        %v6100 = vmax.f32 %v6034, 0.0
        %v6101 = vmax.f32 %v6037, 0.0
        %v6102 = vmax.f32 %v6039, 0.0
        %v6103 = vmax.f32 %v6042, 0.0
        %v6104 = vmax.f32 %v6044, 0.0
        %v6105 = vmax.f32 %v6047, 0.0
        %v6106 = vmax.f32 %v6049, 0.0
        %v6107 = vmax.f32 %v6052, 0.0
        %v6108 = vmax.f32 %v6054, 0.0
        %v6109 = vmax.f32 %v6057, 0.0
        %v6110 = vmax.f32 %v6059, 0.0
        %v6111 = vmax.f32 %v6062, 0.0
        %v6112 = vmax.f32 %v6064, 0.0
        %v6113 = vmax.f32 %v6067, 0.0
        %v6114 = vmax.f32 %v6069, 0.0
        %v6115 = vmax.f32 %v6072, 0.0
        %v6116 = vmax.f32 %v6074, 0.0
        %v6117 = vmax.f32 %v6077, 0.0
        %v6118 = vmax.f32 %v6079, 0.0
        %v6119 = vmax.f32 %v6082, 0.0
        %v6120 = vmax.f32 %v6084, 0.0
        %v6121 = vmax.f32 %v6087, 0.0
        %v6122 = vmax.f32 %v6089, 0.0
        %v6123 = vld [vmem:[#allocation5 + $0x248] sm:$0xf]
        %v6124 = vld [vmem:[#allocation5 + $0x24c] sm:$0xf]
        %v6125 = vpack.c.bf16 %v6092, %v6091
        %v6126 = vpack.c.bf16 %v6094, %v6093
        %v6127 = vpack.c.bf16 %v6096, %v6095
        %v6128 = vpack.c.bf16 %v6098, %v6097
        %v6129 = vpack.c.bf16 %v6100, %v6099
        %v6130 = vpack.c.bf16 %v6102, %v6101
        %v6131 = vpack.c.bf16 %v6104, %v6103
        %v6132 = vpack.c.bf16 %v6106, %v6105
        %v6133 = vpack.c.bf16 %v6108, %v6107
        %v6134 = vpack.c.bf16 %v6110, %v6109
        %v6135 = vpack.c.bf16 %v6112, %v6111
        %v6136 = vpack.c.bf16 %v6114, %v6113
        %v6137 = vpack.c.bf16 %v6116, %v6115
        %v6138 = vpack.c.bf16 %v6118, %v6117
        %v6139 = vpack.c.bf16 %v6120, %v6119
        %v6140 = vpack.c.bf16 %v6122, %v6121
        %v6141 = vld [vmem:[#allocation5 + $0x250] sm:$0x1]
        %v6142 = vunpack.c.l.bf16 %v6141
        %v6143 = vperm.slane %v6142, 0
        %v6146 = vunpack.c.l.b16 %v6123
        %v6147 = vunpack.c.l.b16 %v6124
        %v6148 = vpack.c.b16 %v6147, %v6146
        %vm6150 = vcmask 130048
        %v6152 = vsel %vm6150, %v6125, 0
        %v6155 = vsel %vm6150, %v6126, 0
        %v6158 = vsel %vm6150, %v6127, 0
        %v6161 = vsel %vm6150, %v6128, 0
        %v6164 = vsel %vm6150, %v6129, 0
        %v6167 = vsel %vm6150, %v6130, 0
        %v6170 = vsel %vm6150, %v6131, 0
        %v6173 = vsel %vm6150, %v6132, 0
        %v6176 = vsel %vm6150, %v6133, 0
        %v6179 = vsel %vm6150, %v6134, 0
        %v6182 = vsel %vm6150, %v6135, 0
        %v6185 = vsel %vm6150, %v6136, 0
        %v6188 = vsel %vm6150, %v6137, 0
        %v6191 = vsel %vm6150, %v6138, 0
        %v6194 = vsel %vm6150, %v6139, 0
        %v6197 = vsel %vm6150, %v6140, 0
        %6199 = vmatpush.bf16.msra.mxu0 0
        %6200 = vmatpush.bf16.msra.mxu0 0
        %6201 = vmatpush.bf16.msra.mxu0 0
        %6202 = vmatpush.bf16.msra.mxu0 0
        %6203 = vmatpush.bf16.msra.mxu0 0
        %6204 = vmatpush.bf16.msra.mxu0 0
        %6205 = vmatpush.bf16.msra.mxu0 0
        %6206 = vmatpush.bf16.msra.mxu0 %v6148
        %6207 = vmatmul.bf16.gmra.mxu0 %v6152
        %v6208 = vpop.f32.mrf.mxu0
        %v6209 = vadd.f32 %v6143, %v6208
        %v6210 = vpop.f32.mrf.mxu0
        %v6211 = vadd.f32 %v6143, %v6210
        %6212 = vmatmul.bf16.gmra.mxu0 %v6155
        %v6213 = vpop.f32.mrf.mxu0
        %v6214 = vadd.f32 %v6143, %v6213
        %v6215 = vpop.f32.mrf.mxu0
        %v6216 = vadd.f32 %v6143, %v6215
        %6217 = vmatmul.bf16.gmra.mxu0 %v6158
        %v6218 = vpop.f32.mrf.mxu0
        %v6219 = vadd.f32 %v6143, %v6218
        %v6220 = vpop.f32.mrf.mxu0
        %v6221 = vadd.f32 %v6143, %v6220
        %6222 = vmatmul.bf16.gmra.mxu0 %v6161
        %v6223 = vpop.f32.mrf.mxu0
        %v6224 = vadd.f32 %v6143, %v6223
        %v6225 = vpop.f32.mrf.mxu0
        %v6226 = vadd.f32 %v6143, %v6225
        %6227 = vmatmul.bf16.gmra.mxu0 %v6164
        %v6228 = vpop.f32.mrf.mxu0
        %v6229 = vadd.f32 %v6143, %v6228
        %v6230 = vpop.f32.mrf.mxu0
        %v6231 = vadd.f32 %v6143, %v6230
        %6232 = vmatmul.bf16.gmra.mxu0 %v6167
        %v6233 = vpop.f32.mrf.mxu0
        %v6234 = vadd.f32 %v6143, %v6233
        %v6235 = vpop.f32.mrf.mxu0
        %v6236 = vadd.f32 %v6143, %v6235
        %6237 = vmatmul.bf16.gmra.mxu0 %v6170
        %v6238 = vpop.f32.mrf.mxu0
        %v6239 = vadd.f32 %v6143, %v6238
        %v6240 = vpop.f32.mrf.mxu0
        %v6241 = vadd.f32 %v6143, %v6240
        %6242 = vmatmul.bf16.gmra.mxu0 %v6173
        %v6243 = vpop.f32.mrf.mxu0
        %v6244 = vadd.f32 %v6143, %v6243
        %v6245 = vpop.f32.mrf.mxu0
        %v6246 = vadd.f32 %v6143, %v6245
        %6247 = vmatmul.bf16.gmra.mxu0 %v6176
        %v6248 = vpop.f32.mrf.mxu0
        %v6249 = vadd.f32 %v6143, %v6248
        %v6250 = vpop.f32.mrf.mxu0
        %v6251 = vadd.f32 %v6143, %v6250
        %6252 = vmatmul.bf16.gmra.mxu0 %v6179
        %v6253 = vpop.f32.mrf.mxu0
        %v6254 = vadd.f32 %v6143, %v6253
        %v6255 = vpop.f32.mrf.mxu0
        %v6256 = vadd.f32 %v6143, %v6255
        %6257 = vmatmul.bf16.gmra.mxu0 %v6182
        %v6258 = vpop.f32.mrf.mxu0
        %v6259 = vadd.f32 %v6143, %v6258
        %v6260 = vpop.f32.mrf.mxu0
        %v6261 = vadd.f32 %v6143, %v6260
        %6262 = vmatmul.bf16.gmra.mxu0 %v6185
        %v6263 = vpop.f32.mrf.mxu0
        %v6264 = vadd.f32 %v6143, %v6263
        %v6265 = vpop.f32.mrf.mxu0
        %v6266 = vadd.f32 %v6143, %v6265
        %6267 = vmatmul.bf16.gmra.mxu0 %v6188
        %v6268 = vpop.f32.mrf.mxu0
        %v6269 = vadd.f32 %v6143, %v6268
        %v6270 = vpop.f32.mrf.mxu0
        %v6271 = vadd.f32 %v6143, %v6270
        %6272 = vmatmul.bf16.gmra.mxu0 %v6191
        %v6273 = vpop.f32.mrf.mxu0
        %v6274 = vadd.f32 %v6143, %v6273
        %v6275 = vpop.f32.mrf.mxu0
        %v6276 = vadd.f32 %v6143, %v6275
        %6277 = vmatmul.bf16.gmra.mxu0 %v6194
        %v6278 = vpop.f32.mrf.mxu0
        %v6279 = vadd.f32 %v6143, %v6278
        %v6280 = vpop.f32.mrf.mxu0
        %v6281 = vadd.f32 %v6143, %v6280
        %6282 = vmatmul.bf16.gmra.mxu0 %v6197
        %v6283 = vpop.f32.mrf.mxu0
        %v6284 = vadd.f32 %v6143, %v6283
        %v6285 = vpop.f32.mrf.mxu0
        %v6286 = vadd.f32 %v6143, %v6285
        %6287 = vdwg.mxu0
        %6288 = vst [vmem:[%s205] sm:$0xff] %v6209
        %6289 = vst [vmem:[%s205 + $0x8] sm:$0xff] %v6211
        %6290 = vst [vmem:[%s205 + $0x10] sm:$0xff] %v6214
        %6291 = vst [vmem:[%s205 + $0x18] sm:$0xff] %v6216
        %6292 = vst [vmem:[%s205 + $0x20] sm:$0xff] %v6219
        %6293 = vst [vmem:[%s205 + $0x28] sm:$0xff] %v6221
        %6294 = vst [vmem:[%s205 + $0x30] sm:$0xff] %v6224
        %6295 = vst [vmem:[%s205 + $0x38] sm:$0xff] %v6226
        %6296 = vst [vmem:[%s205 + $0x40] sm:$0xff] %v6229
        %6297 = vst [vmem:[%s205 + $0x48] sm:$0xff] %v6231
        %6298 = vst [vmem:[%s205 + $0x50] sm:$0xff] %v6234
        %6299 = vst [vmem:[%s205 + $0x58] sm:$0xff] %v6236
        %6300 = vst [vmem:[%s205 + $0x60] sm:$0xff] %v6239
        %6301 = vst [vmem:[%s205 + $0x68] sm:$0xff] %v6241
        %6302 = vst [vmem:[%s205 + $0x70] sm:$0xff] %v6244
        %6303 = vst [vmem:[%s205 + $0x78] sm:$0xff] %v6246
        %6304 = vst [vmem:[%s205 + $0x80] sm:$0xff] %v6249
        %6305 = vst [vmem:[%s205 + $0x88] sm:$0xff] %v6251
        %6306 = vst [vmem:[%s205 + $0x90] sm:$0xff] %v6254
        %6307 = vst [vmem:[%s205 + $0x98] sm:$0xff] %v6256
        %6308 = vst [vmem:[%s205 + $0xa0] sm:$0xff] %v6259
        %6309 = vst [vmem:[%s205 + $0xa8] sm:$0xff] %v6261
        %6310 = vst [vmem:[%s205 + $0xb0] sm:$0xff] %v6264
        %6311 = vst [vmem:[%s205 + $0xb8] sm:$0xff] %v6266
        %6312 = vst [vmem:[%s205 + $0xc0] sm:$0xff] %v6269
        %6313 = vst [vmem:[%s205 + $0xc8] sm:$0xff] %v6271
        %6314 = vst [vmem:[%s205 + $0xd0] sm:$0xff] %v6274
        %6315 = vst [vmem:[%s205 + $0xd8] sm:$0xff] %v6276
        %6316 = vst [vmem:[%s205 + $0xe0] sm:$0xff] %v6279
        %6317 = vst [vmem:[%s205 + $0xe8] sm:$0xff] %v6281
        %6318 = vst [vmem:[%s205 + $0xf0] sm:$0xff] %v6284
        %6319 = vst [vmem:[%s205 + $0xf8] sm:$0xff] %v6286
        %s6320 = sand.u32 %s75, 1
        %s6321 = scalar_lea.sflag [#allocation4], %s6320
        %s6322 = sand.u32 %s75, 1
        %s6323 = smul.addr %s6322, 256
        %s6324 = scalar_lea.vmem [#allocation7], %s6323
        // Predicated region
        $region37: #{tpu_custom_call.1} parent=27 // pred_check
          %p6325 = pneg %p85
        $region38: #{tpu_custom_call.1} parent=27 // pred_check_branch
          %6327 = sbr.rel (%p6325) target = $region40
        $region39: #{tpu_custom_call.1} parent=27 // pred_region
          %s6328 = smul.u32 32, %s20
          %6330 = vsyncadd %s6321, 0
          %s6331 = smul.addr %s6328, 8
          %s6332 = scalar_lea.hbm %s2, %s6331
          %s6333 = sshll.u32 %s6324, 4
          %s6334 = int_to_ptr.vmem [resolvable:$true] %s6333
          %s6335 = sshll.u32 %s6332, 4
          %s6336 = int_to_ptr.hbm [resolvable:$true] %s6335
          %6341 = dma.vmem_to_hbm [thread:$0]  %s6334, 4096, %s6336, %s6321, 128, 128, 8
        $region40: #{tpu_custom_call.1} parent=27 // pred_fallthru
          _
      $region28: #{tpu_custom_call.1} parent=5 // pred_fallthru
        _
      %p6342 = scmp.le.s32.totalorder 2, %s15
      // Predicated region
      $region41: #{tpu_custom_call.1} parent=5 // pred_check
        %p6343 = pneg %p6342
      $region42: #{tpu_custom_call.1} parent=5 // pred_check_branch
        %6345 = sbr.rel (%p6343) target = $region44
      $region43: #{tpu_custom_call.1} parent=5 // pred_region
        %s6346 = ssub.s32 %s15, 2
        // Predicated region
        $region45: #{tpu_custom_call.1} parent=43 // pred_check
          %p6347 = pneg %p91
        $region46: #{tpu_custom_call.1} parent=43 // pred_check_branch
          %6349 = sbr.rel (%p6347) target = $region48
        $region47: #{tpu_custom_call.1} parent=43 // pred_region
          %s6350 = sand.u32 %s76, 1
          %s6351 = scalar_lea.sflag [#allocation4], %s6350
          %s6352 = sand.u32 %s76, 1
          %s6353 = smul.addr %s6352, 256
          %s6354 = scalar_lea.vmem [#allocation7], %s6353
          %6356 = dma.done %s6351, 4096
        $region48: #{tpu_custom_call.1} parent=43 // pred_fallthru
          _
      $region44: #{tpu_custom_call.1} parent=5 // pred_fallthru
        _
    $region6: #{tpu_custom_call.1} parent=1 // loop_footer
      %s19 = sadd.s32 1, %s15
    $region7: #{tpu_custom_call.1} parent=1 // loop_footer_branch
      %14 = sbr.rel target = $region3
    $region8: #{tpu_custom_call.1} parent=1 // loop_exit
      _
    %6357 = vsyncpa [#allocation3], 1
    %s6358 = scalar_lea.sflag [#allocation3], 1
    %6359 = vsyncpa %s6358, 1
    %6360 = vsyncpa [#allocation6], 1
    %6361 = vsyncpa [#allocation4], 1
    %s6362 = scalar_lea.sflag [#allocation4], 1
    %6363 = vsyncpa %s6362, 1

</llo_original>
